<compile_context>
chip_gen: v7x
topology: tpu7x:2x2x1
jax: 0.10.0
libtpu: 0.0.40
codegen_flags: <defaults>
</compile_context>

<pallas_src>
import math
import functools

import numpy as np
import jax
import jax.numpy as jnp
from jax.experimental import pallas as pl
from jax.experimental.pallas import tpu as pltpu


# ----------------------------------------------------------------------------
# LayerNorm (used both inside the kernel and in the pure-JAX reference)
# ----------------------------------------------------------------------------
def _layernorm(x, alpha, bias, d_model, eps=1e-6):
    """Matches `Norm`: alpha * (x - mean) / (std + eps) + bias,
    std with Bessel's correction (torch.std default, /(d-1)).
    One divide per row (not per element)."""
    mean = jnp.mean(x, axis=-1, keepdims=True)
    xc = x - mean
    var = jnp.sum(xc * xc, axis=-1, keepdims=True) * (1.0 / (d_model - 1))
    inv = 1.0 / (jnp.sqrt(var) + eps)        # exact; keeps (std+eps) semantics
    return alpha * (xc * inv) + bias


# ----------------------------------------------------------------------------
# Fused encoder-stack Pallas kernel (N layers + final Norm, one row slab)
# ----------------------------------------------------------------------------
def encoder_stack_kernel(x_ref, bias_ref,
                         wqkv_ref, bqkv_ref, wo_ref, bo_ref,
                         a1_ref, g1_ref, a2_ref, g2_ref,
                         w1_ref, c1_ref, w2_ref, c2_ref,
                         na_ref, nb_ref,
                         o_ref, cat_ref,
                         *, heads, d_model, n_layers):
    d_k = d_model // heads
    scale = 1.0 / math.sqrt(d_k)

    x0 = x_ref[...]            # (R, D) f32 — R = batch_per_block * S rows
    # Additive attention bias precomputed in the wrapper:
    #   0 where (same batch element) and (key unmasked), else -1e9.
    # Hoisted fully out of the layer/head loops (no per-iteration broadcast).
    bias = bias_ref[0]         # (R, R) f32

    def one_layer(_, x):
        # ---- sublayer 1: x = x + MHA(norm_1(x)) --------------------------
        x2 = _layernorm(x, a1_ref[...], g1_ref[...], d_model)
        # Fused QKV projection: one lane-dense (R,D) @ (D,3D) matmul.
        qkv = jnp.dot(x2.astype(jnp.bfloat16), wqkv_ref[...],
                      preferred_element_type=jnp.float32) + bqkv_ref[...]   # (R, 3D) f32

        # Per head: (R,R) scores over the whole row slab with the
        # block-diagonal bias (rows only attend inside their own batch
        # element), softmax, then ho written to lane offset h*d_k of the
        # bf16 concat scratch.  No per-head Wo matmul / accumulation.
        for h in range(heads):                       # heads is small & static
            lo = h * d_k
            q = qkv[:, lo:lo + d_k]
            k = qkv[:, d_model + lo:d_model + lo + d_k]
            v = qkv[:, 2 * d_model + lo:2 * d_model + lo + d_k]

            s = jax.lax.dot_general(
                q.astype(jnp.bfloat16), k.astype(jnp.bfloat16),
                (((1,), (1,)), ((), ())),
                preferred_element_type=jnp.float32) * scale + bias          # (R, R)
            s = s - jnp.max(s, axis=-1, keepdims=True)
            p = jnp.exp(s)
            p = p * (1.0 / jnp.sum(p, axis=-1, keepdims=True))

            ho = jnp.dot(p.astype(jnp.bfloat16), v.astype(jnp.bfloat16),
                         preferred_element_type=jnp.float32)                # (R, d_k)
            cat_ref[:, lo:lo + d_k] = ho.astype(jnp.bfloat16)

        # Single 128-deep output projection over the concatenated heads.
        attn = jnp.dot(cat_ref[...], wo_ref[...],
                       preferred_element_type=jnp.float32) + bo_ref[...]    # (R, D)
        x = x + attn                                  # dropout_1 == identity

        # ---- sublayer 2: x = x + FF(norm_2(x)) ---------------------------
        x2 = _layernorm(x, a2_ref[...], g2_ref[...], d_model)
        hdn = jnp.maximum(
            jnp.dot(x2.astype(jnp.bfloat16), w1_ref[...],
                    preferred_element_type=jnp.float32) + c1_ref[...], 0.0)
        ff = jnp.dot(hdn.astype(jnp.bfloat16), w2_ref[...],
                     preferred_element_type=jnp.float32) + c2_ref[...]
        return x + ff                                 # dropout_2 == identity

    # Small static layer count -> fully unrolled for LLO cross-layer visibility.
    x = jax.lax.fori_loop(0, n_layers, one_layer, x0, unroll=True)

    # ---- final Norm --------------------------------------------------------
    o_ref[...] = _layernorm(x, na_ref[...], nb_ref[...], d_model)


# ----------------------------------------------------------------------------
# pallas_call wrapper: one call for the whole encoder stack
# ----------------------------------------------------------------------------
def pl_encoder_stack(x, mask, params, n_layers, heads, *, block_rows=128):
    B, S, D = x.shape
    p = params['layer']
    d_ff = p['w1'].shape[1]

    # Fold batch into the matmul M dimension: group whole batch elements into
    # row slabs of ~block_rows rows.  (At realistic B this yields >=2 grid
    # steps, feeding both v7x TensorCores via the "parallel" axis.)
    bpb = max(1, min(B, max(1, block_rows // S)))
    while B % bpb:
        bpb -= 1
    n_blocks = B // bpb
    R = bpb * S

    # Block-diagonal + key-padding additive bias, built ONCE here (plain JAX)
    # so no broadcast is re-materialized inside the head/layer loops.
    keys_valid = (mask.reshape(B, S) != 0).reshape(n_blocks, 1, R)          # (G,1,R)
    batch_ids = jnp.repeat(jnp.arange(bpb), S)
    same_batch = (batch_ids[:, None] == batch_ids[None, :])[None]           # (1,R,R)
    attn_bias = jnp.where(same_batch & keys_valid, 0.0, -1e9).astype(jnp.float32)

    xf = x.reshape(B * S, D)

    kern = functools.partial(encoder_stack_kernel,
                             heads=heads, d_model=D, n_layers=n_layers)

    def fixed(shape):
        # constant block index -> DMA'd once, resident across grid steps
        return pl.BlockSpec(shape, lambda g: (0,) * len(shape))

    in_specs = [
        pl.BlockSpec((R, D), lambda g: (g, 0)),        # x row slab
        pl.BlockSpec((1, R, R), lambda g: (g, 0, 0)),  # attention bias
        fixed((D, 3 * D)), fixed((1, 3 * D)),          # fused Wqkv, bqkv
        fixed((D, D)), fixed((1, D)),                  # Wo, bo
        fixed((1, D)), fixed((1, D)),                  # norm_1 alpha, bias
        fixed((1, D)), fixed((1, D)),                  # norm_2 alpha, bias
        fixed((D, d_ff)), fixed((1, d_ff)),            # ff linear_1
        fixed((d_ff, D)), fixed((1, D)),               # ff linear_2
        fixed((1, D)), fixed((1, D)),                  # final Norm alpha, bias
    ]

    out = pl.pallas_call(
        kern,
        out_shape=jax.ShapeDtypeStruct((B * S, D), jnp.float32),
        grid=(n_blocks,),
        in_specs=in_specs,
        out_specs=pl.BlockSpec((R, D), lambda g: (g, 0)),
        scratch_shapes=[pltpu.VMEM((R, D), jnp.bfloat16)],   # head-concat buffer
        compiler_params=pltpu.CompilerParams(
            dimension_semantics=("parallel",),
            vmem_limit_bytes=32 * 1024 * 1024),               # fits v7x's 64 MiB
    )(xf, attn_bias,
      p['wqkv'], p['bqkv'], p['wo'], p['bo'],
      p['a1'], p['g1'], p['a2'], p['g2'],
      p['w1'], p['c1'], p['w2'], p['c2'],
      params['norm_a'], params['norm_b'])
    return out.reshape(B, S, D)


# ----------------------------------------------------------------------------
# Parameter / PE construction (glue, plain JAX / numpy)
# ----------------------------------------------------------------------------
def make_pe(max_len, d_model):
    # Exactly the (slightly nonstandard) PositionalEncoder formula.
    assert d_model % 2 == 0, "PositionalEncoder formula requires even d_model"
    pe = np.zeros((max_len, d_model), np.float32)
    for pos in range(max_len):
        for i in range(0, d_model, 2):
            pe[pos, i] = math.sin(pos / (10000 ** ((2 * i) / d_model)))
            pe[pos, i + 1] = math.cos(pos / (10000 ** ((2 * (i + 1)) / d_model)))
    return jnp.asarray(pe)


def init_params(key, vocab_size, d_model, heads, d_ff=256, max_len=200):
    assert d_model % heads == 0
    ks = jax.random.split(key, 8)

    def lin(k, din, dout):
        kw, kb = jax.random.split(k)
        lim = 1.0 / math.sqrt(din)
        w = jax.random.uniform(kw, (din, dout), jnp.float32, -lim, lim)
        b = jax.random.uniform(kb, (1, dout), jnp.float32, -lim, lim)
        return w, b

    wq, bq = lin(ks[1], d_model, d_model)
    wk, bk = lin(ks[2], d_model, d_model)
    wv, bv = lin(ks[3], d_model, d_model)
    wo, bo = lin(ks[4], d_model, d_model)
    w1, c1 = lin(ks[5], d_model, d_ff)
    w2, c2 = lin(ks[6], d_ff, d_model)

    layer = dict(
        # fused QKV weight (D, 3D), bf16 (halves weight DMA bytes)
        wqkv=jnp.concatenate([wq, wk, wv], axis=1).astype(jnp.bfloat16),
        bqkv=jnp.concatenate([bq, bk, bv], axis=1),
        wo=wo.astype(jnp.bfloat16), bo=bo,
        a1=jnp.ones((1, d_model), jnp.float32), g1=jnp.zeros((1, d_model), jnp.float32),
        a2=jnp.ones((1, d_model), jnp.float32), g2=jnp.zeros((1, d_model), jnp.float32),
        w1=w1.astype(jnp.bfloat16), c1=c1,
        w2=w2.astype(jnp.bfloat16), c2=c2)
    return dict(
        embed=jax.random.normal(ks[0], (vocab_size, d_model), jnp.float32),
        pe=make_pe(max_len, d_model),
        layer=layer,  # shared by all N clones (get_clones deepcopy semantics)
        norm_a=jnp.ones((1, d_model), jnp.float32),
        norm_b=jnp.zeros((1, d_model), jnp.float32))


# ----------------------------------------------------------------------------
# Encoder forward (Pallas) and pure-JAX reference (same bf16 matmul numerics)
# ----------------------------------------------------------------------------
def encoder_forward(src, mask, params, n_layers, heads):
    B, S = src.shape
    D = params['embed'].shape[1]
    # TODO(synk): embedding gather + PE add stay in plain JAX (no clean win
    # from a Pallas gather at these sizes); dropout layers are identity.
    x = jnp.take(params['embed'], src, axis=0)                # Embedder
    x = x * math.sqrt(D) + params['pe'][None, :S, :]          # PositionalEncoder
    return pl_encoder_stack(x, mask, params, n_layers, heads)


def encoder_forward_ref(src, mask, params, n_layers, heads):
    B, S = src.shape
    D = params['embed'].shape[1]
    dk = D // heads
    scale = 1.0 / math.sqrt(dk)
    x = jnp.take(params['embed'], src, axis=0)
    x = x * math.sqrt(D) + params['pe'][None, :S, :]
    p = params['layer']
    neg_bias = jnp.where(mask == 0.0, -1e9, 0.0)[:, :, None, :]   # (B,1,1,S)
    for _ in range(n_layers):
        x2 = _layernorm(x, p['a1'], p['g1'], D)
        qkv = jnp.einsum('bsd,de->bse', x2.astype(jnp.bfloat16), p['wqkv'],
                         preferred_element_type=jnp.float32) + p['bqkv']
        q = qkv[..., :D].reshape(B, S, heads, dk).transpose(0, 2, 1, 3)
        k = qkv[..., D:2 * D].reshape(B, S, heads, dk).transpose(0, 2, 1, 3)
        v = qkv[..., 2 * D:].reshape(B, S, heads, dk).transpose(0, 2, 1, 3)
        s = jnp.einsum('bhqe,bhke->bhqk',
                       q.astype(jnp.bfloat16), k.astype(jnp.bfloat16),
                       preferred_element_type=jnp.float32) * scale + neg_bias
        s = s - jnp.max(s, axis=-1, keepdims=True)
        pr = jnp.exp(s)
        pr = pr * (1.0 / jnp.sum(pr, axis=-1, keepdims=True))
        ho = jnp.einsum('bhqk,bhke->bhqe',
                        pr.astype(jnp.bfloat16), v.astype(jnp.bfloat16),
                        preferred_element_type=jnp.float32)
        cat = ho.transpose(0, 2, 1, 3).reshape(B, S, D).astype(jnp.bfloat16)
        attn = jnp.einsum('bsd,de->bse', cat, p['wo'],
                          preferred_element_type=jnp.float32) + p['bo']
        x = x + attn
        x2 = _layernorm(x, p['a2'], p['g2'], D)
        hdn = jnp.maximum(
            jnp.einsum('bsd,df->bsf', x2.astype(jnp.bfloat16), p['w1'],
                       preferred_element_type=jnp.float32) + p['c1'], 0.0)
        ff = jnp.einsum('bsf,fd->bsd', hdn.astype(jnp.bfloat16), p['w2'],
                        preferred_element_type=jnp.float32) + p['c2']
        x = x + ff
    return _layernorm(x, params['norm_a'], params['norm_b'], D)


# ----------------------------------------------------------------------------
if __name__ == "__main__":
    # d_model = 128 -> lane-dense activation blocks; seq = 8 -> sublane-aligned
    B, S, D, H, N_LAYERS, VOCAB, D_FF = 2, 8, 128, 4, 2, 50, 256

    key = jax.random.PRNGKey(0)
    k_src, k_params = jax.random.split(key)

    src = jax.random.randint(k_src, (B, S), 1, VOCAB).astype(jnp.int32)
    src = src.at[1, 6:].set(0)                              # some padding tokens
    mask = (src != 0).astype(jnp.float32)[:, None, :]       # (B, 1, S)

    params = init_params(k_params, VOCAB, D, H, d_ff=D_FF)

    out = encoder_forward(src, mask, params, N_LAYERS, H)
    out = jax.block_until_ready(out)

    ref = encoder_forward_ref(src, mask, params, N_LAYERS, H)
    ref = jax.block_until_ready(ref)

    assert out.shape == (B, S, D)
    max_err = float(np.max(np.abs(np.asarray(out) - np.asarray(ref))))
    assert np.allclose(np.asarray(out), np.asarray(ref),
                       atol=2e-3, rtol=2e-3), f"max_abs_err={max_err}"

    print("KERNEL_OK")
</pallas_src>

<mosaic_0001>
module attributes {stable_mosaic.version = 11 : i64} {
  func.func @encoder_stack_kernel(%arg0: i32, %arg1: memref<16x128xf32, #tpu.memory_space<vmem>>, %arg2: memref<1x16x16xf32, #tpu.memory_space<vmem>>, %arg3: memref<128x384xbf16, #tpu.memory_space<vmem>>, %arg4: memref<1x384xf32, #tpu.memory_space<vmem>>, %arg5: memref<128x128xbf16, #tpu.memory_space<vmem>>, %arg6: memref<1x128xf32, #tpu.memory_space<vmem>>, %arg7: memref<1x128xf32, #tpu.memory_space<vmem>>, %arg8: memref<1x128xf32, #tpu.memory_space<vmem>>, %arg9: memref<1x128xf32, #tpu.memory_space<vmem>>, %arg10: memref<1x128xf32, #tpu.memory_space<vmem>>, %arg11: memref<128x256xbf16, #tpu.memory_space<vmem>>, %arg12: memref<1x256xf32, #tpu.memory_space<vmem>>, %arg13: memref<256x128xbf16, #tpu.memory_space<vmem>>, %arg14: memref<1x128xf32, #tpu.memory_space<vmem>>, %arg15: memref<1x128xf32, #tpu.memory_space<vmem>>, %arg16: memref<1x128xf32, #tpu.memory_space<vmem>>, %arg17: memref<16x128xf32, #tpu.memory_space<vmem>>, %arg18: memref<16x128xbf16, #tpu.memory_space<vmem>>) attributes {dimension_semantics = [#tpu.dimension_semantics<parallel>], iteration_bounds = array<i64: 1>, scalar_prefetch = 0 : i64, scratch_operands = 1 : i64, tpu.core_type = #tpu.core_type<tc>, window_params = [{transform_indices = @transform_0, window_bounds = array<i64: 16, 128>}, {transform_indices = @transform_1, window_bounds = array<i64: 1, 16, 16>}, {pipeline_mode = #tpu.pipeline_mode<synchronous>, transform_indices = @transform_2, window_bounds = array<i64: 128, 384>}, {pipeline_mode = #tpu.pipeline_mode<synchronous>, transform_indices = @transform_3, window_bounds = array<i64: 1, 384>}, {pipeline_mode = #tpu.pipeline_mode<synchronous>, transform_indices = @transform_4, window_bounds = array<i64: 128, 128>}, {pipeline_mode = #tpu.pipeline_mode<synchronous>, transform_indices = @transform_5, window_bounds = array<i64: 1, 128>}, {pipeline_mode = #tpu.pipeline_mode<synchronous>, transform_indices = @transform_6, window_bounds = array<i64: 1, 128>}, {pipeline_mode = #tpu.pipeline_mode<synchronous>, transform_indices = @transform_7, window_bounds = array<i64: 1, 128>}, {pipeline_mode = #tpu.pipeline_mode<synchronous>, transform_indices = @transform_8, window_bounds = array<i64: 1, 128>}, {pipeline_mode = #tpu.pipeline_mode<synchronous>, transform_indices = @transform_9, window_bounds = array<i64: 1, 128>}, {pipeline_mode = #tpu.pipeline_mode<synchronous>, transform_indices = @transform_10, window_bounds = array<i64: 128, 256>}, {pipeline_mode = #tpu.pipeline_mode<synchronous>, transform_indices = @transform_11, window_bounds = array<i64: 1, 256>}, {pipeline_mode = #tpu.pipeline_mode<synchronous>, transform_indices = @transform_12, window_bounds = array<i64: 256, 128>}, {pipeline_mode = #tpu.pipeline_mode<synchronous>, transform_indices = @transform_13, window_bounds = array<i64: 1, 128>}, {pipeline_mode = #tpu.pipeline_mode<synchronous>, transform_indices = @transform_14, window_bounds = array<i64: 1, 128>}, {pipeline_mode = #tpu.pipeline_mode<synchronous>, transform_indices = @transform_15, window_bounds = array<i64: 1, 128>}, {transform_indices = @transform_16, window_bounds = array<i64: 16, 128>}]} {
    %c0 = arith.constant 0 : index
    %c0_0 = arith.constant 0 : index
    %0 = vector.load %arg1[%c0, %c0_0] : memref<16x128xf32, #tpu.memory_space<vmem>>, vector<16x128xf32>
    %c0_1 = arith.constant 0 : index
    %c0_2 = arith.constant 0 : index
    %c0_3 = arith.constant 0 : index
    %1 = vector.load %arg2[%c0_1, %c0_2, %c0_3] : memref<1x16x16xf32, #tpu.memory_space<vmem>>, vector<1x16x16xf32>
    %2 = vector.shape_cast %1 : vector<1x16x16xf32> to vector<16x16xf32>
    %c0_i32 = arith.constant 0 : i32
    %c0_4 = arith.constant 0 : index
    %c0_5 = arith.constant 0 : index
    %3 = vector.load %arg7[%c0_4, %c0_5] : memref<1x128xf32, #tpu.memory_space<vmem>>, vector<1x128xf32>
    %c0_6 = arith.constant 0 : index
    %c0_7 = arith.constant 0 : index
    %4 = vector.load %arg8[%c0_6, %c0_7] : memref<1x128xf32, #tpu.memory_space<vmem>>, vector<1x128xf32>
    %cst = arith.constant dense<0.000000e+00> : vector<16xf32>
    %5 = vector.multi_reduction <add>, %0, %cst [1] : vector<16x128xf32> to vector<16xf32>
    %6 = vector.shape_cast %5 : vector<16xf32> to vector<16x1xf32>
    %cst_8 = arith.constant 1.280000e+02 : f32
    %7 = vector.broadcast %cst_8 : f32 to vector<16x1xf32>
    %8 = arith.divf %6, %7 : vector<16x1xf32>
    %9 = vector.broadcast %8 : vector<16x1xf32> to vector<16x128xf32>
    %10 = arith.subf %0, %9 : vector<16x128xf32>
    %11 = arith.mulf %10, %10 : vector<16x128xf32>
    %cst_9 = arith.constant dense<0.000000e+00> : vector<16xf32>
    %12 = vector.multi_reduction <add>, %11, %cst_9 [1] : vector<16x128xf32> to vector<16xf32>
    %13 = vector.shape_cast %12 : vector<16xf32> to vector<16x1xf32>
    %cst_10 = arith.constant 0.00787401571 : f32
    %14 = vector.broadcast %cst_10 : f32 to vector<16x1xf32>
    %15 = arith.mulf %13, %14 : vector<16x1xf32>
    %16 = math.sqrt %15 : vector<16x1xf32>
    %cst_11 = arith.constant 9.99999997E-7 : f32
    %17 = vector.broadcast %cst_11 : f32 to vector<16x1xf32>
    %18 = arith.addf %16, %17 : vector<16x1xf32>
    %cst_12 = arith.constant 1.000000e+00 : f32
    %19 = vector.broadcast %cst_12 : f32 to vector<16x1xf32>
    %20 = arith.divf %19, %18 : vector<16x1xf32>
    %21 = vector.broadcast %20 : vector<16x1xf32> to vector<16x128xf32>
    %22 = arith.mulf %10, %21 : vector<16x128xf32>
    %23 = vector.broadcast %3 : vector<1x128xf32> to vector<16x128xf32>
    %24 = arith.mulf %23, %22 : vector<16x128xf32>
    %25 = vector.broadcast %4 : vector<1x128xf32> to vector<16x128xf32>
    %26 = arith.addf %24, %25 : vector<16x128xf32>
    %27 = arith.truncf %26 : vector<16x128xf32> to vector<16x128xbf16>
    %c0_13 = arith.constant 0 : index
    %c0_14 = arith.constant 0 : index
    %28 = vector.load %arg3[%c0_13, %c0_14] : memref<128x384xbf16, #tpu.memory_space<vmem>>, vector<128x384xbf16>
    %cst_15 = arith.constant dense<0.000000e+00> : vector<16x384xf32>
    %29 = tpu.matmul %27, %28, %cst_15 {dimension_numbers = #tpu.dot_dimension_numbers<[1], [0], [0], [1], [0, 0, 1, 1], [], []>} : vector<16x128xbf16>, vector<128x384xbf16>, vector<16x384xf32> -> vector<16x384xf32>
    %c0_16 = arith.constant 0 : index
    %c0_17 = arith.constant 0 : index
    %30 = vector.load %arg4[%c0_16, %c0_17] : memref<1x384xf32, #tpu.memory_space<vmem>>, vector<1x384xf32>
    %31 = vector.broadcast %30 : vector<1x384xf32> to vector<16x384xf32>
    %32 = arith.addf %29, %31 : vector<16x384xf32>
    %33 = vector.extract_strided_slice %32 {offsets = [0, 0], sizes = [16, 32], strides = [1, 1]} : vector<16x384xf32> to vector<16x32xf32>
    %34 = vector.extract_strided_slice %32 {offsets = [0, 128], sizes = [16, 32], strides = [1, 1]} : vector<16x384xf32> to vector<16x32xf32>
    %35 = vector.extract_strided_slice %32 {offsets = [0, 256], sizes = [16, 32], strides = [1, 1]} : vector<16x384xf32> to vector<16x32xf32>
    %36 = arith.truncf %33 : vector<16x32xf32> to vector<16x32xbf16>
    %37 = arith.truncf %34 : vector<16x32xf32> to vector<16x32xbf16>
    %cst_18 = arith.constant dense<0.000000e+00> : vector<16x16xf32>
    %38 = tpu.matmul %36, %37, %cst_18 {dimension_numbers = #tpu.dot_dimension_numbers<[1], [1], [0], [0], [0, 0, 1, 0], [], []>} : vector<16x32xbf16>, vector<16x32xbf16>, vector<16x16xf32> -> vector<16x16xf32>
    %cst_19 = arith.constant 0.176776692 : f32
    %39 = vector.broadcast %cst_19 : f32 to vector<16x16xf32>
    %40 = arith.mulf %38, %39 : vector<16x16xf32>
    %41 = arith.addf %40, %2 : vector<16x16xf32>
    %cst_20 = arith.constant dense<0xFF800000> : vector<16xf32>
    %42 = vector.multi_reduction <maximumf>, %41, %cst_20 [1] : vector<16x16xf32> to vector<16xf32>
    %43 = vector.shape_cast %42 : vector<16xf32> to vector<16x1xf32>
    %44 = vector.broadcast %43 : vector<16x1xf32> to vector<16x16xf32>
    %45 = arith.subf %41, %44 : vector<16x16xf32>
    %46 = math.exp %45 : vector<16x16xf32>
    %cst_21 = arith.constant dense<0.000000e+00> : vector<16xf32>
    %47 = vector.multi_reduction <add>, %46, %cst_21 [1] : vector<16x16xf32> to vector<16xf32>
    %48 = vector.shape_cast %47 : vector<16xf32> to vector<16x1xf32>
    %cst_22 = arith.constant 1.000000e+00 : f32
    %49 = vector.broadcast %cst_22 : f32 to vector<16x1xf32>
    %50 = arith.divf %49, %48 : vector<16x1xf32>
    %51 = vector.broadcast %50 : vector<16x1xf32> to vector<16x16xf32>
    %52 = arith.mulf %46, %51 : vector<16x16xf32>
    %53 = arith.truncf %52 : vector<16x16xf32> to vector<16x16xbf16>
    %54 = arith.truncf %35 : vector<16x32xf32> to vector<16x32xbf16>
    %cst_23 = arith.constant dense<0.000000e+00> : vector<16x32xf32>
    %55 = tpu.matmul %53, %54, %cst_23 {dimension_numbers = #tpu.dot_dimension_numbers<[1], [0], [0], [1], [0, 0, 1, 1], [], []>} : vector<16x16xbf16>, vector<16x32xbf16>, vector<16x32xf32> -> vector<16x32xf32>
    %56 = arith.truncf %55 : vector<16x32xf32> to vector<16x32xbf16>
    %c0_24 = arith.constant 0 : index
    %c0_25 = arith.constant 0 : index
    %57 = vector.load %arg18[%c0_24, %c0_25] : memref<16x128xbf16, #tpu.memory_space<vmem>>, vector<16x32xbf16>
    tpu.vector_store %arg18[%c0_24, %c0_25], %56 {strides = array<i32>} : memref<16x128xbf16, #tpu.memory_space<vmem>>, vector<16x32xbf16>,
    %58 = vector.extract_strided_slice %32 {offsets = [0, 32], sizes = [16, 32], strides = [1, 1]} : vector<16x384xf32> to vector<16x32xf32>
    %59 = vector.extract_strided_slice %32 {offsets = [0, 160], sizes = [16, 32], strides = [1, 1]} : vector<16x384xf32> to vector<16x32xf32>
    %60 = vector.extract_strided_slice %32 {offsets = [0, 288], sizes = [16, 32], strides = [1, 1]} : vector<16x384xf32> to vector<16x32xf32>
    %61 = arith.truncf %58 : vector<16x32xf32> to vector<16x32xbf16>
    %62 = arith.truncf %59 : vector<16x32xf32> to vector<16x32xbf16>
    %cst_26 = arith.constant dense<0.000000e+00> : vector<16x16xf32>
    %63 = tpu.matmul %61, %62, %cst_26 {dimension_numbers = #tpu.dot_dimension_numbers<[1], [1], [0], [0], [0, 0, 1, 0], [], []>} : vector<16x32xbf16>, vector<16x32xbf16>, vector<16x16xf32> -> vector<16x16xf32>
    %cst_27 = arith.constant 0.176776692 : f32
    %64 = vector.broadcast %cst_27 : f32 to vector<16x16xf32>
    %65 = arith.mulf %63, %64 : vector<16x16xf32>
    %66 = arith.addf %65, %2 : vector<16x16xf32>
    %cst_28 = arith.constant dense<0xFF800000> : vector<16xf32>
    %67 = vector.multi_reduction <maximumf>, %66, %cst_28 [1] : vector<16x16xf32> to vector<16xf32>
    %68 = vector.shape_cast %67 : vector<16xf32> to vector<16x1xf32>
    %69 = vector.broadcast %68 : vector<16x1xf32> to vector<16x16xf32>
    %70 = arith.subf %66, %69 : vector<16x16xf32>
    %71 = math.exp %70 : vector<16x16xf32>
    %cst_29 = arith.constant dense<0.000000e+00> : vector<16xf32>
    %72 = vector.multi_reduction <add>, %71, %cst_29 [1] : vector<16x16xf32> to vector<16xf32>
    %73 = vector.shape_cast %72 : vector<16xf32> to vector<16x1xf32>
    %cst_30 = arith.constant 1.000000e+00 : f32
    %74 = vector.broadcast %cst_30 : f32 to vector<16x1xf32>
    %75 = arith.divf %74, %73 : vector<16x1xf32>
    %76 = vector.broadcast %75 : vector<16x1xf32> to vector<16x16xf32>
    %77 = arith.mulf %71, %76 : vector<16x16xf32>
    %78 = arith.truncf %77 : vector<16x16xf32> to vector<16x16xbf16>
    %79 = arith.truncf %60 : vector<16x32xf32> to vector<16x32xbf16>
    %cst_31 = arith.constant dense<0.000000e+00> : vector<16x32xf32>
    %80 = tpu.matmul %78, %79, %cst_31 {dimension_numbers = #tpu.dot_dimension_numbers<[1], [0], [0], [1], [0, 0, 1, 1], [], []>} : vector<16x16xbf16>, vector<16x32xbf16>, vector<16x32xf32> -> vector<16x32xf32>
    %81 = arith.truncf %80 : vector<16x32xf32> to vector<16x32xbf16>
    %c0_32 = arith.constant 0 : index
    %c32 = arith.constant 32 : index
    %82 = vector.load %arg18[%c0_32, %c32] : memref<16x128xbf16, #tpu.memory_space<vmem>>, vector<16x32xbf16>
    tpu.vector_store %arg18[%c0_32, %c32], %81 {strides = array<i32>} : memref<16x128xbf16, #tpu.memory_space<vmem>>, vector<16x32xbf16>,
    %83 = vector.extract_strided_slice %32 {offsets = [0, 64], sizes = [16, 32], strides = [1, 1]} : vector<16x384xf32> to vector<16x32xf32>
    %84 = vector.extract_strided_slice %32 {offsets = [0, 192], sizes = [16, 32], strides = [1, 1]} : vector<16x384xf32> to vector<16x32xf32>
    %85 = vector.extract_strided_slice %32 {offsets = [0, 320], sizes = [16, 32], strides = [1, 1]} : vector<16x384xf32> to vector<16x32xf32>
    %86 = arith.truncf %83 : vector<16x32xf32> to vector<16x32xbf16>
    %87 = arith.truncf %84 : vector<16x32xf32> to vector<16x32xbf16>
    %cst_33 = arith.constant dense<0.000000e+00> : vector<16x16xf32>
    %88 = tpu.matmul %86, %87, %cst_33 {dimension_numbers = #tpu.dot_dimension_numbers<[1], [1], [0], [0], [0, 0, 1, 0], [], []>} : vector<16x32xbf16>, vector<16x32xbf16>, vector<16x16xf32> -> vector<16x16xf32>
    %cst_34 = arith.constant 0.176776692 : f32
    %89 = vector.broadcast %cst_34 : f32 to vector<16x16xf32>
    %90 = arith.mulf %88, %89 : vector<16x16xf32>
    %91 = arith.addf %90, %2 : vector<16x16xf32>
    %cst_35 = arith.constant dense<0xFF800000> : vector<16xf32>
    %92 = vector.multi_reduction <maximumf>, %91, %cst_35 [1] : vector<16x16xf32> to vector<16xf32>
    %93 = vector.shape_cast %92 : vector<16xf32> to vector<16x1xf32>
    %94 = vector.broadcast %93 : vector<16x1xf32> to vector<16x16xf32>
    %95 = arith.subf %91, %94 : vector<16x16xf32>
    %96 = math.exp %95 : vector<16x16xf32>
    %cst_36 = arith.constant dense<0.000000e+00> : vector<16xf32>
    %97 = vector.multi_reduction <add>, %96, %cst_36 [1] : vector<16x16xf32> to vector<16xf32>
    %98 = vector.shape_cast %97 : vector<16xf32> to vector<16x1xf32>
    %cst_37 = arith.constant 1.000000e+00 : f32
    %99 = vector.broadcast %cst_37 : f32 to vector<16x1xf32>
    %100 = arith.divf %99, %98 : vector<16x1xf32>
    %101 = vector.broadcast %100 : vector<16x1xf32> to vector<16x16xf32>
    %102 = arith.mulf %96, %101 : vector<16x16xf32>
    %103 = arith.truncf %102 : vector<16x16xf32> to vector<16x16xbf16>
    %104 = arith.truncf %85 : vector<16x32xf32> to vector<16x32xbf16>
    %cst_38 = arith.constant dense<0.000000e+00> : vector<16x32xf32>
    %105 = tpu.matmul %103, %104, %cst_38 {dimension_numbers = #tpu.dot_dimension_numbers<[1], [0], [0], [1], [0, 0, 1, 1], [], []>} : vector<16x16xbf16>, vector<16x32xbf16>, vector<16x32xf32> -> vector<16x32xf32>
    %106 = arith.truncf %105 : vector<16x32xf32> to vector<16x32xbf16>
    %c0_39 = arith.constant 0 : index
    %c64 = arith.constant 64 : index
    %107 = vector.load %arg18[%c0_39, %c64] : memref<16x128xbf16, #tpu.memory_space<vmem>>, vector<16x32xbf16>
    tpu.vector_store %arg18[%c0_39, %c64], %106 {strides = array<i32>} : memref<16x128xbf16, #tpu.memory_space<vmem>>, vector<16x32xbf16>,
    %108 = vector.extract_strided_slice %32 {offsets = [0, 96], sizes = [16, 32], strides = [1, 1]} : vector<16x384xf32> to vector<16x32xf32>
    %109 = vector.extract_strided_slice %32 {offsets = [0, 224], sizes = [16, 32], strides = [1, 1]} : vector<16x384xf32> to vector<16x32xf32>
    %110 = vector.extract_strided_slice %32 {offsets = [0, 352], sizes = [16, 32], strides = [1, 1]} : vector<16x384xf32> to vector<16x32xf32>
    %111 = arith.truncf %108 : vector<16x32xf32> to vector<16x32xbf16>
    %112 = arith.truncf %109 : vector<16x32xf32> to vector<16x32xbf16>
    %cst_40 = arith.constant dense<0.000000e+00> : vector<16x16xf32>
    %113 = tpu.matmul %111, %112, %cst_40 {dimension_numbers = #tpu.dot_dimension_numbers<[1], [1], [0], [0], [0, 0, 1, 0], [], []>} : vector<16x32xbf16>, vector<16x32xbf16>, vector<16x16xf32> -> vector<16x16xf32>
    %cst_41 = arith.constant 0.176776692 : f32
    %114 = vector.broadcast %cst_41 : f32 to vector<16x16xf32>
    %115 = arith.mulf %113, %114 : vector<16x16xf32>
    %116 = arith.addf %115, %2 : vector<16x16xf32>
    %cst_42 = arith.constant dense<0xFF800000> : vector<16xf32>
    %117 = vector.multi_reduction <maximumf>, %116, %cst_42 [1] : vector<16x16xf32> to vector<16xf32>
    %118 = vector.shape_cast %117 : vector<16xf32> to vector<16x1xf32>
    %119 = vector.broadcast %118 : vector<16x1xf32> to vector<16x16xf32>
    %120 = arith.subf %116, %119 : vector<16x16xf32>
    %121 = math.exp %120 : vector<16x16xf32>
    %cst_43 = arith.constant dense<0.000000e+00> : vector<16xf32>
    %122 = vector.multi_reduction <add>, %121, %cst_43 [1] : vector<16x16xf32> to vector<16xf32>
    %123 = vector.shape_cast %122 : vector<16xf32> to vector<16x1xf32>
    %cst_44 = arith.constant 1.000000e+00 : f32
    %124 = vector.broadcast %cst_44 : f32 to vector<16x1xf32>
    %125 = arith.divf %124, %123 : vector<16x1xf32>
    %126 = vector.broadcast %125 : vector<16x1xf32> to vector<16x16xf32>
    %127 = arith.mulf %121, %126 : vector<16x16xf32>
    %128 = arith.truncf %127 : vector<16x16xf32> to vector<16x16xbf16>
    %129 = arith.truncf %110 : vector<16x32xf32> to vector<16x32xbf16>
    %cst_45 = arith.constant dense<0.000000e+00> : vector<16x32xf32>
    %130 = tpu.matmul %128, %129, %cst_45 {dimension_numbers = #tpu.dot_dimension_numbers<[1], [0], [0], [1], [0, 0, 1, 1], [], []>} : vector<16x16xbf16>, vector<16x32xbf16>, vector<16x32xf32> -> vector<16x32xf32>
    %131 = arith.truncf %130 : vector<16x32xf32> to vector<16x32xbf16>
    %c0_46 = arith.constant 0 : index
    %c96 = arith.constant 96 : index
    %132 = vector.load %arg18[%c0_46, %c96] : memref<16x128xbf16, #tpu.memory_space<vmem>>, vector<16x32xbf16>
    tpu.vector_store %arg18[%c0_46, %c96], %131 {strides = array<i32>} : memref<16x128xbf16, #tpu.memory_space<vmem>>, vector<16x32xbf16>,
    %c0_47 = arith.constant 0 : index
    %c0_48 = arith.constant 0 : index
    %133 = vector.load %arg18[%c0_47, %c0_48] : memref<16x128xbf16, #tpu.memory_space<vmem>>, vector<16x128xbf16>
    %c0_49 = arith.constant 0 : index
    %c0_50 = arith.constant 0 : index
    %134 = vector.load %arg5[%c0_49, %c0_50] : memref<128x128xbf16, #tpu.memory_space<vmem>>, vector<128x128xbf16>
    %cst_51 = arith.constant dense<0.000000e+00> : vector<16x128xf32>
    %135 = tpu.matmul %133, %134, %cst_51 {dimension_numbers = #tpu.dot_dimension_numbers<[1], [0], [0], [1], [0, 0, 1, 1], [], []>} : vector<16x128xbf16>, vector<128x128xbf16>, vector<16x128xf32> -> vector<16x128xf32>
    %c0_52 = arith.constant 0 : index
    %c0_53 = arith.constant 0 : index
    %136 = vector.load %arg6[%c0_52, %c0_53] : memref<1x128xf32, #tpu.memory_space<vmem>>, vector<1x128xf32>
    %137 = vector.broadcast %136 : vector<1x128xf32> to vector<16x128xf32>
    %138 = arith.addf %135, %137 : vector<16x128xf32>
    %139 = arith.addf %0, %138 : vector<16x128xf32>
    %c0_54 = arith.constant 0 : index
    %c0_55 = arith.constant 0 : index
    %140 = vector.load %arg9[%c0_54, %c0_55] : memref<1x128xf32, #tpu.memory_space<vmem>>, vector<1x128xf32>
    %c0_56 = arith.constant 0 : index
    %c0_57 = arith.constant 0 : index
    %141 = vector.load %arg10[%c0_56, %c0_57] : memref<1x128xf32, #tpu.memory_space<vmem>>, vector<1x128xf32>
    %cst_58 = arith.constant dense<0.000000e+00> : vector<16xf32>
    %142 = vector.multi_reduction <add>, %139, %cst_58 [1] : vector<16x128xf32> to vector<16xf32>
    %143 = vector.shape_cast %142 : vector<16xf32> to vector<16x1xf32>
    %cst_59 = arith.constant 1.280000e+02 : f32
    %144 = vector.broadcast %cst_59 : f32 to vector<16x1xf32>
    %145 = arith.divf %143, %144 : vector<16x1xf32>
    %146 = vector.broadcast %145 : vector<16x1xf32> to vector<16x128xf32>
    %147 = arith.subf %139, %146 : vector<16x128xf32>
    %148 = arith.mulf %147, %147 : vector<16x128xf32>
    %cst_60 = arith.constant dense<0.000000e+00> : vector<16xf32>
    %149 = vector.multi_reduction <add>, %148, %cst_60 [1] : vector<16x128xf32> to vector<16xf32>
    %150 = vector.shape_cast %149 : vector<16xf32> to vector<16x1xf32>
    %cst_61 = arith.constant 0.00787401571 : f32
    %151 = vector.broadcast %cst_61 : f32 to vector<16x1xf32>
    %152 = arith.mulf %150, %151 : vector<16x1xf32>
    %153 = math.sqrt %152 : vector<16x1xf32>
    %cst_62 = arith.constant 9.99999997E-7 : f32
    %154 = vector.broadcast %cst_62 : f32 to vector<16x1xf32>
    %155 = arith.addf %153, %154 : vector<16x1xf32>
    %cst_63 = arith.constant 1.000000e+00 : f32
    %156 = vector.broadcast %cst_63 : f32 to vector<16x1xf32>
    %157 = arith.divf %156, %155 : vector<16x1xf32>
    %158 = vector.broadcast %157 : vector<16x1xf32> to vector<16x128xf32>
    %159 = arith.mulf %147, %158 : vector<16x128xf32>
    %160 = vector.broadcast %140 : vector<1x128xf32> to vector<16x128xf32>
    %161 = arith.mulf %160, %159 : vector<16x128xf32>
    %162 = vector.broadcast %141 : vector<1x128xf32> to vector<16x128xf32>
    %163 = arith.addf %161, %162 : vector<16x128xf32>
    %164 = arith.truncf %163 : vector<16x128xf32> to vector<16x128xbf16>
    %c0_64 = arith.constant 0 : index
    %c0_65 = arith.constant 0 : index
    %165 = vector.load %arg11[%c0_64, %c0_65] : memref<128x256xbf16, #tpu.memory_space<vmem>>, vector<128x256xbf16>
    %cst_66 = arith.constant dense<0.000000e+00> : vector<16x256xf32>
    %166 = tpu.matmul %164, %165, %cst_66 {dimension_numbers = #tpu.dot_dimension_numbers<[1], [0], [0], [1], [0, 0, 1, 1], [], []>} : vector<16x128xbf16>, vector<128x256xbf16>, vector<16x256xf32> -> vector<16x256xf32>
    %c0_67 = arith.constant 0 : index
    %c0_68 = arith.constant 0 : index
    %167 = vector.load %arg12[%c0_67, %c0_68] : memref<1x256xf32, #tpu.memory_space<vmem>>, vector<1x256xf32>
    %168 = vector.broadcast %167 : vector<1x256xf32> to vector<16x256xf32>
    %169 = arith.addf %166, %168 : vector<16x256xf32>
    %cst_69 = arith.constant 0.000000e+00 : f32
    %170 = vector.broadcast %cst_69 : f32 to vector<16x256xf32>
    %171 = arith.maximumf %169, %170 : vector<16x256xf32>
    %172 = arith.truncf %171 : vector<16x256xf32> to vector<16x256xbf16>
    %c0_70 = arith.constant 0 : index
    %c0_71 = arith.constant 0 : index
    %173 = vector.load %arg13[%c0_70, %c0_71] : memref<256x128xbf16, #tpu.memory_space<vmem>>, vector<256x128xbf16>
    %cst_72 = arith.constant dense<0.000000e+00> : vector<16x128xf32>
    %174 = tpu.matmul %172, %173, %cst_72 {dimension_numbers = #tpu.dot_dimension_numbers<[1], [0], [0], [1], [0, 0, 1, 1], [], []>} : vector<16x256xbf16>, vector<256x128xbf16>, vector<16x128xf32> -> vector<16x128xf32>
    %c0_73 = arith.constant 0 : index
    %c0_74 = arith.constant 0 : index
    %175 = vector.load %arg14[%c0_73, %c0_74] : memref<1x128xf32, #tpu.memory_space<vmem>>, vector<1x128xf32>
    %176 = vector.broadcast %175 : vector<1x128xf32> to vector<16x128xf32>
    %177 = arith.addf %174, %176 : vector<16x128xf32>
    %178 = arith.addf %139, %177 : vector<16x128xf32>
    %c1_i32 = arith.constant 1 : i32
    %c0_75 = arith.constant 0 : index
    %c0_76 = arith.constant 0 : index
    %179 = vector.load %arg7[%c0_75, %c0_76] : memref<1x128xf32, #tpu.memory_space<vmem>>, vector<1x128xf32>
    %c0_77 = arith.constant 0 : index
    %c0_78 = arith.constant 0 : index
    %180 = vector.load %arg8[%c0_77, %c0_78] : memref<1x128xf32, #tpu.memory_space<vmem>>, vector<1x128xf32>
    %cst_79 = arith.constant dense<0.000000e+00> : vector<16xf32>
    %181 = vector.multi_reduction <add>, %178, %cst_79 [1] : vector<16x128xf32> to vector<16xf32>
    %182 = vector.shape_cast %181 : vector<16xf32> to vector<16x1xf32>
    %cst_80 = arith.constant 1.280000e+02 : f32
    %183 = vector.broadcast %cst_80 : f32 to vector<16x1xf32>
    %184 = arith.divf %182, %183 : vector<16x1xf32>
    %185 = vector.broadcast %184 : vector<16x1xf32> to vector<16x128xf32>
    %186 = arith.subf %178, %185 : vector<16x128xf32>
    %187 = arith.mulf %186, %186 : vector<16x128xf32>
    %cst_81 = arith.constant dense<0.000000e+00> : vector<16xf32>
    %188 = vector.multi_reduction <add>, %187, %cst_81 [1] : vector<16x128xf32> to vector<16xf32>
    %189 = vector.shape_cast %188 : vector<16xf32> to vector<16x1xf32>
    %cst_82 = arith.constant 0.00787401571 : f32
    %190 = vector.broadcast %cst_82 : f32 to vector<16x1xf32>
    %191 = arith.mulf %189, %190 : vector<16x1xf32>
    %192 = math.sqrt %191 : vector<16x1xf32>
    %cst_83 = arith.constant 9.99999997E-7 : f32
    %193 = vector.broadcast %cst_83 : f32 to vector<16x1xf32>
    %194 = arith.addf %192, %193 : vector<16x1xf32>
    %cst_84 = arith.constant 1.000000e+00 : f32
    %195 = vector.broadcast %cst_84 : f32 to vector<16x1xf32>
    %196 = arith.divf %195, %194 : vector<16x1xf32>
    %197 = vector.broadcast %196 : vector<16x1xf32> to vector<16x128xf32>
    %198 = arith.mulf %186, %197 : vector<16x128xf32>
    %199 = vector.broadcast %179 : vector<1x128xf32> to vector<16x128xf32>
    %200 = arith.mulf %199, %198 : vector<16x128xf32>
    %201 = vector.broadcast %180 : vector<1x128xf32> to vector<16x128xf32>
    %202 = arith.addf %200, %201 : vector<16x128xf32>
    %203 = arith.truncf %202 : vector<16x128xf32> to vector<16x128xbf16>
    %c0_85 = arith.constant 0 : index
    %c0_86 = arith.constant 0 : index
    %204 = vector.load %arg3[%c0_85, %c0_86] : memref<128x384xbf16, #tpu.memory_space<vmem>>, vector<128x384xbf16>
    %cst_87 = arith.constant dense<0.000000e+00> : vector<16x384xf32>
    %205 = tpu.matmul %203, %204, %cst_87 {dimension_numbers = #tpu.dot_dimension_numbers<[1], [0], [0], [1], [0, 0, 1, 1], [], []>} : vector<16x128xbf16>, vector<128x384xbf16>, vector<16x384xf32> -> vector<16x384xf32>
    %c0_88 = arith.constant 0 : index
    %c0_89 = arith.constant 0 : index
    %206 = vector.load %arg4[%c0_88, %c0_89] : memref<1x384xf32, #tpu.memory_space<vmem>>, vector<1x384xf32>
    %207 = vector.broadcast %206 : vector<1x384xf32> to vector<16x384xf32>
    %208 = arith.addf %205, %207 : vector<16x384xf32>
    %209 = vector.extract_strided_slice %208 {offsets = [0, 0], sizes = [16, 32], strides = [1, 1]} : vector<16x384xf32> to vector<16x32xf32>
    %210 = vector.extract_strided_slice %208 {offsets = [0, 128], sizes = [16, 32], strides = [1, 1]} : vector<16x384xf32> to vector<16x32xf32>
    %211 = vector.extract_strided_slice %208 {offsets = [0, 256], sizes = [16, 32], strides = [1, 1]} : vector<16x384xf32> to vector<16x32xf32>
    %212 = arith.truncf %209 : vector<16x32xf32> to vector<16x32xbf16>
    %213 = arith.truncf %210 : vector<16x32xf32> to vector<16x32xbf16>
    %cst_90 = arith.constant dense<0.000000e+00> : vector<16x16xf32>
    %214 = tpu.matmul %212, %213, %cst_90 {dimension_numbers = #tpu.dot_dimension_numbers<[1], [1], [0], [0], [0, 0, 1, 0], [], []>} : vector<16x32xbf16>, vector<16x32xbf16>, vector<16x16xf32> -> vector<16x16xf32>
    %cst_91 = arith.constant 0.176776692 : f32
    %215 = vector.broadcast %cst_91 : f32 to vector<16x16xf32>
    %216 = arith.mulf %214, %215 : vector<16x16xf32>
    %217 = arith.addf %216, %2 : vector<16x16xf32>
    %cst_92 = arith.constant dense<0xFF800000> : vector<16xf32>
    %218 = vector.multi_reduction <maximumf>, %217, %cst_92 [1] : vector<16x16xf32> to vector<16xf32>
    %219 = vector.shape_cast %218 : vector<16xf32> to vector<16x1xf32>
    %220 = vector.broadcast %219 : vector<16x1xf32> to vector<16x16xf32>
    %221 = arith.subf %217, %220 : vector<16x16xf32>
    %222 = math.exp %221 : vector<16x16xf32>
    %cst_93 = arith.constant dense<0.000000e+00> : vector<16xf32>
    %223 = vector.multi_reduction <add>, %222, %cst_93 [1] : vector<16x16xf32> to vector<16xf32>
    %224 = vector.shape_cast %223 : vector<16xf32> to vector<16x1xf32>
    %cst_94 = arith.constant 1.000000e+00 : f32
    %225 = vector.broadcast %cst_94 : f32 to vector<16x1xf32>
    %226 = arith.divf %225, %224 : vector<16x1xf32>
    %227 = vector.broadcast %226 : vector<16x1xf32> to vector<16x16xf32>
    %228 = arith.mulf %222, %227 : vector<16x16xf32>
    %229 = arith.truncf %228 : vector<16x16xf32> to vector<16x16xbf16>
    %230 = arith.truncf %211 : vector<16x32xf32> to vector<16x32xbf16>
    %cst_95 = arith.constant dense<0.000000e+00> : vector<16x32xf32>
    %231 = tpu.matmul %229, %230, %cst_95 {dimension_numbers = #tpu.dot_dimension_numbers<[1], [0], [0], [1], [0, 0, 1, 1], [], []>} : vector<16x16xbf16>, vector<16x32xbf16>, vector<16x32xf32> -> vector<16x32xf32>
    %232 = arith.truncf %231 : vector<16x32xf32> to vector<16x32xbf16>
    %c0_96 = arith.constant 0 : index
    %c0_97 = arith.constant 0 : index
    %233 = vector.load %arg18[%c0_96, %c0_97] : memref<16x128xbf16, #tpu.memory_space<vmem>>, vector<16x32xbf16>
    tpu.vector_store %arg18[%c0_96, %c0_97], %232 {strides = array<i32>} : memref<16x128xbf16, #tpu.memory_space<vmem>>, vector<16x32xbf16>,
    %234 = vector.extract_strided_slice %208 {offsets = [0, 32], sizes = [16, 32], strides = [1, 1]} : vector<16x384xf32> to vector<16x32xf32>
    %235 = vector.extract_strided_slice %208 {offsets = [0, 160], sizes = [16, 32], strides = [1, 1]} : vector<16x384xf32> to vector<16x32xf32>
    %236 = vector.extract_strided_slice %208 {offsets = [0, 288], sizes = [16, 32], strides = [1, 1]} : vector<16x384xf32> to vector<16x32xf32>
    %237 = arith.truncf %234 : vector<16x32xf32> to vector<16x32xbf16>
    %238 = arith.truncf %235 : vector<16x32xf32> to vector<16x32xbf16>
    %cst_98 = arith.constant dense<0.000000e+00> : vector<16x16xf32>
    %239 = tpu.matmul %237, %238, %cst_98 {dimension_numbers = #tpu.dot_dimension_numbers<[1], [1], [0], [0], [0, 0, 1, 0], [], []>} : vector<16x32xbf16>, vector<16x32xbf16>, vector<16x16xf32> -> vector<16x16xf32>
    %cst_99 = arith.constant 0.176776692 : f32
    %240 = vector.broadcast %cst_99 : f32 to vector<16x16xf32>
    %241 = arith.mulf %239, %240 : vector<16x16xf32>
    %242 = arith.addf %241, %2 : vector<16x16xf32>
    %cst_100 = arith.constant dense<0xFF800000> : vector<16xf32>
    %243 = vector.multi_reduction <maximumf>, %242, %cst_100 [1] : vector<16x16xf32> to vector<16xf32>
    %244 = vector.shape_cast %243 : vector<16xf32> to vector<16x1xf32>
    %245 = vector.broadcast %244 : vector<16x1xf32> to vector<16x16xf32>
    %246 = arith.subf %242, %245 : vector<16x16xf32>
    %247 = math.exp %246 : vector<16x16xf32>
    %cst_101 = arith.constant dense<0.000000e+00> : vector<16xf32>
    %248 = vector.multi_reduction <add>, %247, %cst_101 [1] : vector<16x16xf32> to vector<16xf32>
    %249 = vector.shape_cast %248 : vector<16xf32> to vector<16x1xf32>
    %cst_102 = arith.constant 1.000000e+00 : f32
    %250 = vector.broadcast %cst_102 : f32 to vector<16x1xf32>
    %251 = arith.divf %250, %249 : vector<16x1xf32>
    %252 = vector.broadcast %251 : vector<16x1xf32> to vector<16x16xf32>
    %253 = arith.mulf %247, %252 : vector<16x16xf32>
    %254 = arith.truncf %253 : vector<16x16xf32> to vector<16x16xbf16>
    %255 = arith.truncf %236 : vector<16x32xf32> to vector<16x32xbf16>
    %cst_103 = arith.constant dense<0.000000e+00> : vector<16x32xf32>
    %256 = tpu.matmul %254, %255, %cst_103 {dimension_numbers = #tpu.dot_dimension_numbers<[1], [0], [0], [1], [0, 0, 1, 1], [], []>} : vector<16x16xbf16>, vector<16x32xbf16>, vector<16x32xf32> -> vector<16x32xf32>
    %257 = arith.truncf %256 : vector<16x32xf32> to vector<16x32xbf16>
    %c0_104 = arith.constant 0 : index
    %c32_105 = arith.constant 32 : index
    %258 = vector.load %arg18[%c0_104, %c32_105] : memref<16x128xbf16, #tpu.memory_space<vmem>>, vector<16x32xbf16>
    tpu.vector_store %arg18[%c0_104, %c32_105], %257 {strides = array<i32>} : memref<16x128xbf16, #tpu.memory_space<vmem>>, vector<16x32xbf16>,
    %259 = vector.extract_strided_slice %208 {offsets = [0, 64], sizes = [16, 32], strides = [1, 1]} : vector<16x384xf32> to vector<16x32xf32>
    %260 = vector.extract_strided_slice %208 {offsets = [0, 192], sizes = [16, 32], strides = [1, 1]} : vector<16x384xf32> to vector<16x32xf32>
    %261 = vector.extract_strided_slice %208 {offsets = [0, 320], sizes = [16, 32], strides = [1, 1]} : vector<16x384xf32> to vector<16x32xf32>
    %262 = arith.truncf %259 : vector<16x32xf32> to vector<16x32xbf16>
    %263 = arith.truncf %260 : vector<16x32xf32> to vector<16x32xbf16>
    %cst_106 = arith.constant dense<0.000000e+00> : vector<16x16xf32>
    %264 = tpu.matmul %262, %263, %cst_106 {dimension_numbers = #tpu.dot_dimension_numbers<[1], [1], [0], [0], [0, 0, 1, 0], [], []>} : vector<16x32xbf16>, vector<16x32xbf16>, vector<16x16xf32> -> vector<16x16xf32>
    %cst_107 = arith.constant 0.176776692 : f32
    %265 = vector.broadcast %cst_107 : f32 to vector<16x16xf32>
    %266 = arith.mulf %264, %265 : vector<16x16xf32>
    %267 = arith.addf %266, %2 : vector<16x16xf32>
    %cst_108 = arith.constant dense<0xFF800000> : vector<16xf32>
    %268 = vector.multi_reduction <maximumf>, %267, %cst_108 [1] : vector<16x16xf32> to vector<16xf32>
    %269 = vector.shape_cast %268 : vector<16xf32> to vector<16x1xf32>
    %270 = vector.broadcast %269 : vector<16x1xf32> to vector<16x16xf32>
    %271 = arith.subf %267, %270 : vector<16x16xf32>
    %272 = math.exp %271 : vector<16x16xf32>
    %cst_109 = arith.constant dense<0.000000e+00> : vector<16xf32>
    %273 = vector.multi_reduction <add>, %272, %cst_109 [1] : vector<16x16xf32> to vector<16xf32>
    %274 = vector.shape_cast %273 : vector<16xf32> to vector<16x1xf32>
    %cst_110 = arith.constant 1.000000e+00 : f32
    %275 = vector.broadcast %cst_110 : f32 to vector<16x1xf32>
    %276 = arith.divf %275, %274 : vector<16x1xf32>
    %277 = vector.broadcast %276 : vector<16x1xf32> to vector<16x16xf32>
    %278 = arith.mulf %272, %277 : vector<16x16xf32>
    %279 = arith.truncf %278 : vector<16x16xf32> to vector<16x16xbf16>
    %280 = arith.truncf %261 : vector<16x32xf32> to vector<16x32xbf16>
    %cst_111 = arith.constant dense<0.000000e+00> : vector<16x32xf32>
    %281 = tpu.matmul %279, %280, %cst_111 {dimension_numbers = #tpu.dot_dimension_numbers<[1], [0], [0], [1], [0, 0, 1, 1], [], []>} : vector<16x16xbf16>, vector<16x32xbf16>, vector<16x32xf32> -> vector<16x32xf32>
    %282 = arith.truncf %281 : vector<16x32xf32> to vector<16x32xbf16>
    %c0_112 = arith.constant 0 : index
    %c64_113 = arith.constant 64 : index
    %283 = vector.load %arg18[%c0_112, %c64_113] : memref<16x128xbf16, #tpu.memory_space<vmem>>, vector<16x32xbf16>
    tpu.vector_store %arg18[%c0_112, %c64_113], %282 {strides = array<i32>} : memref<16x128xbf16, #tpu.memory_space<vmem>>, vector<16x32xbf16>,
    %284 = vector.extract_strided_slice %208 {offsets = [0, 96], sizes = [16, 32], strides = [1, 1]} : vector<16x384xf32> to vector<16x32xf32>
    %285 = vector.extract_strided_slice %208 {offsets = [0, 224], sizes = [16, 32], strides = [1, 1]} : vector<16x384xf32> to vector<16x32xf32>
    %286 = vector.extract_strided_slice %208 {offsets = [0, 352], sizes = [16, 32], strides = [1, 1]} : vector<16x384xf32> to vector<16x32xf32>
    %287 = arith.truncf %284 : vector<16x32xf32> to vector<16x32xbf16>
    %288 = arith.truncf %285 : vector<16x32xf32> to vector<16x32xbf16>
    %cst_114 = arith.constant dense<0.000000e+00> : vector<16x16xf32>
    %289 = tpu.matmul %287, %288, %cst_114 {dimension_numbers = #tpu.dot_dimension_numbers<[1], [1], [0], [0], [0, 0, 1, 0], [], []>} : vector<16x32xbf16>, vector<16x32xbf16>, vector<16x16xf32> -> vector<16x16xf32>
    %cst_115 = arith.constant 0.176776692 : f32
    %290 = vector.broadcast %cst_115 : f32 to vector<16x16xf32>
    %291 = arith.mulf %289, %290 : vector<16x16xf32>
    %292 = arith.addf %291, %2 : vector<16x16xf32>
    %cst_116 = arith.constant dense<0xFF800000> : vector<16xf32>
    %293 = vector.multi_reduction <maximumf>, %292, %cst_116 [1] : vector<16x16xf32> to vector<16xf32>
    %294 = vector.shape_cast %293 : vector<16xf32> to vector<16x1xf32>
    %295 = vector.broadcast %294 : vector<16x1xf32> to vector<16x16xf32>
    %296 = arith.subf %292, %295 : vector<16x16xf32>
    %297 = math.exp %296 : vector<16x16xf32>
    %cst_117 = arith.constant dense<0.000000e+00> : vector<16xf32>
    %298 = vector.multi_reduction <add>, %297, %cst_117 [1] : vector<16x16xf32> to vector<16xf32>
    %299 = vector.shape_cast %298 : vector<16xf32> to vector<16x1xf32>
    %cst_118 = arith.constant 1.000000e+00 : f32
    %300 = vector.broadcast %cst_118 : f32 to vector<16x1xf32>
    %301 = arith.divf %300, %299 : vector<16x1xf32>
    %302 = vector.broadcast %301 : vector<16x1xf32> to vector<16x16xf32>
    %303 = arith.mulf %297, %302 : vector<16x16xf32>
    %304 = arith.truncf %303 : vector<16x16xf32> to vector<16x16xbf16>
    %305 = arith.truncf %286 : vector<16x32xf32> to vector<16x32xbf16>
    %cst_119 = arith.constant dense<0.000000e+00> : vector<16x32xf32>
    %306 = tpu.matmul %304, %305, %cst_119 {dimension_numbers = #tpu.dot_dimension_numbers<[1], [0], [0], [1], [0, 0, 1, 1], [], []>} : vector<16x16xbf16>, vector<16x32xbf16>, vector<16x32xf32> -> vector<16x32xf32>
    %307 = arith.truncf %306 : vector<16x32xf32> to vector<16x32xbf16>
    %c0_120 = arith.constant 0 : index
    %c96_121 = arith.constant 96 : index
    %308 = vector.load %arg18[%c0_120, %c96_121] : memref<16x128xbf16, #tpu.memory_space<vmem>>, vector<16x32xbf16>
    tpu.vector_store %arg18[%c0_120, %c96_121], %307 {strides = array<i32>} : memref<16x128xbf16, #tpu.memory_space<vmem>>, vector<16x32xbf16>,
    %c0_122 = arith.constant 0 : index
    %c0_123 = arith.constant 0 : index
    %309 = vector.load %arg18[%c0_122, %c0_123] : memref<16x128xbf16, #tpu.memory_space<vmem>>, vector<16x128xbf16>
    %c0_124 = arith.constant 0 : index
    %c0_125 = arith.constant 0 : index
    %310 = vector.load %arg5[%c0_124, %c0_125] : memref<128x128xbf16, #tpu.memory_space<vmem>>, vector<128x128xbf16>
    %cst_126 = arith.constant dense<0.000000e+00> : vector<16x128xf32>
    %311 = tpu.matmul %309, %310, %cst_126 {dimension_numbers = #tpu.dot_dimension_numbers<[1], [0], [0], [1], [0, 0, 1, 1], [], []>} : vector<16x128xbf16>, vector<128x128xbf16>, vector<16x128xf32> -> vector<16x128xf32>
    %c0_127 = arith.constant 0 : index
    %c0_128 = arith.constant 0 : index
    %312 = vector.load %arg6[%c0_127, %c0_128] : memref<1x128xf32, #tpu.memory_space<vmem>>, vector<1x128xf32>
    %313 = vector.broadcast %312 : vector<1x128xf32> to vector<16x128xf32>
    %314 = arith.addf %311, %313 : vector<16x128xf32>
    %315 = arith.addf %178, %314 : vector<16x128xf32>
    %c0_129 = arith.constant 0 : index
    %c0_130 = arith.constant 0 : index
    %316 = vector.load %arg9[%c0_129, %c0_130] : memref<1x128xf32, #tpu.memory_space<vmem>>, vector<1x128xf32>
    %c0_131 = arith.constant 0 : index
    %c0_132 = arith.constant 0 : index
    %317 = vector.load %arg10[%c0_131, %c0_132] : memref<1x128xf32, #tpu.memory_space<vmem>>, vector<1x128xf32>
    %cst_133 = arith.constant dense<0.000000e+00> : vector<16xf32>
    %318 = vector.multi_reduction <add>, %315, %cst_133 [1] : vector<16x128xf32> to vector<16xf32>
    %319 = vector.shape_cast %318 : vector<16xf32> to vector<16x1xf32>
    %cst_134 = arith.constant 1.280000e+02 : f32
    %320 = vector.broadcast %cst_134 : f32 to vector<16x1xf32>
    %321 = arith.divf %319, %320 : vector<16x1xf32>
    %322 = vector.broadcast %321 : vector<16x1xf32> to vector<16x128xf32>
    %323 = arith.subf %315, %322 : vector<16x128xf32>
    %324 = arith.mulf %323, %323 : vector<16x128xf32>
    %cst_135 = arith.constant dense<0.000000e+00> : vector<16xf32>
    %325 = vector.multi_reduction <add>, %324, %cst_135 [1] : vector<16x128xf32> to vector<16xf32>
    %326 = vector.shape_cast %325 : vector<16xf32> to vector<16x1xf32>
    %cst_136 = arith.constant 0.00787401571 : f32
    %327 = vector.broadcast %cst_136 : f32 to vector<16x1xf32>
    %328 = arith.mulf %326, %327 : vector<16x1xf32>
    %329 = math.sqrt %328 : vector<16x1xf32>
    %cst_137 = arith.constant 9.99999997E-7 : f32
    %330 = vector.broadcast %cst_137 : f32 to vector<16x1xf32>
    %331 = arith.addf %329, %330 : vector<16x1xf32>
    %cst_138 = arith.constant 1.000000e+00 : f32
    %332 = vector.broadcast %cst_138 : f32 to vector<16x1xf32>
    %333 = arith.divf %332, %331 : vector<16x1xf32>
    %334 = vector.broadcast %333 : vector<16x1xf32> to vector<16x128xf32>
    %335 = arith.mulf %323, %334 : vector<16x128xf32>
    %336 = vector.broadcast %316 : vector<1x128xf32> to vector<16x128xf32>
    %337 = arith.mulf %336, %335 : vector<16x128xf32>
    %338 = vector.broadcast %317 : vector<1x128xf32> to vector<16x128xf32>
    %339 = arith.addf %337, %338 : vector<16x128xf32>
    %340 = arith.truncf %339 : vector<16x128xf32> to vector<16x128xbf16>
    %c0_139 = arith.constant 0 : index
    %c0_140 = arith.constant 0 : index
    %341 = vector.load %arg11[%c0_139, %c0_140] : memref<128x256xbf16, #tpu.memory_space<vmem>>, vector<128x256xbf16>
    %cst_141 = arith.constant dense<0.000000e+00> : vector<16x256xf32>
    %342 = tpu.matmul %340, %341, %cst_141 {dimension_numbers = #tpu.dot_dimension_numbers<[1], [0], [0], [1], [0, 0, 1, 1], [], []>} : vector<16x128xbf16>, vector<128x256xbf16>, vector<16x256xf32> -> vector<16x256xf32>
    %c0_142 = arith.constant 0 : index
    %c0_143 = arith.constant 0 : index
    %343 = vector.load %arg12[%c0_142, %c0_143] : memref<1x256xf32, #tpu.memory_space<vmem>>, vector<1x256xf32>
    %344 = vector.broadcast %343 : vector<1x256xf32> to vector<16x256xf32>
    %345 = arith.addf %342, %344 : vector<16x256xf32>
    %cst_144 = arith.constant 0.000000e+00 : f32
    %346 = vector.broadcast %cst_144 : f32 to vector<16x256xf32>
    %347 = arith.maximumf %345, %346 : vector<16x256xf32>
    %348 = arith.truncf %347 : vector<16x256xf32> to vector<16x256xbf16>
    %c0_145 = arith.constant 0 : index
    %c0_146 = arith.constant 0 : index
    %349 = vector.load %arg13[%c0_145, %c0_146] : memref<256x128xbf16, #tpu.memory_space<vmem>>, vector<256x128xbf16>
    %cst_147 = arith.constant dense<0.000000e+00> : vector<16x128xf32>
    %350 = tpu.matmul %348, %349, %cst_147 {dimension_numbers = #tpu.dot_dimension_numbers<[1], [0], [0], [1], [0, 0, 1, 1], [], []>} : vector<16x256xbf16>, vector<256x128xbf16>, vector<16x128xf32> -> vector<16x128xf32>
    %c0_148 = arith.constant 0 : index
    %c0_149 = arith.constant 0 : index
    %351 = vector.load %arg14[%c0_148, %c0_149] : memref<1x128xf32, #tpu.memory_space<vmem>>, vector<1x128xf32>
    %352 = vector.broadcast %351 : vector<1x128xf32> to vector<16x128xf32>
    %353 = arith.addf %350, %352 : vector<16x128xf32>
    %354 = arith.addf %315, %353 : vector<16x128xf32>
    %c0_150 = arith.constant 0 : index
    %c0_151 = arith.constant 0 : index
    %355 = vector.load %arg15[%c0_150, %c0_151] : memref<1x128xf32, #tpu.memory_space<vmem>>, vector<1x128xf32>
    %c0_152 = arith.constant 0 : index
    %c0_153 = arith.constant 0 : index
    %356 = vector.load %arg16[%c0_152, %c0_153] : memref<1x128xf32, #tpu.memory_space<vmem>>, vector<1x128xf32>
    %cst_154 = arith.constant dense<0.000000e+00> : vector<16xf32>
    %357 = vector.multi_reduction <add>, %354, %cst_154 [1] : vector<16x128xf32> to vector<16xf32>
    %358 = vector.shape_cast %357 : vector<16xf32> to vector<16x1xf32>
    %cst_155 = arith.constant 1.280000e+02 : f32
    %359 = vector.broadcast %cst_155 : f32 to vector<16x1xf32>
    %360 = arith.divf %358, %359 : vector<16x1xf32>
    %361 = vector.broadcast %360 : vector<16x1xf32> to vector<16x128xf32>
    %362 = arith.subf %354, %361 : vector<16x128xf32>
    %363 = arith.mulf %362, %362 : vector<16x128xf32>
    %cst_156 = arith.constant dense<0.000000e+00> : vector<16xf32>
    %364 = vector.multi_reduction <add>, %363, %cst_156 [1] : vector<16x128xf32> to vector<16xf32>
    %365 = vector.shape_cast %364 : vector<16xf32> to vector<16x1xf32>
    %cst_157 = arith.constant 0.00787401571 : f32
    %366 = vector.broadcast %cst_157 : f32 to vector<16x1xf32>
    %367 = arith.mulf %365, %366 : vector<16x1xf32>
    %368 = math.sqrt %367 : vector<16x1xf32>
    %cst_158 = arith.constant 9.99999997E-7 : f32
    %369 = vector.broadcast %cst_158 : f32 to vector<16x1xf32>
    %370 = arith.addf %368, %369 : vector<16x1xf32>
    %cst_159 = arith.constant 1.000000e+00 : f32
    %371 = vector.broadcast %cst_159 : f32 to vector<16x1xf32>
    %372 = arith.divf %371, %370 : vector<16x1xf32>
    %373 = vector.broadcast %372 : vector<16x1xf32> to vector<16x128xf32>
    %374 = arith.mulf %362, %373 : vector<16x128xf32>
    %375 = vector.broadcast %355 : vector<1x128xf32> to vector<16x128xf32>
    %376 = arith.mulf %375, %374 : vector<16x128xf32>
    %377 = vector.broadcast %356 : vector<1x128xf32> to vector<16x128xf32>
    %378 = arith.addf %376, %377 : vector<16x128xf32>
    %c0_160 = arith.constant 0 : index
    %c0_161 = arith.constant 0 : index
    %379 = vector.load %arg17[%c0_160, %c0_161] : memref<16x128xf32, #tpu.memory_space<vmem>>, vector<16x128xf32>
    tpu.vector_store %arg17[%c0_160, %c0_161], %378 {strides = array<i32>} : memref<16x128xf32, #tpu.memory_space<vmem>>, vector<16x128xf32>,
    return
  }
  func.func @transform_0(%arg0: i32) -> (i32, i32) {
    %c0_i32 = arith.constant 0 : i32
    %c0_i32_0 = arith.constant 0 : i32
    return %arg0, %c0_i32 : i32, i32
  }
  func.func @transform_1(%arg0: i32) -> (i32, i32, i32) {
    %c0_i32 = arith.constant 0 : i32
    %c0_i32_0 = arith.constant 0 : i32
    %c0_i32_1 = arith.constant 0 : i32
    return %arg0, %c0_i32, %c0_i32_0 : i32, i32, i32
  }
  func.func @transform_2(%arg0: i32) -> (i32, i32) {
    %c0_i32 = arith.constant 0 : i32
    %c0_i32_0 = arith.constant 0 : i32
    %c0_i32_1 = arith.constant 0 : i32
    return %c0_i32, %c0_i32_0 : i32, i32
  }
  func.func @transform_3(%arg0: i32) -> (i32, i32) {
    %c0_i32 = arith.constant 0 : i32
    %c0_i32_0 = arith.constant 0 : i32
    %c0_i32_1 = arith.constant 0 : i32
    return %c0_i32, %c0_i32_0 : i32, i32
  }
  func.func @transform_4(%arg0: i32) -> (i32, i32) {
    %c0_i32 = arith.constant 0 : i32
    %c0_i32_0 = arith.constant 0 : i32
    %c0_i32_1 = arith.constant 0 : i32
    return %c0_i32, %c0_i32_0 : i32, i32
  }
  func.func @transform_5(%arg0: i32) -> (i32, i32) {
    %c0_i32 = arith.constant 0 : i32
    %c0_i32_0 = arith.constant 0 : i32
    %c0_i32_1 = arith.constant 0 : i32
    return %c0_i32, %c0_i32_0 : i32, i32
  }
  func.func @transform_6(%arg0: i32) -> (i32, i32) {
    %c0_i32 = arith.constant 0 : i32
    %c0_i32_0 = arith.constant 0 : i32
    %c0_i32_1 = arith.constant 0 : i32
    return %c0_i32, %c0_i32_0 : i32, i32
  }
  func.func @transform_7(%arg0: i32) -> (i32, i32) {
    %c0_i32 = arith.constant 0 : i32
    %c0_i32_0 = arith.constant 0 : i32
    %c0_i32_1 = arith.constant 0 : i32
    return %c0_i32, %c0_i32_0 : i32, i32
  }
  func.func @transform_8(%arg0: i32) -> (i32, i32) {
    %c0_i32 = arith.constant 0 : i32
    %c0_i32_0 = arith.constant 0 : i32
    %c0_i32_1 = arith.constant 0 : i32
    return %c0_i32, %c0_i32_0 : i32, i32
  }
  func.func @transform_9(%arg0: i32) -> (i32, i32) {
    %c0_i32 = arith.constant 0 : i32
    %c0_i32_0 = arith.constant 0 : i32
    %c0_i32_1 = arith.constant 0 : i32
    return %c0_i32, %c0_i32_0 : i32, i32
  }
  func.func @transform_10(%arg0: i32) -> (i32, i32) {
    %c0_i32 = arith.constant 0 : i32
    %c0_i32_0 = arith.constant 0 : i32
    %c0_i32_1 = arith.constant 0 : i32
    return %c0_i32, %c0_i32_0 : i32, i32
  }
  func.func @transform_11(%arg0: i32) -> (i32, i32) {
    %c0_i32 = arith.constant 0 : i32
    %c0_i32_0 = arith.constant 0 : i32
    %c0_i32_1 = arith.constant 0 : i32
    return %c0_i32, %c0_i32_0 : i32, i32
  }
  func.func @transform_12(%arg0: i32) -> (i32, i32) {
    %c0_i32 = arith.constant 0 : i32
    %c0_i32_0 = arith.constant 0 : i32
    %c0_i32_1 = arith.constant 0 : i32
    return %c0_i32, %c0_i32_0 : i32, i32
  }
  func.func @transform_13(%arg0: i32) -> (i32, i32) {
    %c0_i32 = arith.constant 0 : i32
    %c0_i32_0 = arith.constant 0 : i32
    %c0_i32_1 = arith.constant 0 : i32
    return %c0_i32, %c0_i32_0 : i32, i32
  }
  func.func @transform_14(%arg0: i32) -> (i32, i32) {
    %c0_i32 = arith.constant 0 : i32
    %c0_i32_0 = arith.constant 0 : i32
    %c0_i32_1 = arith.constant 0 : i32
    return %c0_i32, %c0_i32_0 : i32, i32
  }
  func.func @transform_15(%arg0: i32) -> (i32, i32) {
    %c0_i32 = arith.constant 0 : i32
    %c0_i32_0 = arith.constant 0 : i32
    %c0_i32_1 = arith.constant 0 : i32
    return %c0_i32, %c0_i32_0 : i32, i32
  }
  func.func @transform_16(%arg0: i32) -> (i32, i32) {
    %c0_i32 = arith.constant 0 : i32
    %c0_i32_0 = arith.constant 0 : i32
    return %arg0, %c0_i32 : i32, i32
  }
}

</mosaic_0001>

<llo_original>
// kernel: tpu_custom_call.1
$region0: #{tpu_custom_call.1}
  #allocation0 [shape = 'u32[]', space=smem, size = 0x4, offset = 0x4, fixed_abs, tag = 'smem constant byte address 0x4 - core index']
  #allocation1 [shape = 'u32[144,128]{1,0:T(1,128)}', space=vmem, size = 0x12000, scoped, tag = 'internal scratch']
  #allocation2 [shape = 'bf16[16,128]{1,0:T(16,128)(2,1)}', space=vmem, size = 0x1000, scoped, tag = 'scratch operand']
  %s0 = inlined_call_operand.hbm [shape: f32[16,128], index: 0, kind: input, shape index: {}]
  %s1 = inlined_call_operand.hbm [shape: f32[1,16,16], index: 1, kind: input, shape index: {}]
  %s2 = inlined_call_operand.hbm [shape: bf16[128,384], index: 2, kind: input, shape index: {}]
  %s3 = inlined_call_operand.vmem [shape: f32[1,384], index: 3, kind: input, shape index: {}]
  %s4 = inlined_call_operand.hbm [shape: bf16[128,128], index: 4, kind: input, shape index: {}]
  %s5 = inlined_call_operand.vmem [shape: f32[1,128], index: 5, kind: input, shape index: {}]
  %s6 = inlined_call_operand.vmem [shape: f32[1,128], index: 6, kind: input, shape index: {}]
  %s7 = inlined_call_operand.vmem [shape: f32[1,128], index: 7, kind: input, shape index: {}]
  %s8 = inlined_call_operand.vmem [shape: f32[1,128], index: 8, kind: input, shape index: {}]
  %s9 = inlined_call_operand.vmem [shape: f32[1,128], index: 9, kind: input, shape index: {}]
  %s10 = inlined_call_operand.hbm [shape: bf16[128,256], index: 10, kind: input, shape index: {}]
  %s11 = inlined_call_operand.vmem [shape: f32[1,256], index: 11, kind: input, shape index: {}]
  %s12 = inlined_call_operand.hbm [shape: bf16[256,128], index: 12, kind: input, shape index: {}]
  %s13 = inlined_call_operand.vmem [shape: f32[1,128], index: 13, kind: input, shape index: {}]
  %s14 = inlined_call_operand.vmem [shape: f32[1,128], index: 14, kind: input, shape index: {}]
  %s15 = inlined_call_operand.vmem [shape: f32[1,128], index: 15, kind: input, shape index: {}]
  %s16 = inlined_call_operand.hbm [shape: f32[16,128], index: 16, kind: output, shape index: {}]
  %s17 = sld [smem:[#allocation0]]
  $region98: #{tpu_custom_call.1} parent=0
    _
  %s19 = ssub.s32 1, %s17
  %s20 = scalar_select 0, %s19, %s17
  $region1: #{tpu_custom_call.1} parent=0
    #allocation3 [shape = 'u8[8192]{0}', space=vmem, size = 0x2000, scoped, tag = 'input window, operand 0, single buffered']
    #allocation4 [shape = 's32[1]{0}', space=sflag, size = 0x4, scoped, tag = 'scoped memory for tpu_custom_call.1']
    #allocation5 [shape = 's32[1]{0}', space=sflag, size = 0x4, scoped, tag = 'scoped memory for tpu_custom_call.1']
    #allocation6 [shape = 'u8[8192]{0}', space=vmem, size = 0x2000, scoped, tag = 'input window, operand 1, single buffered']
    #allocation7 [shape = 's32[1]{0}', space=sflag, size = 0x4, scoped, tag = 'scoped memory for tpu_custom_call.1']
    #allocation8 [shape = 'u8[98304]{0}', space=vmem, size = 0x18000, scoped, tag = 'input window, operand 2, single buffered']
    #allocation9 [shape = 'u8[32768]{0}', space=vmem, size = 0x8000, scoped, tag = 'input window, operand 4, single buffered']
    #allocation10 [shape = 's32[1]{0}', space=sflag, size = 0x4, scoped, tag = 'scoped memory for tpu_custom_call.1']
    #allocation11 [shape = 'u8[65536]{0}', space=vmem, size = 0x10000, scoped, tag = 'input window, operand 10, single buffered']
    #allocation12 [shape = 'u8[65536]{0}', space=vmem, size = 0x10000, scoped, tag = 'input window, operand 12, single buffered']
    #allocation13 [shape = 's32[1]{0}', space=sflag, size = 0x4, scoped, tag = 'scoped memory for tpu_custom_call.1']
    #allocation14 [shape = 'u8[8192]{0}', space=vmem, size = 0x2000, scoped, tag = 'output window, operand 0, single buffered']
    %21 = vsyncpa [#allocation4], 0
    %22 = vsyncpa [#allocation7], 0
    %23 = vsyncpa [#allocation10], 0
    %24 = vsyncpa [#allocation13], 0
    %25 = vsyncpa [#allocation5], 0
    // Predicated region
    $region2: #{tpu_custom_call.1} parent=1 // pred_check
      _
    $region3: #{tpu_custom_call.1} parent=1 // pred_check_branch
      %27 = sbr.rel (0) target = $region5
    $region4: #{tpu_custom_call.1} parent=1 // pred_region
      %s29 = ssub.s32 256, 256
      %30 = vsyncadd [#allocation4], %s29
      %s31 = sshll.u32 [#allocation3], 4
      %s32 = int_to_ptr.vmem [resolvable:$true] %s31
      %37 = dma.hbm_to_vmem [thread:$0]  %s0, 256, %s32, [#allocation4], 128, 128, 8
    $region5: #{tpu_custom_call.1} parent=1 // pred_fallthru
      _
    // Predicated region
    $region6: #{tpu_custom_call.1} parent=1 // pred_check
      _
    $region7: #{tpu_custom_call.1} parent=1 // pred_check_branch
      %39 = sbr.rel (0) target = $region9
    $region8: #{tpu_custom_call.1} parent=1 // pred_region
      %s41 = ssub.s32 256, 256
      %42 = vsyncadd [#allocation7], %s41
      %s43 = sshll.u32 [#allocation6], 4
      %s44 = int_to_ptr.vmem [resolvable:$true] %s43
      %49 = dma.hbm_to_vmem [thread:$0]  %s1, 256, %s44, [#allocation7], 128, 128, 8
    $region9: #{tpu_custom_call.1} parent=1 // pred_fallthru
      _
    // Predicated region
    $region10: #{tpu_custom_call.1} parent=1 // pred_check
      _
    $region11: #{tpu_custom_call.1} parent=1 // pred_check_branch
      %51 = sbr.rel (0) target = $region13
    $region12: #{tpu_custom_call.1} parent=1 // pred_region
      %s53 = ssub.s32 3072, 3072
      %54 = vsyncadd [#allocation7], %s53
      %s55 = sshll.u32 [#allocation8], 4
      %s56 = int_to_ptr.vmem [resolvable:$true] %s55
      %61 = dma.hbm_to_vmem [thread:$0]  %s2, 3072, %s56, [#allocation7], 192, 192, 12
    $region13: #{tpu_custom_call.1} parent=1 // pred_fallthru
      _
    // Predicated region
    $region14: #{tpu_custom_call.1} parent=1 // pred_check
      _
    $region15: #{tpu_custom_call.1} parent=1 // pred_check_branch
      %63 = sbr.rel (0) target = $region17
    $region16: #{tpu_custom_call.1} parent=1 // pred_region
      _
    $region17: #{tpu_custom_call.1} parent=1 // pred_fallthru
      _
    // Predicated region
    $region18: #{tpu_custom_call.1} parent=1 // pred_check
      _
    $region19: #{tpu_custom_call.1} parent=1 // pred_check_branch
      %65 = sbr.rel (0) target = $region21
    $region20: #{tpu_custom_call.1} parent=1 // pred_region
      %s67 = ssub.s32 1024, 1024
      %68 = vsyncadd [#allocation10], %s67
      %s69 = sshll.u32 [#allocation9], 4
      %s70 = int_to_ptr.vmem [resolvable:$true] %s69
      %75 = dma.hbm_to_vmem [thread:$0]  %s4, 1024, %s70, [#allocation10], 64, 64, 4
    $region21: #{tpu_custom_call.1} parent=1 // pred_fallthru
      _
    // Predicated region
    $region22: #{tpu_custom_call.1} parent=1 // pred_check
      _
    $region23: #{tpu_custom_call.1} parent=1 // pred_check_branch
      %77 = sbr.rel (0) target = $region25
    $region24: #{tpu_custom_call.1} parent=1 // pred_region
      _
    $region25: #{tpu_custom_call.1} parent=1 // pred_fallthru
      _
    // Predicated region
    $region26: #{tpu_custom_call.1} parent=1 // pred_check
      _
    $region27: #{tpu_custom_call.1} parent=1 // pred_check_branch
      %79 = sbr.rel (0) target = $region29
    $region28: #{tpu_custom_call.1} parent=1 // pred_region
      _
    $region29: #{tpu_custom_call.1} parent=1 // pred_fallthru
      _
    // Predicated region
    $region30: #{tpu_custom_call.1} parent=1 // pred_check
      _
    $region31: #{tpu_custom_call.1} parent=1 // pred_check_branch
      %81 = sbr.rel (0) target = $region33
    $region32: #{tpu_custom_call.1} parent=1 // pred_region
      _
    $region33: #{tpu_custom_call.1} parent=1 // pred_fallthru
      _
    // Predicated region
    $region34: #{tpu_custom_call.1} parent=1 // pred_check
      _
    $region35: #{tpu_custom_call.1} parent=1 // pred_check_branch
      %83 = sbr.rel (0) target = $region37
    $region36: #{tpu_custom_call.1} parent=1 // pred_region
      _
    $region37: #{tpu_custom_call.1} parent=1 // pred_fallthru
      _
    // Predicated region
    $region38: #{tpu_custom_call.1} parent=1 // pred_check
      _
    $region39: #{tpu_custom_call.1} parent=1 // pred_check_branch
      %85 = sbr.rel (0) target = $region41
    $region40: #{tpu_custom_call.1} parent=1 // pred_region
      _
    $region41: #{tpu_custom_call.1} parent=1 // pred_fallthru
      _
    // Predicated region
    $region42: #{tpu_custom_call.1} parent=1 // pred_check
      _
    $region43: #{tpu_custom_call.1} parent=1 // pred_check_branch
      %87 = sbr.rel (0) target = $region45
    $region44: #{tpu_custom_call.1} parent=1 // pred_region
      %s89 = ssub.s32 2048, 2048
      %90 = vsyncadd [#allocation10], %s89
      %s91 = sshll.u32 [#allocation11], 4
      %s92 = int_to_ptr.vmem [resolvable:$true] %s91
      %97 = dma.hbm_to_vmem [thread:$0]  %s10, 2048, %s92, [#allocation10], 128, 128, 8
    $region45: #{tpu_custom_call.1} parent=1 // pred_fallthru
      _
    // Predicated region
    $region46: #{tpu_custom_call.1} parent=1 // pred_check
      _
    $region47: #{tpu_custom_call.1} parent=1 // pred_check_branch
      %99 = sbr.rel (0) target = $region49
    $region48: #{tpu_custom_call.1} parent=1 // pred_region
      _
    $region49: #{tpu_custom_call.1} parent=1 // pred_fallthru
      _
    // Predicated region
    $region50: #{tpu_custom_call.1} parent=1 // pred_check
      _
    $region51: #{tpu_custom_call.1} parent=1 // pred_check_branch
      %101 = sbr.rel (0) target = $region53
    $region52: #{tpu_custom_call.1} parent=1 // pred_region
      %s103 = ssub.s32 2048, 2048
      %104 = vsyncadd [#allocation13], %s103
      %s105 = sshll.u32 [#allocation12], 4
      %s106 = int_to_ptr.vmem [resolvable:$true] %s105
      %111 = dma.hbm_to_vmem [thread:$0]  %s12, 2048, %s106, [#allocation13], 64, 64, 4
    $region53: #{tpu_custom_call.1} parent=1 // pred_fallthru
      _
    // Predicated region
    $region54: #{tpu_custom_call.1} parent=1 // pred_check
      _
    $region55: #{tpu_custom_call.1} parent=1 // pred_check_branch
      %113 = sbr.rel (0) target = $region57
    $region56: #{tpu_custom_call.1} parent=1 // pred_region
      _
    $region57: #{tpu_custom_call.1} parent=1 // pred_fallthru
      _
    // Predicated region
    $region58: #{tpu_custom_call.1} parent=1 // pred_check
      _
    $region59: #{tpu_custom_call.1} parent=1 // pred_check_branch
      %115 = sbr.rel (0) target = $region61
    $region60: #{tpu_custom_call.1} parent=1 // pred_region
      _
    $region61: #{tpu_custom_call.1} parent=1 // pred_fallthru
      _
    // Predicated region
    $region62: #{tpu_custom_call.1} parent=1 // pred_check
      _
    $region63: #{tpu_custom_call.1} parent=1 // pred_check_branch
      %117 = sbr.rel (0) target = $region65
    $region64: #{tpu_custom_call.1} parent=1 // pred_region
      _
    $region65: #{tpu_custom_call.1} parent=1 // pred_fallthru
      _
    // Predicated region
    $region66: #{tpu_custom_call.1} parent=1 // pred_check
      _
    $region67: #{tpu_custom_call.1} parent=1 // pred_check_branch
      %119 = sbr.rel (0) target = $region69
    $region68: #{tpu_custom_call.1} parent=1 // pred_region
      %120 = dma.done [#allocation4], 256
    $region69: #{tpu_custom_call.1} parent=1 // pred_fallthru
      _
    // Predicated region
    $region70: #{tpu_custom_call.1} parent=1 // pred_check
      _
    $region71: #{tpu_custom_call.1} parent=1 // pred_check_branch
      %122 = sbr.rel (0) target = $region73
    $region72: #{tpu_custom_call.1} parent=1 // pred_region
      %123 = dma.done [#allocation7], 256
    $region73: #{tpu_custom_call.1} parent=1 // pred_fallthru
      _
    // Predicated region
    $region74: #{tpu_custom_call.1} parent=1 // pred_check
      _
    $region75: #{tpu_custom_call.1} parent=1 // pred_check_branch
      %125 = sbr.rel (0) target = $region77
    $region76: #{tpu_custom_call.1} parent=1 // pred_region
      %126 = dma.done [#allocation7], 3072
    $region77: #{tpu_custom_call.1} parent=1 // pred_fallthru
      _
    // Predicated region
    $region78: #{tpu_custom_call.1} parent=1 // pred_check
      _
    $region79: #{tpu_custom_call.1} parent=1 // pred_check_branch
      %128 = sbr.rel (0) target = $region81
    $region80: #{tpu_custom_call.1} parent=1 // pred_region
      %129 = dma.done [#allocation10], 1024
    $region81: #{tpu_custom_call.1} parent=1 // pred_fallthru
      _
    // Predicated region
    $region82: #{tpu_custom_call.1} parent=1 // pred_check
      _
    $region83: #{tpu_custom_call.1} parent=1 // pred_check_branch
      %131 = sbr.rel (0) target = $region85
    $region84: #{tpu_custom_call.1} parent=1 // pred_region
      %132 = dma.done [#allocation10], 2048
    $region85: #{tpu_custom_call.1} parent=1 // pred_fallthru
      _
    // Predicated region
    $region86: #{tpu_custom_call.1} parent=1 // pred_check
      _
    $region87: #{tpu_custom_call.1} parent=1 // pred_check_branch
      %134 = sbr.rel (0) target = $region89
    $region88: #{tpu_custom_call.1} parent=1 // pred_region
      %135 = dma.done [#allocation13], 2048
    $region89: #{tpu_custom_call.1} parent=1 // pred_fallthru
      _
    %v137 = vld [vmem:[#allocation3] sm:$0xff]
    %v138 = vld [vmem:[#allocation3 + $0x8] sm:$0xff]
    %v139 = vld [vmem:[#allocation6] sm:$0xff]
    %v140 = vld [vmem:[#allocation6 + $0x8] sm:$0xff]
    %v141 = vld [vmem:[%s6] sm:$0x1]
    %v142 = vld [vmem:[%s7] sm:$0x1]
    %143 = vadd.xlane.f32.xlu0 %v137
    %v144 = vpop.xlane.xlu0 %143
    %145 = vadd.xlane.f32.xlu0 %v138
    %v146 = vpop.xlane.xlu0 %145
    %v147 = vrcp.pop 128.0
    %v148 = vmul.f32 %v144, %v147
    %v149 = vmul.f32 %v146, %v147
    %v150 = vsub.f32 %v137, %v148
    %v151 = vsub.f32 %v138, %v149
    %v152 = vmul.f32 %v150, %v150
    %v153 = vmul.f32 %v151, %v151
    %154 = vadd.xlane.f32.xlu0 %v152
    %v155 = vpop.xlane.xlu0 %154
    %156 = vadd.xlane.f32.xlu0 %v153
    %v157 = vpop.xlane.xlu0 %156
    %v158 = vmul.f32 %v155, 0.007874016
    %v159 = vmul.f32 %v157, 0.007874016
    %v160 = vrsqrt.pop %v158
    %v161 = vmul.f32 %v158, %v160
    %vm162 = vcmp.eq.f32.partialorder %v158, inf
    %v163 = vsel %vm162, %v158, %v161
    %vm164 = vcmp.eq.f32.partialorder %v158, 0.0
    %v165 = vand.u32 %v158, 2147483648
    %v166 = vsel %vm164, %v165, %v163
    %v167 = vrsqrt.pop %v159
    %v168 = vmul.f32 %v159, %v167
    %vm169 = vcmp.eq.f32.partialorder %v159, inf
    %v170 = vsel %vm169, %v159, %v168
    %vm171 = vcmp.eq.f32.partialorder %v159, 0.0
    %v172 = vand.u32 %v159, 2147483648
    %v173 = vsel %vm171, %v172, %v170
    %v174 = vadd.f32 %v166, 1e-06
    %v175 = vadd.f32 %v173, 1e-06
    %v176 = vrcp.pop %v174
    %v177 = vmul.f32 1.0, %v176
    %v178 = vrcp.pop %v175
    %v179 = vmul.f32 1.0, %v178
    %v180 = vmul.f32 %v150, %v177
    %v181 = vmul.f32 %v151, %v179
    %v183 = vlaneseq
    %v184 = vshrl.u32 %v183, 7
    %v185 = vsub.s32 0, %v184
    %v186 = vrot.slane %v141, %v185
    %v188 = vmul.f32 %v186, %v180
    %v189 = vmul.f32 %v186, %v181
    %v191 = vlaneseq
    %v192 = vshrl.u32 %v191, 7
    %v193 = vsub.s32 0, %v192
    %v194 = vrot.slane %v142, %v193
    %v196 = vadd.f32 %v188, %v194
    %v197 = vadd.f32 %v189, %v194
    %v198 = vpack.c.bf16 %v197, %v196
    %v199 = vld [vmem:[#allocation8] sm:$0xff]
    %v200 = vld [vmem:[#allocation8 + $0x8] sm:$0xf]
    %v201 = vld [vmem:[#allocation8 + $0xc] sm:$0xff]
    %v202 = vld [vmem:[#allocation8 + $0x14] sm:$0xf]
    %v203 = vld [vmem:[#allocation8 + $0x18] sm:$0xff]
    %v204 = vld [vmem:[#allocation8 + $0x20] sm:$0xf]
    %v205 = vld [vmem:[#allocation8 + $0x24] sm:$0xff]
    %v206 = vld [vmem:[#allocation8 + $0x2c] sm:$0xf]
    %v207 = vld [vmem:[#allocation8 + $0x30] sm:$0xff]
    %v208 = vld [vmem:[#allocation8 + $0x38] sm:$0xf]
    %v209 = vld [vmem:[#allocation8 + $0x3c] sm:$0xff]
    %v210 = vld [vmem:[#allocation8 + $0x44] sm:$0xf]
    %v211 = vld [vmem:[#allocation8 + $0x48] sm:$0xff]
    %v212 = vld [vmem:[#allocation8 + $0x50] sm:$0xf]
    %v213 = vld [vmem:[#allocation8 + $0x54] sm:$0xff]
    %v214 = vld [vmem:[#allocation8 + $0x5c] sm:$0xf]
    %v215 = vld [vmem:[#allocation8 + $0x60] sm:$0xff]
    %v216 = vld [vmem:[#allocation8 + $0x68] sm:$0xf]
    %v217 = vld [vmem:[#allocation8 + $0x6c] sm:$0xff]
    %v218 = vld [vmem:[#allocation8 + $0x74] sm:$0xf]
    %v219 = vld [vmem:[#allocation8 + $0x78] sm:$0xff]
    %v220 = vld [vmem:[#allocation8 + $0x80] sm:$0xf]
    %v221 = vld [vmem:[#allocation8 + $0x84] sm:$0xff]
    %v222 = vld [vmem:[#allocation8 + $0x8c] sm:$0xf]
    %v223 = vld [vmem:[#allocation8 + $0x90] sm:$0xff]
    %v224 = vld [vmem:[#allocation8 + $0x98] sm:$0xf]
    %v225 = vld [vmem:[#allocation8 + $0x9c] sm:$0xff]
    %v226 = vld [vmem:[#allocation8 + $0xa4] sm:$0xf]
    %v227 = vld [vmem:[#allocation8 + $0xa8] sm:$0xff]
    %v228 = vld [vmem:[#allocation8 + $0xb0] sm:$0xf]
    %v229 = vld [vmem:[#allocation8 + $0xb4] sm:$0xff]
    %v230 = vld [vmem:[#allocation8 + $0xbc] sm:$0xf]
    %v231 = vld [vmem:[%s3] sm:$0x7]
    %v233 = vlaneseq
    %v234 = vshrl.u32 %v233, 7
    %v235 = vsub.s32 0, %v234
    %v236 = vrot.slane %v231, %v235
    %v237 = vlaneseq
    %v238 = vshrl.u32 %v237, 7
    %v239 = vsub.s32 1, %v238
    %v240 = vrot.slane %v231, %v239
    %v241 = vlaneseq
    %v242 = vshrl.u32 %v241, 7
    %v243 = vsub.s32 2, %v242
    %v244 = vrot.slane %v231, %v243
    %v280 = vunpack.c.l.b16 %v199
    %v281 = vunpack.c.h.b16 %v199
    %v282 = vunpack.c.l.b16 %v200
    %v283 = vunpack.c.l.b16 %v201
    %v284 = vunpack.c.h.b16 %v201
    %v285 = vunpack.c.l.b16 %v202
    %v286 = vunpack.c.l.b16 %v203
    %v287 = vunpack.c.h.b16 %v203
    %v288 = vunpack.c.l.b16 %v204
    %v289 = vunpack.c.l.b16 %v205
    %v290 = vunpack.c.h.b16 %v205
    %v291 = vunpack.c.l.b16 %v206
    %v292 = vunpack.c.l.b16 %v207
    %v293 = vunpack.c.h.b16 %v207
    %v294 = vunpack.c.l.b16 %v208
    %v295 = vunpack.c.l.b16 %v209
    %v296 = vunpack.c.h.b16 %v209
    %v297 = vunpack.c.l.b16 %v210
    %v298 = vunpack.c.l.b16 %v211
    %v299 = vunpack.c.h.b16 %v211
    %v300 = vunpack.c.l.b16 %v212
    %v301 = vunpack.c.l.b16 %v213
    %v302 = vunpack.c.h.b16 %v213
    %v303 = vunpack.c.l.b16 %v214
    %v304 = vunpack.c.l.b16 %v215
    %v305 = vunpack.c.h.b16 %v215
    %v306 = vunpack.c.l.b16 %v216
    %v307 = vunpack.c.l.b16 %v217
    %v308 = vunpack.c.h.b16 %v217
    %v309 = vunpack.c.l.b16 %v218
    %v310 = vunpack.c.l.b16 %v219
    %v311 = vunpack.c.h.b16 %v219
    %v312 = vunpack.c.l.b16 %v220
    %v313 = vunpack.c.l.b16 %v221
    %v314 = vunpack.c.h.b16 %v221
    %v315 = vunpack.c.l.b16 %v222
    %v316 = vunpack.c.l.b16 %v223
    %v317 = vunpack.c.h.b16 %v223
    %v318 = vunpack.c.l.b16 %v224
    %v319 = vunpack.c.l.b16 %v225
    %v320 = vunpack.c.h.b16 %v225
    %v321 = vunpack.c.l.b16 %v226
    %v322 = vunpack.c.l.b16 %v227
    %v323 = vunpack.c.h.b16 %v227
    %v324 = vunpack.c.l.b16 %v228
    %v325 = vunpack.c.l.b16 %v229
    %v326 = vunpack.c.h.b16 %v229
    %v327 = vunpack.c.l.b16 %v230
    %v328 = vpack.c.b16 %v283, %v280
    %v329 = vpack.c.b16 %v284, %v281
    %v330 = vpack.c.b16 %v285, %v282
    %v331 = vpack.c.b16 %v289, %v286
    %v332 = vpack.c.b16 %v290, %v287
    %v333 = vpack.c.b16 %v291, %v288
    %v334 = vpack.c.b16 %v295, %v292
    %v335 = vpack.c.b16 %v296, %v293
    %v336 = vpack.c.b16 %v297, %v294
    %v337 = vpack.c.b16 %v301, %v298
    %v338 = vpack.c.b16 %v302, %v299
    %v339 = vpack.c.b16 %v303, %v300
    %v340 = vpack.c.b16 %v307, %v304
    %v341 = vpack.c.b16 %v308, %v305
    %v342 = vpack.c.b16 %v309, %v306
    %v343 = vpack.c.b16 %v313, %v310
    %v344 = vpack.c.b16 %v314, %v311
    %v345 = vpack.c.b16 %v315, %v312
    %v346 = vpack.c.b16 %v319, %v316
    %v347 = vpack.c.b16 %v320, %v317
    %v348 = vpack.c.b16 %v321, %v318
    %v349 = vpack.c.b16 %v325, %v322
    %v350 = vpack.c.b16 %v326, %v323
    %v351 = vpack.c.b16 %v327, %v324
    %376 = vmatprep.subr.bf16.mxu0 %v329
    %377 = vmatpush1.bf16.msra.mxu0 %v328
    %378 = vmatprep.subr.bf16.mxu0 %v332
    %379 = vmatpush1.bf16.msra.mxu0 %v331
    %380 = vmatprep.subr.bf16.mxu0 %v335
    %381 = vmatpush1.bf16.msra.mxu0 %v334
    %382 = vmatprep.subr.bf16.mxu0 %v338
    %383 = vmatpush1.bf16.msra.mxu0 %v337
    %384 = vmatprep.subr.bf16.mxu0 %v341
    %385 = vmatpush1.bf16.msra.mxu0 %v340
    %386 = vmatprep.subr.bf16.mxu0 %v344
    %387 = vmatpush1.bf16.msra.mxu0 %v343
    %388 = vmatprep.subr.bf16.mxu0 %v347
    %389 = vmatpush1.bf16.msra.mxu0 %v346
    %390 = vmatprep.subr.bf16.mxu0 %v350
    %391 = vmatpush1.bf16.msra.mxu0 %v349
    %392 = vmatprep.subr.bf16.mxu0 0
    %393 = vmatpush1.bf16.msra.mxu0 0
    %394 = vmatprep.subr.bf16.mxu0 0
    %395 = vmatpush1.bf16.msra.mxu0 0
    %396 = vmatprep.subr.bf16.mxu0 0
    %397 = vmatpush1.bf16.msra.mxu0 0
    %398 = vmatprep.subr.bf16.mxu0 0
    %399 = vmatpush1.bf16.msra.mxu0 0
    %400 = vmatprep.subr.bf16.mxu0 0
    %401 = vmatpush1.bf16.msra.mxu0 0
    %402 = vmatprep.subr.bf16.mxu0 0
    %403 = vmatpush1.bf16.msra.mxu0 0
    %404 = vmatprep.subr.bf16.mxu0 0
    %405 = vmatpush1.bf16.msra.mxu0 0
    %406 = vmatprep.subr.bf16.mxu0 0
    %407 = vmatpush1.bf16.msra.mxu0 0
    %408 = vmatprep.mubr.bf16.mxu0 0
    %409 = vmatmul.mubr.bf16.gmra.mrb[0].mxu0 %v198
    %v410 = vpop.f32.mrb[0].mxu0
    %v411 = vadd.f32 %v236, %v410
    %v412 = vpop.f32.mrb[0].mxu0
    %v413 = vadd.f32 %v240, %v412
    %v414 = vpop.f32.mrb[0].mxu0
    %v415 = vadd.f32 %v236, %v414
    %v416 = vpop.f32.mrb[0].mxu0
    %v417 = vadd.f32 %v240, %v416
    %418 = vdwg.mxu0
    %419 = vmatprep.subr.bf16.mxu0 0
    %420 = vmatpush1.bf16.msra.mxu0 %v330
    %421 = vmatprep.subr.bf16.mxu0 0
    %422 = vmatpush1.bf16.msra.mxu0 %v333
    %423 = vmatprep.subr.bf16.mxu0 0
    %424 = vmatpush1.bf16.msra.mxu0 %v336
    %425 = vmatprep.subr.bf16.mxu0 0
    %426 = vmatpush1.bf16.msra.mxu0 %v339
    %427 = vmatprep.subr.bf16.mxu0 0
    %428 = vmatpush1.bf16.msra.mxu0 %v342
    %429 = vmatprep.subr.bf16.mxu0 0
    %430 = vmatpush1.bf16.msra.mxu0 %v345
    %431 = vmatprep.subr.bf16.mxu0 0
    %432 = vmatpush1.bf16.msra.mxu0 %v348
    %433 = vmatprep.subr.bf16.mxu0 0
    %434 = vmatpush1.bf16.msra.mxu0 %v351
    %435 = vmatprep.subr.bf16.mxu0 0
    %436 = vmatpush1.bf16.msra.mxu0 0
    %437 = vmatprep.subr.bf16.mxu0 0
    %438 = vmatpush1.bf16.msra.mxu0 0
    %439 = vmatprep.subr.bf16.mxu0 0
    %440 = vmatpush1.bf16.msra.mxu0 0
    %441 = vmatprep.subr.bf16.mxu0 0
    %442 = vmatpush1.bf16.msra.mxu0 0
    %443 = vmatprep.subr.bf16.mxu0 0
    %444 = vmatpush1.bf16.msra.mxu0 0
    %445 = vmatprep.subr.bf16.mxu0 0
    %446 = vmatpush1.bf16.msra.mxu0 0
    %447 = vmatprep.subr.bf16.mxu0 0
    %448 = vmatpush1.bf16.msra.mxu0 0
    %449 = vmatprep.subr.bf16.mxu0 0
    %450 = vmatpush1.bf16.msra.mxu0 0
    %451 = vmatprep.mubr.bf16.mxu0 0
    %452 = vmatmul.mubr.bf16.gmra.mrb[0].mxu0 %v198
    %v453 = vpop.f32.mrb[0].mxu0
    %v454 = vadd.f32 %v244, %v453
    %v455 = vpop.f32.mrb[0].mxu0
    %v456 = vpop.f32.mrb[0].mxu0
    %v457 = vadd.f32 %v244, %v456
    %v458 = vpop.f32.mrb[0].mxu0
    %459 = vdwg.mxu0
    %v460 = vpack.c.bf16 %v415, %v411
    %v461 = vpack.c.bf16 %v417, %v413
    %vm462 = vcmask 261120
    %v464 = vsel %vm462, %v460, 0
    %v467 = vsel %vm462, %v461, 0
    %469 = vmatprep.subr.bf16.mxu0 0
    %470 = vmatpush1.bf16.xpose.msra.mxu0 %v467
    %471 = vmatprep.subr.bf16.mxu0 0
    %472 = vmatpush1.bf16.xpose.msra.mxu0 0
    %473 = vmatprep.subr.bf16.mxu0 0
    %474 = vmatpush1.bf16.xpose.msra.mxu0 0
    %475 = vmatprep.subr.bf16.mxu0 0
    %476 = vmatpush1.bf16.xpose.msra.mxu0 0
    %477 = vmatprep.subr.bf16.mxu0 0
    %478 = vmatpush1.bf16.xpose.msra.mxu0 0
    %479 = vmatprep.subr.bf16.mxu0 0
    %480 = vmatpush1.bf16.xpose.msra.mxu0 0
    %481 = vmatprep.subr.bf16.mxu0 0
    %482 = vmatpush1.bf16.xpose.msra.mxu0 0
    %483 = vmatprep.subr.bf16.mxu0 0
    %484 = vmatpush1.bf16.xpose.msra.mxu0 0
    %485 = vmatprep.subr.bf16.mxu0 0
    %486 = vmatpush1.bf16.xpose.msra.mxu0 0
    %487 = vmatprep.subr.bf16.mxu0 0
    %488 = vmatpush1.bf16.xpose.msra.mxu0 0
    %489 = vmatprep.subr.bf16.mxu0 0
    %490 = vmatpush1.bf16.xpose.msra.mxu0 0
    %491 = vmatprep.subr.bf16.mxu0 0
    %492 = vmatpush1.bf16.xpose.msra.mxu0 0
    %493 = vmatprep.subr.bf16.mxu0 0
    %494 = vmatpush1.bf16.xpose.msra.mxu0 0
    %495 = vmatprep.subr.bf16.mxu0 0
    %496 = vmatpush1.bf16.xpose.msra.mxu0 0
    %497 = vmatprep.subr.bf16.mxu0 0
    %498 = vmatpush1.bf16.xpose.msra.mxu0 0
    %499 = vmatprep.subr.bf16.mxu0 0
    %500 = vmatpush1.bf16.xpose.msra.mxu0 0
    %501 = vmatprep.mubr.bf16.mxu0 0
    %502 = vmatmul.mubr.bf16.gmra.mrb[0].mxu0 %v464
    %v503 = vpop.f32.mrb[0].mxu0
    %v504 = vadd.f32 0.0, %v503
    %v505 = vpop.f32.mrb[0].mxu0
    %v506 = vpop.f32.mrb[0].mxu0
    %v507 = vadd.f32 0.0, %v506
    %v508 = vpop.f32.mrb[0].mxu0
    %509 = vdwg.mxu0
    %v510 = vmul.f32 %v504, 0.17677669
    %v511 = vmul.f32 %v507, 0.17677669
    %v512 = vadd.f32 %v510, %v139
    %v513 = vadd.f32 %v511, %v140
    %vm514 = vcmask 130048
    %v515 = vsel %vm514, %v512, -inf
    %516 = vmax.xlane.f32.xlu0 %v515
    %v517 = vpop.xlane.xlu0 %516
    %v518 = vsel %vm514, %v513, -inf
    %519 = vmax.xlane.f32.xlu0 %v518
    %v520 = vpop.xlane.xlu0 %519
    %v521 = vsub.f32 %v512, %v517
    %v522 = vsub.f32 %v513, %v520
    %v523 = vmul.f32 %v521, 1.442695
    %v524 = vpow.pop %v523
    %v525 = vmul.f32 %v522, 1.442695
    %v526 = vpow.pop %v525
    %v527 = vsel %vm514, %v524, 0.0
    %528 = vadd.xlane.f32.xlu0 %v527
    %v529 = vpop.xlane.xlu0 %528
    %v530 = vsel %vm514, %v526, 0.0
    %531 = vadd.xlane.f32.xlu0 %v530
    %v532 = vpop.xlane.xlu0 %531
    %v533 = vrcp.pop %v529
    %v534 = vmul.f32 1.0, %v533
    %v535 = vrcp.pop %v532
    %v536 = vmul.f32 1.0, %v535
    %v537 = vmul.f32 %v524, %v534
    %v538 = vmul.f32 %v526, %v536
    %v539 = vpack.c.bf16 %v538, %v537
    %v540 = vpack.c.bf16 %v457, %v454
    %v542 = vsel %vm514, %v539, 0
    %544 = vmatprep.subr.bf16.mxu0 0
    %545 = vmatpush1.bf16.msra.mxu0 %v540
    %546 = vmatprep.subr.bf16.mxu0 0
    %547 = vmatpush1.bf16.msra.mxu0 0
    %548 = vmatprep.subr.bf16.mxu0 0
    %549 = vmatpush1.bf16.msra.mxu0 0
    %550 = vmatprep.subr.bf16.mxu0 0
    %551 = vmatpush1.bf16.msra.mxu0 0
    %552 = vmatprep.subr.bf16.mxu0 0
    %553 = vmatpush1.bf16.msra.mxu0 0
    %554 = vmatprep.subr.bf16.mxu0 0
    %555 = vmatpush1.bf16.msra.mxu0 0
    %556 = vmatprep.subr.bf16.mxu0 0
    %557 = vmatpush1.bf16.msra.mxu0 0
    %558 = vmatprep.subr.bf16.mxu0 0
    %559 = vmatpush1.bf16.msra.mxu0 0
    %560 = vmatprep.subr.bf16.mxu0 0
    %561 = vmatpush1.bf16.msra.mxu0 0
    %562 = vmatprep.subr.bf16.mxu0 0
    %563 = vmatpush1.bf16.msra.mxu0 0
    %564 = vmatprep.subr.bf16.mxu0 0
    %565 = vmatpush1.bf16.msra.mxu0 0
    %566 = vmatprep.subr.bf16.mxu0 0
    %567 = vmatpush1.bf16.msra.mxu0 0
    %568 = vmatprep.subr.bf16.mxu0 0
    %569 = vmatpush1.bf16.msra.mxu0 0
    %570 = vmatprep.subr.bf16.mxu0 0
    %571 = vmatpush1.bf16.msra.mxu0 0
    %572 = vmatprep.subr.bf16.mxu0 0
    %573 = vmatpush1.bf16.msra.mxu0 0
    %574 = vmatprep.subr.bf16.mxu0 0
    %575 = vmatpush1.bf16.msra.mxu0 0
    %576 = vmatprep.mubr.bf16.mxu0 0
    %577 = vmatmul.mubr.bf16.gmra.mrb[0].mxu0 %v542
    %v578 = vpop.f32.mrb[0].mxu0
    %v579 = vadd.f32 0.0, %v578
    %v580 = vpop.f32.mrb[0].mxu0
    %v581 = vpop.f32.mrb[0].mxu0
    %v582 = vadd.f32 0.0, %v581
    %v583 = vpop.f32.mrb[0].mxu0
    %584 = vdwg.mxu0
    %v585 = vpack.c.bf16 %v582, %v579
    %586 = vst.msk [vmem:[#allocation2] sm:$0xff] %vm462, %v585
    %588 = vrot.lane.b32.xlu0 %v460, 96
    %v589 = vpop.permute.xlu0 %588
    %591 = vrot.lane.b32.xlu0 %v461, 96
    %v592 = vpop.permute.xlu0 %591
    %v594 = vsel %vm462, %v589, 0
    %v597 = vsel %vm462, %v592, 0
    %599 = vmatprep.subr.bf16.mxu0 0
    %600 = vmatpush1.bf16.xpose.msra.mxu0 %v597
    %601 = vmatprep.subr.bf16.mxu0 0
    %602 = vmatpush1.bf16.xpose.msra.mxu0 0
    %603 = vmatprep.subr.bf16.mxu0 0
    %604 = vmatpush1.bf16.xpose.msra.mxu0 0
    %605 = vmatprep.subr.bf16.mxu0 0
    %606 = vmatpush1.bf16.xpose.msra.mxu0 0
    %607 = vmatprep.subr.bf16.mxu0 0
    %608 = vmatpush1.bf16.xpose.msra.mxu0 0
    %609 = vmatprep.subr.bf16.mxu0 0
    %610 = vmatpush1.bf16.xpose.msra.mxu0 0
    %611 = vmatprep.subr.bf16.mxu0 0
    %612 = vmatpush1.bf16.xpose.msra.mxu0 0
    %613 = vmatprep.subr.bf16.mxu0 0
    %614 = vmatpush1.bf16.xpose.msra.mxu0 0
    %615 = vmatprep.subr.bf16.mxu0 0
    %616 = vmatpush1.bf16.xpose.msra.mxu0 0
    %617 = vmatprep.subr.bf16.mxu0 0
    %618 = vmatpush1.bf16.xpose.msra.mxu0 0
    %619 = vmatprep.subr.bf16.mxu0 0
    %620 = vmatpush1.bf16.xpose.msra.mxu0 0
    %621 = vmatprep.subr.bf16.mxu0 0
    %622 = vmatpush1.bf16.xpose.msra.mxu0 0
    %623 = vmatprep.subr.bf16.mxu0 0
    %624 = vmatpush1.bf16.xpose.msra.mxu0 0
    %625 = vmatprep.subr.bf16.mxu0 0
    %626 = vmatpush1.bf16.xpose.msra.mxu0 0
    %627 = vmatprep.subr.bf16.mxu0 0
    %628 = vmatpush1.bf16.xpose.msra.mxu0 0
    %629 = vmatprep.subr.bf16.mxu0 0
    %630 = vmatpush1.bf16.xpose.msra.mxu0 0
    %631 = vmatprep.mubr.bf16.mxu0 0
    %632 = vmatmul.mubr.bf16.gmra.mrb[0].mxu0 %v594
    %v633 = vpop.f32.mrb[0].mxu0
    %v634 = vadd.f32 0.0, %v633
    %v635 = vpop.f32.mrb[0].mxu0
    %v636 = vpop.f32.mrb[0].mxu0
    %v637 = vadd.f32 0.0, %v636
    %v638 = vpop.f32.mrb[0].mxu0
    %639 = vdwg.mxu0
    %v640 = vmul.f32 %v634, 0.17677669
    %v641 = vmul.f32 %v637, 0.17677669
    %v642 = vadd.f32 %v640, %v139
    %v643 = vadd.f32 %v641, %v140
    %v644 = vsel %vm514, %v642, -inf
    %645 = vmax.xlane.f32.xlu0 %v644
    %v646 = vpop.xlane.xlu0 %645
    %v647 = vsel %vm514, %v643, -inf
    %648 = vmax.xlane.f32.xlu0 %v647
    %v649 = vpop.xlane.xlu0 %648
    %v650 = vsub.f32 %v642, %v646
    %v651 = vsub.f32 %v643, %v649
    %v652 = vmul.f32 %v650, 1.442695
    %v653 = vpow.pop %v652
    %v654 = vmul.f32 %v651, 1.442695
    %v655 = vpow.pop %v654
    %v656 = vsel %vm514, %v653, 0.0
    %657 = vadd.xlane.f32.xlu0 %v656
    %v658 = vpop.xlane.xlu0 %657
    %v659 = vsel %vm514, %v655, 0.0
    %660 = vadd.xlane.f32.xlu0 %v659
    %v661 = vpop.xlane.xlu0 %660
    %v662 = vrcp.pop %v658
    %v663 = vmul.f32 1.0, %v662
    %v664 = vrcp.pop %v661
    %v665 = vmul.f32 1.0, %v664
    %v666 = vmul.f32 %v653, %v663
    %v667 = vmul.f32 %v655, %v665
    %v668 = vpack.c.bf16 %v667, %v666
    %670 = vrot.lane.b32.xlu0 %v540, 96
    %v671 = vpop.permute.xlu0 %670
    %v674 = vsel %vm514, %v668, 0
    %676 = vmatprep.subr.bf16.mxu0 0
    %677 = vmatpush1.bf16.msra.mxu0 %v671
    %678 = vmatprep.subr.bf16.mxu0 0
    %679 = vmatpush1.bf16.msra.mxu0 0
    %680 = vmatprep.subr.bf16.mxu0 0
    %681 = vmatpush1.bf16.msra.mxu0 0
    %682 = vmatprep.subr.bf16.mxu0 0
    %683 = vmatpush1.bf16.msra.mxu0 0
    %684 = vmatprep.subr.bf16.mxu0 0
    %685 = vmatpush1.bf16.msra.mxu0 0
    %686 = vmatprep.subr.bf16.mxu0 0
    %687 = vmatpush1.bf16.msra.mxu0 0
    %688 = vmatprep.subr.bf16.mxu0 0
    %689 = vmatpush1.bf16.msra.mxu0 0
    %690 = vmatprep.subr.bf16.mxu0 0
    %691 = vmatpush1.bf16.msra.mxu0 0
    %692 = vmatprep.subr.bf16.mxu0 0
    %693 = vmatpush1.bf16.msra.mxu0 0
    %694 = vmatprep.subr.bf16.mxu0 0
    %695 = vmatpush1.bf16.msra.mxu0 0
    %696 = vmatprep.subr.bf16.mxu0 0
    %697 = vmatpush1.bf16.msra.mxu0 0
    %698 = vmatprep.subr.bf16.mxu0 0
    %699 = vmatpush1.bf16.msra.mxu0 0
    %700 = vmatprep.subr.bf16.mxu0 0
    %701 = vmatpush1.bf16.msra.mxu0 0
    %702 = vmatprep.subr.bf16.mxu0 0
    %703 = vmatpush1.bf16.msra.mxu0 0
    %704 = vmatprep.subr.bf16.mxu0 0
    %705 = vmatpush1.bf16.msra.mxu0 0
    %706 = vmatprep.subr.bf16.mxu0 0
    %707 = vmatpush1.bf16.msra.mxu0 0
    %708 = vmatprep.mubr.bf16.mxu0 0
    %709 = vmatmul.mubr.bf16.gmra.mrb[0].mxu0 %v674
    %v710 = vpop.f32.mrb[0].mxu0
    %v711 = vadd.f32 0.0, %v710
    %v712 = vpop.f32.mrb[0].mxu0
    %v713 = vpop.f32.mrb[0].mxu0
    %v714 = vadd.f32 0.0, %v713
    %v715 = vpop.f32.mrb[0].mxu0
    %716 = vdwg.mxu0
    %v717 = vpack.c.bf16 %v714, %v711
    %719 = vrot.lane.b32.xlu0 %v717, 32
    %v720 = vpop.permute.xlu0 %719
    %vm722 = vcmask 523520
    %723 = vst.msk [vmem:[#allocation2] sm:$0xff] %vm722, %v720
    %724 = vrot.lane.b32.xlu0 %v460, 64
    %v725 = vpop.permute.xlu0 %724
    %726 = vrot.lane.b32.xlu0 %v461, 64
    %v727 = vpop.permute.xlu0 %726
    %v729 = vsel %vm462, %v725, 0
    %v732 = vsel %vm462, %v727, 0
    %734 = vmatprep.subr.bf16.mxu0 0
    %735 = vmatpush1.bf16.xpose.msra.mxu0 %v732
    %736 = vmatprep.subr.bf16.mxu0 0
    %737 = vmatpush1.bf16.xpose.msra.mxu0 0
    %738 = vmatprep.subr.bf16.mxu0 0
    %739 = vmatpush1.bf16.xpose.msra.mxu0 0
    %740 = vmatprep.subr.bf16.mxu0 0
    %741 = vmatpush1.bf16.xpose.msra.mxu0 0
    %742 = vmatprep.subr.bf16.mxu0 0
    %743 = vmatpush1.bf16.xpose.msra.mxu0 0
    %744 = vmatprep.subr.bf16.mxu0 0
    %745 = vmatpush1.bf16.xpose.msra.mxu0 0
    %746 = vmatprep.subr.bf16.mxu0 0
    %747 = vmatpush1.bf16.xpose.msra.mxu0 0
    %748 = vmatprep.subr.bf16.mxu0 0
    %749 = vmatpush1.bf16.xpose.msra.mxu0 0
    %750 = vmatprep.subr.bf16.mxu0 0
    %751 = vmatpush1.bf16.xpose.msra.mxu0 0
    %752 = vmatprep.subr.bf16.mxu0 0
    %753 = vmatpush1.bf16.xpose.msra.mxu0 0
    %754 = vmatprep.subr.bf16.mxu0 0
    %755 = vmatpush1.bf16.xpose.msra.mxu0 0
    %756 = vmatprep.subr.bf16.mxu0 0
    %757 = vmatpush1.bf16.xpose.msra.mxu0 0
    %758 = vmatprep.subr.bf16.mxu0 0
    %759 = vmatpush1.bf16.xpose.msra.mxu0 0
    %760 = vmatprep.subr.bf16.mxu0 0
    %761 = vmatpush1.bf16.xpose.msra.mxu0 0
    %762 = vmatprep.subr.bf16.mxu0 0
    %763 = vmatpush1.bf16.xpose.msra.mxu0 0
    %764 = vmatprep.subr.bf16.mxu0 0
    %765 = vmatpush1.bf16.xpose.msra.mxu0 0
    %766 = vmatprep.mubr.bf16.mxu0 0
    %767 = vmatmul.mubr.bf16.gmra.mrb[0].mxu0 %v729
    %v768 = vpop.f32.mrb[0].mxu0
    %v769 = vadd.f32 0.0, %v768
    %v770 = vpop.f32.mrb[0].mxu0
    %v771 = vpop.f32.mrb[0].mxu0
    %v772 = vadd.f32 0.0, %v771
    %v773 = vpop.f32.mrb[0].mxu0
    %774 = vdwg.mxu0
    %v775 = vmul.f32 %v769, 0.17677669
    %v776 = vmul.f32 %v772, 0.17677669
    %v777 = vadd.f32 %v775, %v139
    %v778 = vadd.f32 %v776, %v140
    %v779 = vsel %vm514, %v777, -inf
    %780 = vmax.xlane.f32.xlu0 %v779
    %v781 = vpop.xlane.xlu0 %780
    %v782 = vsel %vm514, %v778, -inf
    %783 = vmax.xlane.f32.xlu0 %v782
    %v784 = vpop.xlane.xlu0 %783
    %v785 = vsub.f32 %v777, %v781
    %v786 = vsub.f32 %v778, %v784
    %v787 = vmul.f32 %v785, 1.442695
    %v788 = vpow.pop %v787
    %v789 = vmul.f32 %v786, 1.442695
    %v790 = vpow.pop %v789
    %v791 = vsel %vm514, %v788, 0.0
    %792 = vadd.xlane.f32.xlu0 %v791
    %v793 = vpop.xlane.xlu0 %792
    %v794 = vsel %vm514, %v790, 0.0
    %795 = vadd.xlane.f32.xlu0 %v794
    %v796 = vpop.xlane.xlu0 %795
    %v797 = vrcp.pop %v793
    %v798 = vmul.f32 1.0, %v797
    %v799 = vrcp.pop %v796
    %v800 = vmul.f32 1.0, %v799
    %v801 = vmul.f32 %v788, %v798
    %v802 = vmul.f32 %v790, %v800
    %v803 = vpack.c.bf16 %v802, %v801
    %804 = vrot.lane.b32.xlu0 %v540, 64
    %v805 = vpop.permute.xlu0 %804
    %v808 = vsel %vm514, %v803, 0
    %810 = vmatprep.subr.bf16.mxu0 0
    %811 = vmatpush1.bf16.msra.mxu0 %v805
    %812 = vmatprep.subr.bf16.mxu0 0
    %813 = vmatpush1.bf16.msra.mxu0 0
    %814 = vmatprep.subr.bf16.mxu0 0
    %815 = vmatpush1.bf16.msra.mxu0 0
    %816 = vmatprep.subr.bf16.mxu0 0
    %817 = vmatpush1.bf16.msra.mxu0 0
    %818 = vmatprep.subr.bf16.mxu0 0
    %819 = vmatpush1.bf16.msra.mxu0 0
    %820 = vmatprep.subr.bf16.mxu0 0
    %821 = vmatpush1.bf16.msra.mxu0 0
    %822 = vmatprep.subr.bf16.mxu0 0
    %823 = vmatpush1.bf16.msra.mxu0 0
    %824 = vmatprep.subr.bf16.mxu0 0
    %825 = vmatpush1.bf16.msra.mxu0 0
    %826 = vmatprep.subr.bf16.mxu0 0
    %827 = vmatpush1.bf16.msra.mxu0 0
    %828 = vmatprep.subr.bf16.mxu0 0
    %829 = vmatpush1.bf16.msra.mxu0 0
    %830 = vmatprep.subr.bf16.mxu0 0
    %831 = vmatpush1.bf16.msra.mxu0 0
    %832 = vmatprep.subr.bf16.mxu0 0
    %833 = vmatpush1.bf16.msra.mxu0 0
    %834 = vmatprep.subr.bf16.mxu0 0
    %835 = vmatpush1.bf16.msra.mxu0 0
    %836 = vmatprep.subr.bf16.mxu0 0
    %837 = vmatpush1.bf16.msra.mxu0 0
    %838 = vmatprep.subr.bf16.mxu0 0
    %839 = vmatpush1.bf16.msra.mxu0 0
    %840 = vmatprep.subr.bf16.mxu0 0
    %841 = vmatpush1.bf16.msra.mxu0 0
    %842 = vmatprep.mubr.bf16.mxu0 0
    %843 = vmatmul.mubr.bf16.gmra.mrb[0].mxu0 %v808
    %v844 = vpop.f32.mrb[0].mxu0
    %v845 = vadd.f32 0.0, %v844
    %v846 = vpop.f32.mrb[0].mxu0
    %v847 = vpop.f32.mrb[0].mxu0
    %v848 = vadd.f32 0.0, %v847
    %v849 = vpop.f32.mrb[0].mxu0
    %850 = vdwg.mxu0
    %v851 = vpack.c.bf16 %v848, %v845
    %853 = vrot.lane.b32.xlu0 %v851, 64
    %v854 = vpop.permute.xlu0 %853
    %vm856 = vcmask 785920
    %857 = vst.msk [vmem:[#allocation2] sm:$0xff] %vm856, %v854
    %858 = vrot.lane.b32.xlu0 %v460, 32
    %v859 = vpop.permute.xlu0 %858
    %860 = vrot.lane.b32.xlu0 %v461, 32
    %v861 = vpop.permute.xlu0 %860
    %v863 = vsel %vm462, %v859, 0
    %v866 = vsel %vm462, %v861, 0
    %868 = vmatprep.subr.bf16.mxu0 0
    %869 = vmatpush1.bf16.xpose.msra.mxu0 %v866
    %870 = vmatprep.subr.bf16.mxu0 0
    %871 = vmatpush1.bf16.xpose.msra.mxu0 0
    %872 = vmatprep.subr.bf16.mxu0 0
    %873 = vmatpush1.bf16.xpose.msra.mxu0 0
    %874 = vmatprep.subr.bf16.mxu0 0
    %875 = vmatpush1.bf16.xpose.msra.mxu0 0
    %876 = vmatprep.subr.bf16.mxu0 0
    %877 = vmatpush1.bf16.xpose.msra.mxu0 0
    %878 = vmatprep.subr.bf16.mxu0 0
    %879 = vmatpush1.bf16.xpose.msra.mxu0 0
    %880 = vmatprep.subr.bf16.mxu0 0
    %881 = vmatpush1.bf16.xpose.msra.mxu0 0
    %882 = vmatprep.subr.bf16.mxu0 0
    %883 = vmatpush1.bf16.xpose.msra.mxu0 0
    %884 = vmatprep.subr.bf16.mxu0 0
    %885 = vmatpush1.bf16.xpose.msra.mxu0 0
    %886 = vmatprep.subr.bf16.mxu0 0
    %887 = vmatpush1.bf16.xpose.msra.mxu0 0
    %888 = vmatprep.subr.bf16.mxu0 0
    %889 = vmatpush1.bf16.xpose.msra.mxu0 0
    %890 = vmatprep.subr.bf16.mxu0 0
    %891 = vmatpush1.bf16.xpose.msra.mxu0 0
    %892 = vmatprep.subr.bf16.mxu0 0
    %893 = vmatpush1.bf16.xpose.msra.mxu0 0
    %894 = vmatprep.subr.bf16.mxu0 0
    %895 = vmatpush1.bf16.xpose.msra.mxu0 0
    %896 = vmatprep.subr.bf16.mxu0 0
    %897 = vmatpush1.bf16.xpose.msra.mxu0 0
    %898 = vmatprep.subr.bf16.mxu0 0
    %899 = vmatpush1.bf16.xpose.msra.mxu0 0
    %900 = vmatprep.mubr.bf16.mxu0 0
    %901 = vmatmul.mubr.bf16.gmra.mrb[0].mxu0 %v863
    %v902 = vpop.f32.mrb[0].mxu0
    %v903 = vadd.f32 0.0, %v902
    %v904 = vpop.f32.mrb[0].mxu0
    %v905 = vpop.f32.mrb[0].mxu0
    %v906 = vadd.f32 0.0, %v905
    %v907 = vpop.f32.mrb[0].mxu0
    %908 = vdwg.mxu0
    %v909 = vmul.f32 %v903, 0.17677669
    %v910 = vmul.f32 %v906, 0.17677669
    %v911 = vadd.f32 %v909, %v139
    %v912 = vadd.f32 %v910, %v140
    %v913 = vsel %vm514, %v911, -inf
    %914 = vmax.xlane.f32.xlu0 %v913
    %v915 = vpop.xlane.xlu0 %914
    %v916 = vsel %vm514, %v912, -inf
    %917 = vmax.xlane.f32.xlu0 %v916
    %v918 = vpop.xlane.xlu0 %917
    %v919 = vsub.f32 %v911, %v915
    %v920 = vsub.f32 %v912, %v918
    %v921 = vmul.f32 %v919, 1.442695
    %v922 = vpow.pop %v921
    %v923 = vmul.f32 %v920, 1.442695
    %v924 = vpow.pop %v923
    %v925 = vsel %vm514, %v922, 0.0
    %926 = vadd.xlane.f32.xlu0 %v925
    %v927 = vpop.xlane.xlu0 %926
    %v928 = vsel %vm514, %v924, 0.0
    %929 = vadd.xlane.f32.xlu0 %v928
    %v930 = vpop.xlane.xlu0 %929
    %v931 = vrcp.pop %v927
    %v932 = vmul.f32 1.0, %v931
    %v933 = vrcp.pop %v930
    %v934 = vmul.f32 1.0, %v933
    %v935 = vmul.f32 %v922, %v932
    %v936 = vmul.f32 %v924, %v934
    %v937 = vpack.c.bf16 %v936, %v935
    %938 = vrot.lane.b32.xlu0 %v540, 32
    %v939 = vpop.permute.xlu0 %938
    %v942 = vsel %vm514, %v937, 0
    %944 = vmatprep.subr.bf16.mxu0 0
    %945 = vmatpush1.bf16.msra.mxu0 %v939
    %946 = vmatprep.subr.bf16.mxu0 0
    %947 = vmatpush1.bf16.msra.mxu0 0
    %948 = vmatprep.subr.bf16.mxu0 0
    %949 = vmatpush1.bf16.msra.mxu0 0
    %950 = vmatprep.subr.bf16.mxu0 0
    %951 = vmatpush1.bf16.msra.mxu0 0
    %952 = vmatprep.subr.bf16.mxu0 0
    %953 = vmatpush1.bf16.msra.mxu0 0
    %954 = vmatprep.subr.bf16.mxu0 0
    %955 = vmatpush1.bf16.msra.mxu0 0
    %956 = vmatprep.subr.bf16.mxu0 0
    %957 = vmatpush1.bf16.msra.mxu0 0
    %958 = vmatprep.subr.bf16.mxu0 0
    %959 = vmatpush1.bf16.msra.mxu0 0
    %960 = vmatprep.subr.bf16.mxu0 0
    %961 = vmatpush1.bf16.msra.mxu0 0
    %962 = vmatprep.subr.bf16.mxu0 0
    %963 = vmatpush1.bf16.msra.mxu0 0
    %964 = vmatprep.subr.bf16.mxu0 0
    %965 = vmatpush1.bf16.msra.mxu0 0
    %966 = vmatprep.subr.bf16.mxu0 0
    %967 = vmatpush1.bf16.msra.mxu0 0
    %968 = vmatprep.subr.bf16.mxu0 0
    %969 = vmatpush1.bf16.msra.mxu0 0
    %970 = vmatprep.subr.bf16.mxu0 0
    %971 = vmatpush1.bf16.msra.mxu0 0
    %972 = vmatprep.subr.bf16.mxu0 0
    %973 = vmatpush1.bf16.msra.mxu0 0
    %974 = vmatprep.subr.bf16.mxu0 0
    %975 = vmatpush1.bf16.msra.mxu0 0
    %976 = vmatprep.mubr.bf16.mxu0 0
    %977 = vmatmul.mubr.bf16.gmra.mrb[0].mxu0 %v942
    %v978 = vpop.f32.mrb[0].mxu0
    %v979 = vadd.f32 0.0, %v978
    %v980 = vpop.f32.mrb[0].mxu0
    %v981 = vpop.f32.mrb[0].mxu0
    %v982 = vadd.f32 0.0, %v981
    %v983 = vpop.f32.mrb[0].mxu0
    %984 = vdwg.mxu0
    %v985 = vpack.c.bf16 %v982, %v979
    %987 = vrot.lane.b32.xlu0 %v985, 96
    %v988 = vpop.permute.xlu0 %987
    %vm990 = vcmask 1048320
    %991 = vst.msk [vmem:[#allocation2] sm:$0xff] %vm990, %v988
    %v992 = vld [vmem:[#allocation2] sm:$0xff]
    %v993 = vld [vmem:[#allocation9] sm:$0xf]
    %v994 = vld [vmem:[#allocation9 + $0x4] sm:$0xf]
    %v995 = vld [vmem:[#allocation9 + $0x8] sm:$0xf]
    %v996 = vld [vmem:[#allocation9 + $0xc] sm:$0xf]
    %v997 = vld [vmem:[#allocation9 + $0x10] sm:$0xf]
    %v998 = vld [vmem:[#allocation9 + $0x14] sm:$0xf]
    %v999 = vld [vmem:[#allocation9 + $0x18] sm:$0xf]
    %v1000 = vld [vmem:[#allocation9 + $0x1c] sm:$0xf]
    %v1001 = vld [vmem:[#allocation9 + $0x20] sm:$0xf]
    %v1002 = vld [vmem:[#allocation9 + $0x24] sm:$0xf]
    %v1003 = vld [vmem:[#allocation9 + $0x28] sm:$0xf]
    %v1004 = vld [vmem:[#allocation9 + $0x2c] sm:$0xf]
    %v1005 = vld [vmem:[#allocation9 + $0x30] sm:$0xf]
    %v1006 = vld [vmem:[#allocation9 + $0x34] sm:$0xf]
    %v1007 = vld [vmem:[#allocation9 + $0x38] sm:$0xf]
    %v1008 = vld [vmem:[#allocation9 + $0x3c] sm:$0xf]
    %v1009 = vld [vmem:[%s5] sm:$0x1]
    %v1011 = vlaneseq
    %v1012 = vshrl.u32 %v1011, 7
    %v1013 = vsub.s32 0, %v1012
    %v1014 = vrot.slane %v1009, %v1013
    %v1032 = vunpack.c.l.b16 %v993
    %v1033 = vunpack.c.l.b16 %v994
    %v1034 = vunpack.c.l.b16 %v995
    %v1035 = vunpack.c.l.b16 %v996
    %v1036 = vunpack.c.l.b16 %v997
    %v1037 = vunpack.c.l.b16 %v998
    %v1038 = vunpack.c.l.b16 %v999
    %v1039 = vunpack.c.l.b16 %v1000
    %v1040 = vunpack.c.l.b16 %v1001
    %v1041 = vunpack.c.l.b16 %v1002
    %v1042 = vunpack.c.l.b16 %v1003
    %v1043 = vunpack.c.l.b16 %v1004
    %v1044 = vunpack.c.l.b16 %v1005
    %v1045 = vunpack.c.l.b16 %v1006
    %v1046 = vunpack.c.l.b16 %v1007
    %v1047 = vunpack.c.l.b16 %v1008
    %v1048 = vpack.c.b16 %v1033, %v1032
    %v1049 = vpack.c.b16 %v1035, %v1034
    %v1050 = vpack.c.b16 %v1037, %v1036
    %v1051 = vpack.c.b16 %v1039, %v1038
    %v1052 = vpack.c.b16 %v1041, %v1040
    %v1053 = vpack.c.b16 %v1043, %v1042
    %v1054 = vpack.c.b16 %v1045, %v1044
    %v1055 = vpack.c.b16 %v1047, %v1046
    %1064 = vmatprep.subr.bf16.mxu0 0
    %1065 = vmatpush1.bf16.msra.mxu0 %v1048
    %1066 = vmatprep.subr.bf16.mxu0 0
    %1067 = vmatpush1.bf16.msra.mxu0 %v1049
    %1068 = vmatprep.subr.bf16.mxu0 0
    %1069 = vmatpush1.bf16.msra.mxu0 %v1050
    %1070 = vmatprep.subr.bf16.mxu0 0
    %1071 = vmatpush1.bf16.msra.mxu0 %v1051
    %1072 = vmatprep.subr.bf16.mxu0 0
    %1073 = vmatpush1.bf16.msra.mxu0 %v1052
    %1074 = vmatprep.subr.bf16.mxu0 0
    %1075 = vmatpush1.bf16.msra.mxu0 %v1053
    %1076 = vmatprep.subr.bf16.mxu0 0
    %1077 = vmatpush1.bf16.msra.mxu0 %v1054
    %1078 = vmatprep.subr.bf16.mxu0 0
    %1079 = vmatpush1.bf16.msra.mxu0 %v1055
    %1080 = vmatprep.subr.bf16.mxu0 0
    %1081 = vmatpush1.bf16.msra.mxu0 0
    %1082 = vmatprep.subr.bf16.mxu0 0
    %1083 = vmatpush1.bf16.msra.mxu0 0
    %1084 = vmatprep.subr.bf16.mxu0 0
    %1085 = vmatpush1.bf16.msra.mxu0 0
    %1086 = vmatprep.subr.bf16.mxu0 0
    %1087 = vmatpush1.bf16.msra.mxu0 0
    %1088 = vmatprep.subr.bf16.mxu0 0
    %1089 = vmatpush1.bf16.msra.mxu0 0
    %1090 = vmatprep.subr.bf16.mxu0 0
    %1091 = vmatpush1.bf16.msra.mxu0 0
    %1092 = vmatprep.subr.bf16.mxu0 0
    %1093 = vmatpush1.bf16.msra.mxu0 0
    %1094 = vmatprep.subr.bf16.mxu0 0
    %1095 = vmatpush1.bf16.msra.mxu0 0
    %1096 = vmatprep.mubr.bf16.mxu0 0
    %1097 = vmatmul.mubr.bf16.gmra.mrb[0].mxu0 %v992
    %v1098 = vpop.f32.mrb[0].mxu0
    %v1099 = vadd.f32 %v1014, %v1098
    %v1100 = vpop.f32.mrb[0].mxu0
    %v1101 = vpop.f32.mrb[0].mxu0
    %v1102 = vadd.f32 %v1014, %v1101
    %v1103 = vpop.f32.mrb[0].mxu0
    %1104 = vdwg.mxu0
    %v1105 = vadd.f32 %v137, %v1099
    %v1106 = vadd.f32 %v138, %v1102
    %v1107 = vld [vmem:[%s8] sm:$0x1]
    %v1108 = vld [vmem:[%s9] sm:$0x1]
    %1109 = vadd.xlane.f32.xlu0 %v1105
    %v1110 = vpop.xlane.xlu0 %1109
    %1111 = vadd.xlane.f32.xlu0 %v1106
    %v1112 = vpop.xlane.xlu0 %1111
    %v1113 = vmul.f32 %v1110, %v147
    %v1114 = vmul.f32 %v1112, %v147
    %v1115 = vsub.f32 %v1105, %v1113
    %v1116 = vsub.f32 %v1106, %v1114
    %v1117 = vmul.f32 %v1115, %v1115
    %v1118 = vmul.f32 %v1116, %v1116
    %1119 = vadd.xlane.f32.xlu0 %v1117
    %v1120 = vpop.xlane.xlu0 %1119
    %1121 = vadd.xlane.f32.xlu0 %v1118
    %v1122 = vpop.xlane.xlu0 %1121
    %v1123 = vmul.f32 %v1120, 0.007874016
    %v1124 = vmul.f32 %v1122, 0.007874016
    %v1125 = vrsqrt.pop %v1123
    %v1126 = vmul.f32 %v1123, %v1125
    %vm1127 = vcmp.eq.f32.partialorder %v1123, inf
    %v1128 = vsel %vm1127, %v1123, %v1126
    %vm1129 = vcmp.eq.f32.partialorder %v1123, 0.0
    %v1130 = vand.u32 %v1123, 2147483648
    %v1131 = vsel %vm1129, %v1130, %v1128
    %v1132 = vrsqrt.pop %v1124
    %v1133 = vmul.f32 %v1124, %v1132
    %vm1134 = vcmp.eq.f32.partialorder %v1124, inf
    %v1135 = vsel %vm1134, %v1124, %v1133
    %vm1136 = vcmp.eq.f32.partialorder %v1124, 0.0
    %v1137 = vand.u32 %v1124, 2147483648
    %v1138 = vsel %vm1136, %v1137, %v1135
    %v1139 = vadd.f32 %v1131, 1e-06
    %v1140 = vadd.f32 %v1138, 1e-06
    %v1141 = vrcp.pop %v1139
    %v1142 = vmul.f32 1.0, %v1141
    %v1143 = vrcp.pop %v1140
    %v1144 = vmul.f32 1.0, %v1143
    %v1145 = vmul.f32 %v1115, %v1142
    %v1146 = vmul.f32 %v1116, %v1144
    %v1148 = vlaneseq
    %v1149 = vshrl.u32 %v1148, 7
    %v1150 = vsub.s32 0, %v1149
    %v1151 = vrot.slane %v1107, %v1150
    %v1153 = vmul.f32 %v1151, %v1145
    %v1154 = vmul.f32 %v1151, %v1146
    %v1156 = vlaneseq
    %v1157 = vshrl.u32 %v1156, 7
    %v1158 = vsub.s32 0, %v1157
    %v1159 = vrot.slane %v1108, %v1158
    %v1161 = vadd.f32 %v1153, %v1159
    %v1162 = vadd.f32 %v1154, %v1159
    %v1163 = vpack.c.bf16 %v1162, %v1161
    %v1164 = vld [vmem:[#allocation11] sm:$0xff]
    %v1165 = vld [vmem:[#allocation11 + $0x8] sm:$0xff]
    %v1166 = vld [vmem:[#allocation11 + $0x10] sm:$0xff]
    %v1167 = vld [vmem:[#allocation11 + $0x18] sm:$0xff]
    %v1168 = vld [vmem:[#allocation11 + $0x20] sm:$0xff]
    %v1169 = vld [vmem:[#allocation11 + $0x28] sm:$0xff]
    %v1170 = vld [vmem:[#allocation11 + $0x30] sm:$0xff]
    %v1171 = vld [vmem:[#allocation11 + $0x38] sm:$0xff]
    %v1172 = vld [vmem:[#allocation11 + $0x40] sm:$0xff]
    %v1173 = vld [vmem:[#allocation11 + $0x48] sm:$0xff]
    %v1174 = vld [vmem:[#allocation11 + $0x50] sm:$0xff]
    %v1175 = vld [vmem:[#allocation11 + $0x58] sm:$0xff]
    %v1176 = vld [vmem:[#allocation11 + $0x60] sm:$0xff]
    %v1177 = vld [vmem:[#allocation11 + $0x68] sm:$0xff]
    %v1178 = vld [vmem:[#allocation11 + $0x70] sm:$0xff]
    %v1179 = vld [vmem:[#allocation11 + $0x78] sm:$0xff]
    %v1180 = vld [vmem:[%s11] sm:$0x3]
    %v1182 = vlaneseq
    %v1183 = vshrl.u32 %v1182, 7
    %v1184 = vsub.s32 0, %v1183
    %v1185 = vrot.slane %v1180, %v1184
    %v1186 = vlaneseq
    %v1187 = vshrl.u32 %v1186, 7
    %v1188 = vsub.s32 1, %v1187
    %v1189 = vrot.slane %v1180, %v1188
    %v1208 = vunpack.c.l.b16 %v1164
    %v1209 = vunpack.c.h.b16 %v1164
    %v1210 = vunpack.c.l.b16 %v1165
    %v1211 = vunpack.c.h.b16 %v1165
    %v1212 = vunpack.c.l.b16 %v1166
    %v1213 = vunpack.c.h.b16 %v1166
    %v1214 = vunpack.c.l.b16 %v1167
    %v1215 = vunpack.c.h.b16 %v1167
    %v1216 = vunpack.c.l.b16 %v1168
    %v1217 = vunpack.c.h.b16 %v1168
    %v1218 = vunpack.c.l.b16 %v1169
    %v1219 = vunpack.c.h.b16 %v1169
    %v1220 = vunpack.c.l.b16 %v1170
    %v1221 = vunpack.c.h.b16 %v1170
    %v1222 = vunpack.c.l.b16 %v1171
    %v1223 = vunpack.c.h.b16 %v1171
    %v1224 = vunpack.c.l.b16 %v1172
    %v1225 = vunpack.c.h.b16 %v1172
    %v1226 = vunpack.c.l.b16 %v1173
    %v1227 = vunpack.c.h.b16 %v1173
    %v1228 = vunpack.c.l.b16 %v1174
    %v1229 = vunpack.c.h.b16 %v1174
    %v1230 = vunpack.c.l.b16 %v1175
    %v1231 = vunpack.c.h.b16 %v1175
    %v1232 = vunpack.c.l.b16 %v1176
    %v1233 = vunpack.c.h.b16 %v1176
    %v1234 = vunpack.c.l.b16 %v1177
    %v1235 = vunpack.c.h.b16 %v1177
    %v1236 = vunpack.c.l.b16 %v1178
    %v1237 = vunpack.c.h.b16 %v1178
    %v1238 = vunpack.c.l.b16 %v1179
    %v1239 = vunpack.c.h.b16 %v1179
    %v1240 = vpack.c.b16 %v1210, %v1208
    %v1241 = vpack.c.b16 %v1211, %v1209
    %v1242 = vpack.c.b16 %v1214, %v1212
    %v1243 = vpack.c.b16 %v1215, %v1213
    %v1244 = vpack.c.b16 %v1218, %v1216
    %v1245 = vpack.c.b16 %v1219, %v1217
    %v1246 = vpack.c.b16 %v1222, %v1220
    %v1247 = vpack.c.b16 %v1223, %v1221
    %v1248 = vpack.c.b16 %v1226, %v1224
    %v1249 = vpack.c.b16 %v1227, %v1225
    %v1250 = vpack.c.b16 %v1230, %v1228
    %v1251 = vpack.c.b16 %v1231, %v1229
    %v1252 = vpack.c.b16 %v1234, %v1232
    %v1253 = vpack.c.b16 %v1235, %v1233
    %v1254 = vpack.c.b16 %v1238, %v1236
    %v1255 = vpack.c.b16 %v1239, %v1237
    %1272 = vmatprep.subr.bf16.mxu0 %v1241
    %1273 = vmatpush1.bf16.msra.mxu0 %v1240
    %1274 = vmatprep.subr.bf16.mxu0 %v1243
    %1275 = vmatpush1.bf16.msra.mxu0 %v1242
    %1276 = vmatprep.subr.bf16.mxu0 %v1245
    %1277 = vmatpush1.bf16.msra.mxu0 %v1244
    %1278 = vmatprep.subr.bf16.mxu0 %v1247
    %1279 = vmatpush1.bf16.msra.mxu0 %v1246
    %1280 = vmatprep.subr.bf16.mxu0 %v1249
    %1281 = vmatpush1.bf16.msra.mxu0 %v1248
    %1282 = vmatprep.subr.bf16.mxu0 %v1251
    %1283 = vmatpush1.bf16.msra.mxu0 %v1250
    %1284 = vmatprep.subr.bf16.mxu0 %v1253
    %1285 = vmatpush1.bf16.msra.mxu0 %v1252
    %1286 = vmatprep.subr.bf16.mxu0 %v1255
    %1287 = vmatpush1.bf16.msra.mxu0 %v1254
    %1288 = vmatprep.subr.bf16.mxu0 0
    %1289 = vmatpush1.bf16.msra.mxu0 0
    %1290 = vmatprep.subr.bf16.mxu0 0
    %1291 = vmatpush1.bf16.msra.mxu0 0
    %1292 = vmatprep.subr.bf16.mxu0 0
    %1293 = vmatpush1.bf16.msra.mxu0 0
    %1294 = vmatprep.subr.bf16.mxu0 0
    %1295 = vmatpush1.bf16.msra.mxu0 0
    %1296 = vmatprep.subr.bf16.mxu0 0
    %1297 = vmatpush1.bf16.msra.mxu0 0
    %1298 = vmatprep.subr.bf16.mxu0 0
    %1299 = vmatpush1.bf16.msra.mxu0 0
    %1300 = vmatprep.subr.bf16.mxu0 0
    %1301 = vmatpush1.bf16.msra.mxu0 0
    %1302 = vmatprep.subr.bf16.mxu0 0
    %1303 = vmatpush1.bf16.msra.mxu0 0
    %1304 = vmatprep.mubr.bf16.mxu0 0
    %1305 = vmatmul.mubr.bf16.gmra.mrb[0].mxu0 %v1163
    %v1306 = vpop.f32.mrb[0].mxu0
    %v1307 = vadd.f32 %v1185, %v1306
    %v1308 = vpop.f32.mrb[0].mxu0
    %v1309 = vadd.f32 %v1189, %v1308
    %v1310 = vpop.f32.mrb[0].mxu0
    %v1311 = vadd.f32 %v1185, %v1310
    %v1312 = vpop.f32.mrb[0].mxu0
    %v1313 = vadd.f32 %v1189, %v1312
    %1314 = vdwg.mxu0
    %v1315 = vmax.f32 %v1307, 0.0
    %v1316 = vmax.f32 %v1309, 0.0
    %v1317 = vmax.f32 %v1311, 0.0
    %v1318 = vmax.f32 %v1313, 0.0
    %v1319 = vpack.c.bf16 %v1317, %v1315
    %v1320 = vpack.c.bf16 %v1318, %v1316
    %v1321 = vld [vmem:[#allocation12] sm:$0xf]
    %v1322 = vld [vmem:[#allocation12 + $0x4] sm:$0xf]
    %v1323 = vld [vmem:[#allocation12 + $0x8] sm:$0xf]
    %v1324 = vld [vmem:[#allocation12 + $0xc] sm:$0xf]
    %v1325 = vld [vmem:[#allocation12 + $0x10] sm:$0xf]
    %v1326 = vld [vmem:[#allocation12 + $0x14] sm:$0xf]
    %v1327 = vld [vmem:[#allocation12 + $0x18] sm:$0xf]
    %v1328 = vld [vmem:[#allocation12 + $0x1c] sm:$0xf]
    %v1329 = vld [vmem:[#allocation12 + $0x20] sm:$0xf]
    %v1330 = vld [vmem:[#allocation12 + $0x24] sm:$0xf]
    %v1331 = vld [vmem:[#allocation12 + $0x28] sm:$0xf]
    %v1332 = vld [vmem:[#allocation12 + $0x2c] sm:$0xf]
    %v1333 = vld [vmem:[#allocation12 + $0x30] sm:$0xf]
    %v1334 = vld [vmem:[#allocation12 + $0x34] sm:$0xf]
    %v1335 = vld [vmem:[#allocation12 + $0x38] sm:$0xf]
    %v1336 = vld [vmem:[#allocation12 + $0x3c] sm:$0xf]
    %v1337 = vld [vmem:[#allocation12 + $0x40] sm:$0xf]
    %v1338 = vld [vmem:[#allocation12 + $0x44] sm:$0xf]
    %v1339 = vld [vmem:[#allocation12 + $0x48] sm:$0xf]
    %v1340 = vld [vmem:[#allocation12 + $0x4c] sm:$0xf]
    %v1341 = vld [vmem:[#allocation12 + $0x50] sm:$0xf]
    %v1342 = vld [vmem:[#allocation12 + $0x54] sm:$0xf]
    %v1343 = vld [vmem:[#allocation12 + $0x58] sm:$0xf]
    %v1344 = vld [vmem:[#allocation12 + $0x5c] sm:$0xf]
    %v1345 = vld [vmem:[#allocation12 + $0x60] sm:$0xf]
    %v1346 = vld [vmem:[#allocation12 + $0x64] sm:$0xf]
    %v1347 = vld [vmem:[#allocation12 + $0x68] sm:$0xf]
    %v1348 = vld [vmem:[#allocation12 + $0x6c] sm:$0xf]
    %v1349 = vld [vmem:[#allocation12 + $0x70] sm:$0xf]
    %v1350 = vld [vmem:[#allocation12 + $0x74] sm:$0xf]
    %v1351 = vld [vmem:[#allocation12 + $0x78] sm:$0xf]
    %v1352 = vld [vmem:[#allocation12 + $0x7c] sm:$0xf]
    %v1353 = vld [vmem:[%s13] sm:$0x1]
    %v1355 = vlaneseq
    %v1356 = vshrl.u32 %v1355, 7
    %v1357 = vsub.s32 0, %v1356
    %v1358 = vrot.slane %v1353, %v1357
    %v1392 = vunpack.c.l.b16 %v1321
    %v1393 = vunpack.c.l.b16 %v1322
    %v1394 = vunpack.c.l.b16 %v1323
    %v1395 = vunpack.c.l.b16 %v1324
    %v1396 = vunpack.c.l.b16 %v1325
    %v1397 = vunpack.c.l.b16 %v1326
    %v1398 = vunpack.c.l.b16 %v1327
    %v1399 = vunpack.c.l.b16 %v1328
    %v1400 = vunpack.c.l.b16 %v1329
    %v1401 = vunpack.c.l.b16 %v1330
    %v1402 = vunpack.c.l.b16 %v1331
    %v1403 = vunpack.c.l.b16 %v1332
    %v1404 = vunpack.c.l.b16 %v1333
    %v1405 = vunpack.c.l.b16 %v1334
    %v1406 = vunpack.c.l.b16 %v1335
    %v1407 = vunpack.c.l.b16 %v1336
    %v1408 = vunpack.c.l.b16 %v1337
    %v1409 = vunpack.c.l.b16 %v1338
    %v1410 = vunpack.c.l.b16 %v1339
    %v1411 = vunpack.c.l.b16 %v1340
    %v1412 = vunpack.c.l.b16 %v1341
    %v1413 = vunpack.c.l.b16 %v1342
    %v1414 = vunpack.c.l.b16 %v1343
    %v1415 = vunpack.c.l.b16 %v1344
    %v1416 = vunpack.c.l.b16 %v1345
    %v1417 = vunpack.c.l.b16 %v1346
    %v1418 = vunpack.c.l.b16 %v1347
    %v1419 = vunpack.c.l.b16 %v1348
    %v1420 = vunpack.c.l.b16 %v1349
    %v1421 = vunpack.c.l.b16 %v1350
    %v1422 = vunpack.c.l.b16 %v1351
    %v1423 = vunpack.c.l.b16 %v1352
    %v1424 = vpack.c.b16 %v1393, %v1392
    %v1425 = vpack.c.b16 %v1395, %v1394
    %v1426 = vpack.c.b16 %v1397, %v1396
    %v1427 = vpack.c.b16 %v1399, %v1398
    %v1428 = vpack.c.b16 %v1401, %v1400
    %v1429 = vpack.c.b16 %v1403, %v1402
    %v1430 = vpack.c.b16 %v1405, %v1404
    %v1431 = vpack.c.b16 %v1407, %v1406
    %v1432 = vpack.c.b16 %v1409, %v1408
    %v1433 = vpack.c.b16 %v1411, %v1410
    %v1434 = vpack.c.b16 %v1413, %v1412
    %v1435 = vpack.c.b16 %v1415, %v1414
    %v1436 = vpack.c.b16 %v1417, %v1416
    %v1437 = vpack.c.b16 %v1419, %v1418
    %v1438 = vpack.c.b16 %v1421, %v1420
    %v1439 = vpack.c.b16 %v1423, %v1422
    %1456 = vmatprep.subr.bf16.mxu0 0
    %1457 = vmatpush1.bf16.msra.mxu0 %v1424
    %1458 = vmatprep.subr.bf16.mxu0 0
    %1459 = vmatpush1.bf16.msra.mxu0 %v1425
    %1460 = vmatprep.subr.bf16.mxu0 0
    %1461 = vmatpush1.bf16.msra.mxu0 %v1426
    %1462 = vmatprep.subr.bf16.mxu0 0
    %1463 = vmatpush1.bf16.msra.mxu0 %v1427
    %1464 = vmatprep.subr.bf16.mxu0 0
    %1465 = vmatpush1.bf16.msra.mxu0 %v1428
    %1466 = vmatprep.subr.bf16.mxu0 0
    %1467 = vmatpush1.bf16.msra.mxu0 %v1429
    %1468 = vmatprep.subr.bf16.mxu0 0
    %1469 = vmatpush1.bf16.msra.mxu0 %v1430
    %1470 = vmatprep.subr.bf16.mxu0 0
    %1471 = vmatpush1.bf16.msra.mxu0 %v1431
    %1472 = vmatprep.subr.bf16.mxu0 0
    %1473 = vmatpush1.bf16.msra.mxu0 %v1432
    %1474 = vmatprep.subr.bf16.mxu0 0
    %1475 = vmatpush1.bf16.msra.mxu0 %v1433
    %1476 = vmatprep.subr.bf16.mxu0 0
    %1477 = vmatpush1.bf16.msra.mxu0 %v1434
    %1478 = vmatprep.subr.bf16.mxu0 0
    %1479 = vmatpush1.bf16.msra.mxu0 %v1435
    %1480 = vmatprep.subr.bf16.mxu0 0
    %1481 = vmatpush1.bf16.msra.mxu0 %v1436
    %1482 = vmatprep.subr.bf16.mxu0 0
    %1483 = vmatpush1.bf16.msra.mxu0 %v1437
    %1484 = vmatprep.subr.bf16.mxu0 0
    %1485 = vmatpush1.bf16.msra.mxu0 %v1438
    %1486 = vmatprep.subr.bf16.mxu0 0
    %1487 = vmatpush1.bf16.msra.mxu0 %v1439
    %1488 = vmatprep.mubr.bf16.mxu0 %v1320
    %1489 = vmatmul.mubr.bf16.gmra.mrb[0].mxu0 %v1319
    %v1490 = vpop.f32.mrb[0].mxu0
    %v1491 = vadd.f32 %v1358, %v1490
    %v1492 = vpop.f32.mrb[0].mxu0
    %v1493 = vpop.f32.mrb[0].mxu0
    %v1494 = vadd.f32 %v1358, %v1493
    %v1495 = vpop.f32.mrb[0].mxu0
    %1496 = vdwg.mxu0
    %v1497 = vadd.f32 %v1105, %v1491
    %v1498 = vadd.f32 %v1106, %v1494
    %v1499 = vld [vmem:[%s6] sm:$0x1]
    %v1500 = vld [vmem:[%s7] sm:$0x1]
    %1501 = vadd.xlane.f32.xlu0 %v1497
    %v1502 = vpop.xlane.xlu0 %1501
    %1503 = vadd.xlane.f32.xlu0 %v1498
    %v1504 = vpop.xlane.xlu0 %1503
    %v1505 = vmul.f32 %v1502, %v147
    %v1506 = vmul.f32 %v1504, %v147
    %v1507 = vsub.f32 %v1497, %v1505
    %v1508 = vsub.f32 %v1498, %v1506
    %v1509 = vmul.f32 %v1507, %v1507
    %v1510 = vmul.f32 %v1508, %v1508
    %1511 = vadd.xlane.f32.xlu0 %v1509
    %v1512 = vpop.xlane.xlu0 %1511
    %1513 = vadd.xlane.f32.xlu0 %v1510
    %v1514 = vpop.xlane.xlu0 %1513
    %v1515 = vmul.f32 %v1512, 0.007874016
    %v1516 = vmul.f32 %v1514, 0.007874016
    %v1517 = vrsqrt.pop %v1515
    %v1518 = vmul.f32 %v1515, %v1517
    %vm1519 = vcmp.eq.f32.partialorder %v1515, inf
    %v1520 = vsel %vm1519, %v1515, %v1518
    %vm1521 = vcmp.eq.f32.partialorder %v1515, 0.0
    %v1522 = vand.u32 %v1515, 2147483648
    %v1523 = vsel %vm1521, %v1522, %v1520
    %v1524 = vrsqrt.pop %v1516
    %v1525 = vmul.f32 %v1516, %v1524
    %vm1526 = vcmp.eq.f32.partialorder %v1516, inf
    %v1527 = vsel %vm1526, %v1516, %v1525
    %vm1528 = vcmp.eq.f32.partialorder %v1516, 0.0
    %v1529 = vand.u32 %v1516, 2147483648
    %v1530 = vsel %vm1528, %v1529, %v1527
    %v1531 = vadd.f32 %v1523, 1e-06
    %v1532 = vadd.f32 %v1530, 1e-06
    %v1533 = vrcp.pop %v1531
    %v1534 = vmul.f32 1.0, %v1533
    %v1535 = vrcp.pop %v1532
    %v1536 = vmul.f32 1.0, %v1535
    %v1537 = vmul.f32 %v1507, %v1534
    %v1538 = vmul.f32 %v1508, %v1536
    %v1540 = vlaneseq
    %v1541 = vshrl.u32 %v1540, 7
    %v1542 = vsub.s32 0, %v1541
    %v1543 = vrot.slane %v1499, %v1542
    %v1545 = vmul.f32 %v1543, %v1537
    %v1546 = vmul.f32 %v1543, %v1538
    %v1548 = vlaneseq
    %v1549 = vshrl.u32 %v1548, 7
    %v1550 = vsub.s32 0, %v1549
    %v1551 = vrot.slane %v1500, %v1550
    %v1553 = vadd.f32 %v1545, %v1551
    %v1554 = vadd.f32 %v1546, %v1551
    %v1555 = vpack.c.bf16 %v1554, %v1553
    %v1556 = vld [vmem:[#allocation8] sm:$0xff]
    %v1557 = vld [vmem:[#allocation8 + $0x8] sm:$0xf]
    %v1558 = vld [vmem:[#allocation8 + $0xc] sm:$0xff]
    %v1559 = vld [vmem:[#allocation8 + $0x14] sm:$0xf]
    %v1560 = vld [vmem:[#allocation8 + $0x18] sm:$0xff]
    %v1561 = vld [vmem:[#allocation8 + $0x20] sm:$0xf]
    %v1562 = vld [vmem:[#allocation8 + $0x24] sm:$0xff]
    %v1563 = vld [vmem:[#allocation8 + $0x2c] sm:$0xf]
    %v1564 = vld [vmem:[#allocation8 + $0x30] sm:$0xff]
    %v1565 = vld [vmem:[#allocation8 + $0x38] sm:$0xf]
    %v1566 = vld [vmem:[#allocation8 + $0x3c] sm:$0xff]
    %v1567 = vld [vmem:[#allocation8 + $0x44] sm:$0xf]
    %v1568 = vld [vmem:[#allocation8 + $0x48] sm:$0xff]
    %v1569 = vld [vmem:[#allocation8 + $0x50] sm:$0xf]
    %v1570 = vld [vmem:[#allocation8 + $0x54] sm:$0xff]
    %v1571 = vld [vmem:[#allocation8 + $0x5c] sm:$0xf]
    %v1572 = vld [vmem:[#allocation8 + $0x60] sm:$0xff]
    %v1573 = vld [vmem:[#allocation8 + $0x68] sm:$0xf]
    %v1574 = vld [vmem:[#allocation8 + $0x6c] sm:$0xff]
    %v1575 = vld [vmem:[#allocation8 + $0x74] sm:$0xf]
    %v1576 = vld [vmem:[#allocation8 + $0x78] sm:$0xff]
    %v1577 = vld [vmem:[#allocation8 + $0x80] sm:$0xf]
    %v1578 = vld [vmem:[#allocation8 + $0x84] sm:$0xff]
    %v1579 = vld [vmem:[#allocation8 + $0x8c] sm:$0xf]
    %v1580 = vld [vmem:[#allocation8 + $0x90] sm:$0xff]
    %v1581 = vld [vmem:[#allocation8 + $0x98] sm:$0xf]
    %v1582 = vld [vmem:[#allocation8 + $0x9c] sm:$0xff]
    %v1583 = vld [vmem:[#allocation8 + $0xa4] sm:$0xf]
    %v1584 = vld [vmem:[#allocation8 + $0xa8] sm:$0xff]
    %v1585 = vld [vmem:[#allocation8 + $0xb0] sm:$0xf]
    %v1586 = vld [vmem:[#allocation8 + $0xb4] sm:$0xff]
    %v1587 = vld [vmem:[#allocation8 + $0xbc] sm:$0xf]
    %v1588 = vld [vmem:[%s3] sm:$0x7]
    %v1590 = vlaneseq
    %v1591 = vshrl.u32 %v1590, 7
    %v1592 = vsub.s32 0, %v1591
    %v1593 = vrot.slane %v1588, %v1592
    %v1594 = vlaneseq
    %v1595 = vshrl.u32 %v1594, 7
    %v1596 = vsub.s32 1, %v1595
    %v1597 = vrot.slane %v1588, %v1596
    %v1598 = vlaneseq
    %v1599 = vshrl.u32 %v1598, 7
    %v1600 = vsub.s32 2, %v1599
    %v1601 = vrot.slane %v1588, %v1600
    %v1637 = vunpack.c.l.b16 %v1556
    %v1638 = vunpack.c.h.b16 %v1556
    %v1639 = vunpack.c.l.b16 %v1557
    %v1640 = vunpack.c.l.b16 %v1558
    %v1641 = vunpack.c.h.b16 %v1558
    %v1642 = vunpack.c.l.b16 %v1559
    %v1643 = vunpack.c.l.b16 %v1560
    %v1644 = vunpack.c.h.b16 %v1560
    %v1645 = vunpack.c.l.b16 %v1561
    %v1646 = vunpack.c.l.b16 %v1562
    %v1647 = vunpack.c.h.b16 %v1562
    %v1648 = vunpack.c.l.b16 %v1563
    %v1649 = vunpack.c.l.b16 %v1564
    %v1650 = vunpack.c.h.b16 %v1564
    %v1651 = vunpack.c.l.b16 %v1565
    %v1652 = vunpack.c.l.b16 %v1566
    %v1653 = vunpack.c.h.b16 %v1566
    %v1654 = vunpack.c.l.b16 %v1567
    %v1655 = vunpack.c.l.b16 %v1568
    %v1656 = vunpack.c.h.b16 %v1568
    %v1657 = vunpack.c.l.b16 %v1569
    %v1658 = vunpack.c.l.b16 %v1570
    %v1659 = vunpack.c.h.b16 %v1570
    %v1660 = vunpack.c.l.b16 %v1571
    %v1661 = vunpack.c.l.b16 %v1572
    %v1662 = vunpack.c.h.b16 %v1572
    %v1663 = vunpack.c.l.b16 %v1573
    %v1664 = vunpack.c.l.b16 %v1574
    %v1665 = vunpack.c.h.b16 %v1574
    %v1666 = vunpack.c.l.b16 %v1575
    %v1667 = vunpack.c.l.b16 %v1576
    %v1668 = vunpack.c.h.b16 %v1576
    %v1669 = vunpack.c.l.b16 %v1577
    %v1670 = vunpack.c.l.b16 %v1578
    %v1671 = vunpack.c.h.b16 %v1578
    %v1672 = vunpack.c.l.b16 %v1579
    %v1673 = vunpack.c.l.b16 %v1580
    %v1674 = vunpack.c.h.b16 %v1580
    %v1675 = vunpack.c.l.b16 %v1581
    %v1676 = vunpack.c.l.b16 %v1582
    %v1677 = vunpack.c.h.b16 %v1582
    %v1678 = vunpack.c.l.b16 %v1583
    %v1679 = vunpack.c.l.b16 %v1584
    %v1680 = vunpack.c.h.b16 %v1584
    %v1681 = vunpack.c.l.b16 %v1585
    %v1682 = vunpack.c.l.b16 %v1586
    %v1683 = vunpack.c.h.b16 %v1586
    %v1684 = vunpack.c.l.b16 %v1587
    %v1685 = vpack.c.b16 %v1640, %v1637
    %v1686 = vpack.c.b16 %v1641, %v1638
    %v1687 = vpack.c.b16 %v1642, %v1639
    %v1688 = vpack.c.b16 %v1646, %v1643
    %v1689 = vpack.c.b16 %v1647, %v1644
    %v1690 = vpack.c.b16 %v1648, %v1645
    %v1691 = vpack.c.b16 %v1652, %v1649
    %v1692 = vpack.c.b16 %v1653, %v1650
    %v1693 = vpack.c.b16 %v1654, %v1651
    %v1694 = vpack.c.b16 %v1658, %v1655
    %v1695 = vpack.c.b16 %v1659, %v1656
    %v1696 = vpack.c.b16 %v1660, %v1657
    %v1697 = vpack.c.b16 %v1664, %v1661
    %v1698 = vpack.c.b16 %v1665, %v1662
    %v1699 = vpack.c.b16 %v1666, %v1663
    %v1700 = vpack.c.b16 %v1670, %v1667
    %v1701 = vpack.c.b16 %v1671, %v1668
    %v1702 = vpack.c.b16 %v1672, %v1669
    %v1703 = vpack.c.b16 %v1676, %v1673
    %v1704 = vpack.c.b16 %v1677, %v1674
    %v1705 = vpack.c.b16 %v1678, %v1675
    %v1706 = vpack.c.b16 %v1682, %v1679
    %v1707 = vpack.c.b16 %v1683, %v1680
    %v1708 = vpack.c.b16 %v1684, %v1681
    %1733 = vmatprep.subr.bf16.mxu0 %v1686
    %1734 = vmatpush1.bf16.msra.mxu0 %v1685
    %1735 = vmatprep.subr.bf16.mxu0 %v1689
    %1736 = vmatpush1.bf16.msra.mxu0 %v1688
    %1737 = vmatprep.subr.bf16.mxu0 %v1692
    %1738 = vmatpush1.bf16.msra.mxu0 %v1691
    %1739 = vmatprep.subr.bf16.mxu0 %v1695
    %1740 = vmatpush1.bf16.msra.mxu0 %v1694
    %1741 = vmatprep.subr.bf16.mxu0 %v1698
    %1742 = vmatpush1.bf16.msra.mxu0 %v1697
    %1743 = vmatprep.subr.bf16.mxu0 %v1701
    %1744 = vmatpush1.bf16.msra.mxu0 %v1700
    %1745 = vmatprep.subr.bf16.mxu0 %v1704
    %1746 = vmatpush1.bf16.msra.mxu0 %v1703
    %1747 = vmatprep.subr.bf16.mxu0 %v1707
    %1748 = vmatpush1.bf16.msra.mxu0 %v1706
    %1749 = vmatprep.subr.bf16.mxu0 0
    %1750 = vmatpush1.bf16.msra.mxu0 0
    %1751 = vmatprep.subr.bf16.mxu0 0
    %1752 = vmatpush1.bf16.msra.mxu0 0
    %1753 = vmatprep.subr.bf16.mxu0 0
    %1754 = vmatpush1.bf16.msra.mxu0 0
    %1755 = vmatprep.subr.bf16.mxu0 0
    %1756 = vmatpush1.bf16.msra.mxu0 0
    %1757 = vmatprep.subr.bf16.mxu0 0
    %1758 = vmatpush1.bf16.msra.mxu0 0
    %1759 = vmatprep.subr.bf16.mxu0 0
    %1760 = vmatpush1.bf16.msra.mxu0 0
    %1761 = vmatprep.subr.bf16.mxu0 0
    %1762 = vmatpush1.bf16.msra.mxu0 0
    %1763 = vmatprep.subr.bf16.mxu0 0
    %1764 = vmatpush1.bf16.msra.mxu0 0
    %1765 = vmatprep.mubr.bf16.mxu0 0
    %1766 = vmatmul.mubr.bf16.gmra.mrb[0].mxu0 %v1555
    %v1767 = vpop.f32.mrb[0].mxu0
    %v1768 = vadd.f32 %v1593, %v1767
    %v1769 = vpop.f32.mrb[0].mxu0
    %v1770 = vadd.f32 %v1597, %v1769
    %v1771 = vpop.f32.mrb[0].mxu0
    %v1772 = vadd.f32 %v1593, %v1771
    %v1773 = vpop.f32.mrb[0].mxu0
    %v1774 = vadd.f32 %v1597, %v1773
    %1775 = vdwg.mxu0
    %1776 = vmatprep.subr.bf16.mxu0 0
    %1777 = vmatpush1.bf16.msra.mxu0 %v1687
    %1778 = vmatprep.subr.bf16.mxu0 0
    %1779 = vmatpush1.bf16.msra.mxu0 %v1690
    %1780 = vmatprep.subr.bf16.mxu0 0
    %1781 = vmatpush1.bf16.msra.mxu0 %v1693
    %1782 = vmatprep.subr.bf16.mxu0 0
    %1783 = vmatpush1.bf16.msra.mxu0 %v1696
    %1784 = vmatprep.subr.bf16.mxu0 0
    %1785 = vmatpush1.bf16.msra.mxu0 %v1699
    %1786 = vmatprep.subr.bf16.mxu0 0
    %1787 = vmatpush1.bf16.msra.mxu0 %v1702
    %1788 = vmatprep.subr.bf16.mxu0 0
    %1789 = vmatpush1.bf16.msra.mxu0 %v1705
    %1790 = vmatprep.subr.bf16.mxu0 0
    %1791 = vmatpush1.bf16.msra.mxu0 %v1708
    %1792 = vmatprep.subr.bf16.mxu0 0
    %1793 = vmatpush1.bf16.msra.mxu0 0
    %1794 = vmatprep.subr.bf16.mxu0 0
    %1795 = vmatpush1.bf16.msra.mxu0 0
    %1796 = vmatprep.subr.bf16.mxu0 0
    %1797 = vmatpush1.bf16.msra.mxu0 0
    %1798 = vmatprep.subr.bf16.mxu0 0
    %1799 = vmatpush1.bf16.msra.mxu0 0
    %1800 = vmatprep.subr.bf16.mxu0 0
    %1801 = vmatpush1.bf16.msra.mxu0 0
    %1802 = vmatprep.subr.bf16.mxu0 0
    %1803 = vmatpush1.bf16.msra.mxu0 0
    %1804 = vmatprep.subr.bf16.mxu0 0
    %1805 = vmatpush1.bf16.msra.mxu0 0
    %1806 = vmatprep.subr.bf16.mxu0 0
    %1807 = vmatpush1.bf16.msra.mxu0 0
    %1808 = vmatprep.mubr.bf16.mxu0 0
    %1809 = vmatmul.mubr.bf16.gmra.mrb[0].mxu0 %v1555
    %v1810 = vpop.f32.mrb[0].mxu0
    %v1811 = vadd.f32 %v1601, %v1810
    %v1812 = vpop.f32.mrb[0].mxu0
    %v1813 = vpop.f32.mrb[0].mxu0
    %v1814 = vadd.f32 %v1601, %v1813
    %v1815 = vpop.f32.mrb[0].mxu0
    %1816 = vdwg.mxu0
    %v1817 = vpack.c.bf16 %v1772, %v1768
    %v1818 = vpack.c.bf16 %v1774, %v1770
    %v1820 = vsel %vm462, %v1817, 0
    %v1823 = vsel %vm462, %v1818, 0
    %1825 = vmatprep.subr.bf16.mxu0 0
    %1826 = vmatpush1.bf16.xpose.msra.mxu0 %v1823
    %1827 = vmatprep.subr.bf16.mxu0 0
    %1828 = vmatpush1.bf16.xpose.msra.mxu0 0
    %1829 = vmatprep.subr.bf16.mxu0 0
    %1830 = vmatpush1.bf16.xpose.msra.mxu0 0
    %1831 = vmatprep.subr.bf16.mxu0 0
    %1832 = vmatpush1.bf16.xpose.msra.mxu0 0
    %1833 = vmatprep.subr.bf16.mxu0 0
    %1834 = vmatpush1.bf16.xpose.msra.mxu0 0
    %1835 = vmatprep.subr.bf16.mxu0 0
    %1836 = vmatpush1.bf16.xpose.msra.mxu0 0
    %1837 = vmatprep.subr.bf16.mxu0 0
    %1838 = vmatpush1.bf16.xpose.msra.mxu0 0
    %1839 = vmatprep.subr.bf16.mxu0 0
    %1840 = vmatpush1.bf16.xpose.msra.mxu0 0
    %1841 = vmatprep.subr.bf16.mxu0 0
    %1842 = vmatpush1.bf16.xpose.msra.mxu0 0
    %1843 = vmatprep.subr.bf16.mxu0 0
    %1844 = vmatpush1.bf16.xpose.msra.mxu0 0
    %1845 = vmatprep.subr.bf16.mxu0 0
    %1846 = vmatpush1.bf16.xpose.msra.mxu0 0
    %1847 = vmatprep.subr.bf16.mxu0 0
    %1848 = vmatpush1.bf16.xpose.msra.mxu0 0
    %1849 = vmatprep.subr.bf16.mxu0 0
    %1850 = vmatpush1.bf16.xpose.msra.mxu0 0
    %1851 = vmatprep.subr.bf16.mxu0 0
    %1852 = vmatpush1.bf16.xpose.msra.mxu0 0
    %1853 = vmatprep.subr.bf16.mxu0 0
    %1854 = vmatpush1.bf16.xpose.msra.mxu0 0
    %1855 = vmatprep.subr.bf16.mxu0 0
    %1856 = vmatpush1.bf16.xpose.msra.mxu0 0
    %1857 = vmatprep.mubr.bf16.mxu0 0
    %1858 = vmatmul.mubr.bf16.gmra.mrb[0].mxu0 %v1820
    %v1859 = vpop.f32.mrb[0].mxu0
    %v1860 = vadd.f32 0.0, %v1859
    %v1861 = vpop.f32.mrb[0].mxu0
    %v1862 = vpop.f32.mrb[0].mxu0
    %v1863 = vadd.f32 0.0, %v1862
    %v1864 = vpop.f32.mrb[0].mxu0
    %1865 = vdwg.mxu0
    %v1866 = vmul.f32 %v1860, 0.17677669
    %v1867 = vmul.f32 %v1863, 0.17677669
    %v1868 = vadd.f32 %v1866, %v139
    %v1869 = vadd.f32 %v1867, %v140
    %v1870 = vsel %vm514, %v1868, -inf
    %1871 = vmax.xlane.f32.xlu0 %v1870
    %v1872 = vpop.xlane.xlu0 %1871
    %v1873 = vsel %vm514, %v1869, -inf
    %1874 = vmax.xlane.f32.xlu0 %v1873
    %v1875 = vpop.xlane.xlu0 %1874
    %v1876 = vsub.f32 %v1868, %v1872
    %v1877 = vsub.f32 %v1869, %v1875
    %v1878 = vmul.f32 %v1876, 1.442695
    %v1879 = vpow.pop %v1878
    %v1880 = vmul.f32 %v1877, 1.442695
    %v1881 = vpow.pop %v1880
    %v1882 = vsel %vm514, %v1879, 0.0
    %1883 = vadd.xlane.f32.xlu0 %v1882
    %v1884 = vpop.xlane.xlu0 %1883
    %v1885 = vsel %vm514, %v1881, 0.0
    %1886 = vadd.xlane.f32.xlu0 %v1885
    %v1887 = vpop.xlane.xlu0 %1886
    %v1888 = vrcp.pop %v1884
    %v1889 = vmul.f32 1.0, %v1888
    %v1890 = vrcp.pop %v1887
    %v1891 = vmul.f32 1.0, %v1890
    %v1892 = vmul.f32 %v1879, %v1889
    %v1893 = vmul.f32 %v1881, %v1891
    %v1894 = vpack.c.bf16 %v1893, %v1892
    %v1895 = vpack.c.bf16 %v1814, %v1811
    %v1897 = vsel %vm514, %v1894, 0
    %1899 = vmatprep.subr.bf16.mxu0 0
    %1900 = vmatpush1.bf16.msra.mxu0 %v1895
    %1901 = vmatprep.subr.bf16.mxu0 0
    %1902 = vmatpush1.bf16.msra.mxu0 0
    %1903 = vmatprep.subr.bf16.mxu0 0
    %1904 = vmatpush1.bf16.msra.mxu0 0
    %1905 = vmatprep.subr.bf16.mxu0 0
    %1906 = vmatpush1.bf16.msra.mxu0 0
    %1907 = vmatprep.subr.bf16.mxu0 0
    %1908 = vmatpush1.bf16.msra.mxu0 0
    %1909 = vmatprep.subr.bf16.mxu0 0
    %1910 = vmatpush1.bf16.msra.mxu0 0
    %1911 = vmatprep.subr.bf16.mxu0 0
    %1912 = vmatpush1.bf16.msra.mxu0 0
    %1913 = vmatprep.subr.bf16.mxu0 0
    %1914 = vmatpush1.bf16.msra.mxu0 0
    %1915 = vmatprep.subr.bf16.mxu0 0
    %1916 = vmatpush1.bf16.msra.mxu0 0
    %1917 = vmatprep.subr.bf16.mxu0 0
    %1918 = vmatpush1.bf16.msra.mxu0 0
    %1919 = vmatprep.subr.bf16.mxu0 0
    %1920 = vmatpush1.bf16.msra.mxu0 0
    %1921 = vmatprep.subr.bf16.mxu0 0
    %1922 = vmatpush1.bf16.msra.mxu0 0
    %1923 = vmatprep.subr.bf16.mxu0 0
    %1924 = vmatpush1.bf16.msra.mxu0 0
    %1925 = vmatprep.subr.bf16.mxu0 0
    %1926 = vmatpush1.bf16.msra.mxu0 0
    %1927 = vmatprep.subr.bf16.mxu0 0
    %1928 = vmatpush1.bf16.msra.mxu0 0
    %1929 = vmatprep.subr.bf16.mxu0 0
    %1930 = vmatpush1.bf16.msra.mxu0 0
    %1931 = vmatprep.mubr.bf16.mxu0 0
    %1932 = vmatmul.mubr.bf16.gmra.mrb[0].mxu0 %v1897
    %v1933 = vpop.f32.mrb[0].mxu0
    %v1934 = vadd.f32 0.0, %v1933
    %v1935 = vpop.f32.mrb[0].mxu0
    %v1936 = vpop.f32.mrb[0].mxu0
    %v1937 = vadd.f32 0.0, %v1936
    %v1938 = vpop.f32.mrb[0].mxu0
    %1939 = vdwg.mxu0
    %v1940 = vpack.c.bf16 %v1937, %v1934
    %1941 = vst.msk [vmem:[#allocation2] sm:$0xff] %vm462, %v1940
    %1943 = vrot.lane.b32.xlu0 %v1817, 96
    %v1944 = vpop.permute.xlu0 %1943
    %1946 = vrot.lane.b32.xlu0 %v1818, 96
    %v1947 = vpop.permute.xlu0 %1946
    %v1949 = vsel %vm462, %v1944, 0
    %v1952 = vsel %vm462, %v1947, 0
    %1954 = vmatprep.subr.bf16.mxu0 0
    %1955 = vmatpush1.bf16.xpose.msra.mxu0 %v1952
    %1956 = vmatprep.subr.bf16.mxu0 0
    %1957 = vmatpush1.bf16.xpose.msra.mxu0 0
    %1958 = vmatprep.subr.bf16.mxu0 0
    %1959 = vmatpush1.bf16.xpose.msra.mxu0 0
    %1960 = vmatprep.subr.bf16.mxu0 0
    %1961 = vmatpush1.bf16.xpose.msra.mxu0 0
    %1962 = vmatprep.subr.bf16.mxu0 0
    %1963 = vmatpush1.bf16.xpose.msra.mxu0 0
    %1964 = vmatprep.subr.bf16.mxu0 0
    %1965 = vmatpush1.bf16.xpose.msra.mxu0 0
    %1966 = vmatprep.subr.bf16.mxu0 0
    %1967 = vmatpush1.bf16.xpose.msra.mxu0 0
    %1968 = vmatprep.subr.bf16.mxu0 0
    %1969 = vmatpush1.bf16.xpose.msra.mxu0 0
    %1970 = vmatprep.subr.bf16.mxu0 0
    %1971 = vmatpush1.bf16.xpose.msra.mxu0 0
    %1972 = vmatprep.subr.bf16.mxu0 0
    %1973 = vmatpush1.bf16.xpose.msra.mxu0 0
    %1974 = vmatprep.subr.bf16.mxu0 0
    %1975 = vmatpush1.bf16.xpose.msra.mxu0 0
    %1976 = vmatprep.subr.bf16.mxu0 0
    %1977 = vmatpush1.bf16.xpose.msra.mxu0 0
    %1978 = vmatprep.subr.bf16.mxu0 0
    %1979 = vmatpush1.bf16.xpose.msra.mxu0 0
    %1980 = vmatprep.subr.bf16.mxu0 0
    %1981 = vmatpush1.bf16.xpose.msra.mxu0 0
    %1982 = vmatprep.subr.bf16.mxu0 0
    %1983 = vmatpush1.bf16.xpose.msra.mxu0 0
    %1984 = vmatprep.subr.bf16.mxu0 0
    %1985 = vmatpush1.bf16.xpose.msra.mxu0 0
    %1986 = vmatprep.mubr.bf16.mxu0 0
    %1987 = vmatmul.mubr.bf16.gmra.mrb[0].mxu0 %v1949
    %v1988 = vpop.f32.mrb[0].mxu0
    %v1989 = vadd.f32 0.0, %v1988
    %v1990 = vpop.f32.mrb[0].mxu0
    %v1991 = vpop.f32.mrb[0].mxu0
    %v1992 = vadd.f32 0.0, %v1991
    %v1993 = vpop.f32.mrb[0].mxu0
    %1994 = vdwg.mxu0
    %v1995 = vmul.f32 %v1989, 0.17677669
    %v1996 = vmul.f32 %v1992, 0.17677669
    %v1997 = vadd.f32 %v1995, %v139
    %v1998 = vadd.f32 %v1996, %v140
    %v1999 = vsel %vm514, %v1997, -inf
    %2000 = vmax.xlane.f32.xlu0 %v1999
    %v2001 = vpop.xlane.xlu0 %2000
    %v2002 = vsel %vm514, %v1998, -inf
    %2003 = vmax.xlane.f32.xlu0 %v2002
    %v2004 = vpop.xlane.xlu0 %2003
    %v2005 = vsub.f32 %v1997, %v2001
    %v2006 = vsub.f32 %v1998, %v2004
    %v2007 = vmul.f32 %v2005, 1.442695
    %v2008 = vpow.pop %v2007
    %v2009 = vmul.f32 %v2006, 1.442695
    %v2010 = vpow.pop %v2009
    %v2011 = vsel %vm514, %v2008, 0.0
    %2012 = vadd.xlane.f32.xlu0 %v2011
    %v2013 = vpop.xlane.xlu0 %2012
    %v2014 = vsel %vm514, %v2010, 0.0
    %2015 = vadd.xlane.f32.xlu0 %v2014
    %v2016 = vpop.xlane.xlu0 %2015
    %v2017 = vrcp.pop %v2013
    %v2018 = vmul.f32 1.0, %v2017
    %v2019 = vrcp.pop %v2016
    %v2020 = vmul.f32 1.0, %v2019
    %v2021 = vmul.f32 %v2008, %v2018
    %v2022 = vmul.f32 %v2010, %v2020
    %v2023 = vpack.c.bf16 %v2022, %v2021
    %2025 = vrot.lane.b32.xlu0 %v1895, 96
    %v2026 = vpop.permute.xlu0 %2025
    %v2029 = vsel %vm514, %v2023, 0
    %2031 = vmatprep.subr.bf16.mxu0 0
    %2032 = vmatpush1.bf16.msra.mxu0 %v2026
    %2033 = vmatprep.subr.bf16.mxu0 0
    %2034 = vmatpush1.bf16.msra.mxu0 0
    %2035 = vmatprep.subr.bf16.mxu0 0
    %2036 = vmatpush1.bf16.msra.mxu0 0
    %2037 = vmatprep.subr.bf16.mxu0 0
    %2038 = vmatpush1.bf16.msra.mxu0 0
    %2039 = vmatprep.subr.bf16.mxu0 0
    %2040 = vmatpush1.bf16.msra.mxu0 0
    %2041 = vmatprep.subr.bf16.mxu0 0
    %2042 = vmatpush1.bf16.msra.mxu0 0
    %2043 = vmatprep.subr.bf16.mxu0 0
    %2044 = vmatpush1.bf16.msra.mxu0 0
    %2045 = vmatprep.subr.bf16.mxu0 0
    %2046 = vmatpush1.bf16.msra.mxu0 0
    %2047 = vmatprep.subr.bf16.mxu0 0
    %2048 = vmatpush1.bf16.msra.mxu0 0
    %2049 = vmatprep.subr.bf16.mxu0 0
    %2050 = vmatpush1.bf16.msra.mxu0 0
    %2051 = vmatprep.subr.bf16.mxu0 0
    %2052 = vmatpush1.bf16.msra.mxu0 0
    %2053 = vmatprep.subr.bf16.mxu0 0
    %2054 = vmatpush1.bf16.msra.mxu0 0
    %2055 = vmatprep.subr.bf16.mxu0 0
    %2056 = vmatpush1.bf16.msra.mxu0 0
    %2057 = vmatprep.subr.bf16.mxu0 0
    %2058 = vmatpush1.bf16.msra.mxu0 0
    %2059 = vmatprep.subr.bf16.mxu0 0
    %2060 = vmatpush1.bf16.msra.mxu0 0
    %2061 = vmatprep.subr.bf16.mxu0 0
    %2062 = vmatpush1.bf16.msra.mxu0 0
    %2063 = vmatprep.mubr.bf16.mxu0 0
    %2064 = vmatmul.mubr.bf16.gmra.mrb[0].mxu0 %v2029
    %v2065 = vpop.f32.mrb[0].mxu0
    %v2066 = vadd.f32 0.0, %v2065
    %v2067 = vpop.f32.mrb[0].mxu0
    %v2068 = vpop.f32.mrb[0].mxu0
    %v2069 = vadd.f32 0.0, %v2068
    %v2070 = vpop.f32.mrb[0].mxu0
    %2071 = vdwg.mxu0
    %v2072 = vpack.c.bf16 %v2069, %v2066
    %2074 = vrot.lane.b32.xlu0 %v2072, 32
    %v2075 = vpop.permute.xlu0 %2074
    %2077 = vst.msk [vmem:[#allocation2] sm:$0xff] %vm722, %v2075
    %2078 = vrot.lane.b32.xlu0 %v1817, 64
    %v2079 = vpop.permute.xlu0 %2078
    %2080 = vrot.lane.b32.xlu0 %v1818, 64
    %v2081 = vpop.permute.xlu0 %2080
    %v2083 = vsel %vm462, %v2079, 0
    %v2086 = vsel %vm462, %v2081, 0
    %2088 = vmatprep.subr.bf16.mxu0 0
    %2089 = vmatpush1.bf16.xpose.msra.mxu0 %v2086
    %2090 = vmatprep.subr.bf16.mxu0 0
    %2091 = vmatpush1.bf16.xpose.msra.mxu0 0
    %2092 = vmatprep.subr.bf16.mxu0 0
    %2093 = vmatpush1.bf16.xpose.msra.mxu0 0
    %2094 = vmatprep.subr.bf16.mxu0 0
    %2095 = vmatpush1.bf16.xpose.msra.mxu0 0
    %2096 = vmatprep.subr.bf16.mxu0 0
    %2097 = vmatpush1.bf16.xpose.msra.mxu0 0
    %2098 = vmatprep.subr.bf16.mxu0 0
    %2099 = vmatpush1.bf16.xpose.msra.mxu0 0
    %2100 = vmatprep.subr.bf16.mxu0 0
    %2101 = vmatpush1.bf16.xpose.msra.mxu0 0
    %2102 = vmatprep.subr.bf16.mxu0 0
    %2103 = vmatpush1.bf16.xpose.msra.mxu0 0
    %2104 = vmatprep.subr.bf16.mxu0 0
    %2105 = vmatpush1.bf16.xpose.msra.mxu0 0
    %2106 = vmatprep.subr.bf16.mxu0 0
    %2107 = vmatpush1.bf16.xpose.msra.mxu0 0
    %2108 = vmatprep.subr.bf16.mxu0 0
    %2109 = vmatpush1.bf16.xpose.msra.mxu0 0
    %2110 = vmatprep.subr.bf16.mxu0 0
    %2111 = vmatpush1.bf16.xpose.msra.mxu0 0
    %2112 = vmatprep.subr.bf16.mxu0 0
    %2113 = vmatpush1.bf16.xpose.msra.mxu0 0
    %2114 = vmatprep.subr.bf16.mxu0 0
    %2115 = vmatpush1.bf16.xpose.msra.mxu0 0
    %2116 = vmatprep.subr.bf16.mxu0 0
    %2117 = vmatpush1.bf16.xpose.msra.mxu0 0
    %2118 = vmatprep.subr.bf16.mxu0 0
    %2119 = vmatpush1.bf16.xpose.msra.mxu0 0
    %2120 = vmatprep.mubr.bf16.mxu0 0
    %2121 = vmatmul.mubr.bf16.gmra.mrb[0].mxu0 %v2083
    %v2122 = vpop.f32.mrb[0].mxu0
    %v2123 = vadd.f32 0.0, %v2122
    %v2124 = vpop.f32.mrb[0].mxu0
    %v2125 = vpop.f32.mrb[0].mxu0
    %v2126 = vadd.f32 0.0, %v2125
    %v2127 = vpop.f32.mrb[0].mxu0
    %2128 = vdwg.mxu0
    %v2129 = vmul.f32 %v2123, 0.17677669
    %v2130 = vmul.f32 %v2126, 0.17677669
    %v2131 = vadd.f32 %v2129, %v139
    %v2132 = vadd.f32 %v2130, %v140
    %v2133 = vsel %vm514, %v2131, -inf
    %2134 = vmax.xlane.f32.xlu0 %v2133
    %v2135 = vpop.xlane.xlu0 %2134
    %v2136 = vsel %vm514, %v2132, -inf
    %2137 = vmax.xlane.f32.xlu0 %v2136
    %v2138 = vpop.xlane.xlu0 %2137
    %v2139 = vsub.f32 %v2131, %v2135
    %v2140 = vsub.f32 %v2132, %v2138
    %v2141 = vmul.f32 %v2139, 1.442695
    %v2142 = vpow.pop %v2141
    %v2143 = vmul.f32 %v2140, 1.442695
    %v2144 = vpow.pop %v2143
    %v2145 = vsel %vm514, %v2142, 0.0
    %2146 = vadd.xlane.f32.xlu0 %v2145
    %v2147 = vpop.xlane.xlu0 %2146
    %v2148 = vsel %vm514, %v2144, 0.0
    %2149 = vadd.xlane.f32.xlu0 %v2148
    %v2150 = vpop.xlane.xlu0 %2149
    %v2151 = vrcp.pop %v2147
    %v2152 = vmul.f32 1.0, %v2151
    %v2153 = vrcp.pop %v2150
    %v2154 = vmul.f32 1.0, %v2153
    %v2155 = vmul.f32 %v2142, %v2152
    %v2156 = vmul.f32 %v2144, %v2154
    %v2157 = vpack.c.bf16 %v2156, %v2155
    %2158 = vrot.lane.b32.xlu0 %v1895, 64
    %v2159 = vpop.permute.xlu0 %2158
    %v2162 = vsel %vm514, %v2157, 0
    %2164 = vmatprep.subr.bf16.mxu0 0
    %2165 = vmatpush1.bf16.msra.mxu0 %v2159
    %2166 = vmatprep.subr.bf16.mxu0 0
    %2167 = vmatpush1.bf16.msra.mxu0 0
    %2168 = vmatprep.subr.bf16.mxu0 0
    %2169 = vmatpush1.bf16.msra.mxu0 0
    %2170 = vmatprep.subr.bf16.mxu0 0
    %2171 = vmatpush1.bf16.msra.mxu0 0
    %2172 = vmatprep.subr.bf16.mxu0 0
    %2173 = vmatpush1.bf16.msra.mxu0 0
    %2174 = vmatprep.subr.bf16.mxu0 0
    %2175 = vmatpush1.bf16.msra.mxu0 0
    %2176 = vmatprep.subr.bf16.mxu0 0
    %2177 = vmatpush1.bf16.msra.mxu0 0
    %2178 = vmatprep.subr.bf16.mxu0 0
    %2179 = vmatpush1.bf16.msra.mxu0 0
    %2180 = vmatprep.subr.bf16.mxu0 0
    %2181 = vmatpush1.bf16.msra.mxu0 0
    %2182 = vmatprep.subr.bf16.mxu0 0
    %2183 = vmatpush1.bf16.msra.mxu0 0
    %2184 = vmatprep.subr.bf16.mxu0 0
    %2185 = vmatpush1.bf16.msra.mxu0 0
    %2186 = vmatprep.subr.bf16.mxu0 0
    %2187 = vmatpush1.bf16.msra.mxu0 0
    %2188 = vmatprep.subr.bf16.mxu0 0
    %2189 = vmatpush1.bf16.msra.mxu0 0
    %2190 = vmatprep.subr.bf16.mxu0 0
    %2191 = vmatpush1.bf16.msra.mxu0 0
    %2192 = vmatprep.subr.bf16.mxu0 0
    %2193 = vmatpush1.bf16.msra.mxu0 0
    %2194 = vmatprep.subr.bf16.mxu0 0
    %2195 = vmatpush1.bf16.msra.mxu0 0
    %2196 = vmatprep.mubr.bf16.mxu0 0
    %2197 = vmatmul.mubr.bf16.gmra.mrb[0].mxu0 %v2162
    %v2198 = vpop.f32.mrb[0].mxu0
    %v2199 = vadd.f32 0.0, %v2198
    %v2200 = vpop.f32.mrb[0].mxu0
    %v2201 = vpop.f32.mrb[0].mxu0
    %v2202 = vadd.f32 0.0, %v2201
    %v2203 = vpop.f32.mrb[0].mxu0
    %2204 = vdwg.mxu0
    %v2205 = vpack.c.bf16 %v2202, %v2199
    %2207 = vrot.lane.b32.xlu0 %v2205, 64
    %v2208 = vpop.permute.xlu0 %2207
    %2210 = vst.msk [vmem:[#allocation2] sm:$0xff] %vm856, %v2208
    %2211 = vrot.lane.b32.xlu0 %v1817, 32
    %v2212 = vpop.permute.xlu0 %2211
    %2213 = vrot.lane.b32.xlu0 %v1818, 32
    %v2214 = vpop.permute.xlu0 %2213
    %v2216 = vsel %vm462, %v2212, 0
    %v2219 = vsel %vm462, %v2214, 0
    %2221 = vmatprep.subr.bf16.mxu0 0
    %2222 = vmatpush1.bf16.xpose.msra.mxu0 %v2219
    %2223 = vmatprep.subr.bf16.mxu0 0
    %2224 = vmatpush1.bf16.xpose.msra.mxu0 0
    %2225 = vmatprep.subr.bf16.mxu0 0
    %2226 = vmatpush1.bf16.xpose.msra.mxu0 0
    %2227 = vmatprep.subr.bf16.mxu0 0
    %2228 = vmatpush1.bf16.xpose.msra.mxu0 0
    %2229 = vmatprep.subr.bf16.mxu0 0
    %2230 = vmatpush1.bf16.xpose.msra.mxu0 0
    %2231 = vmatprep.subr.bf16.mxu0 0
    %2232 = vmatpush1.bf16.xpose.msra.mxu0 0
    %2233 = vmatprep.subr.bf16.mxu0 0
    %2234 = vmatpush1.bf16.xpose.msra.mxu0 0
    %2235 = vmatprep.subr.bf16.mxu0 0
    %2236 = vmatpush1.bf16.xpose.msra.mxu0 0
    %2237 = vmatprep.subr.bf16.mxu0 0
    %2238 = vmatpush1.bf16.xpose.msra.mxu0 0
    %2239 = vmatprep.subr.bf16.mxu0 0
    %2240 = vmatpush1.bf16.xpose.msra.mxu0 0
    %2241 = vmatprep.subr.bf16.mxu0 0
    %2242 = vmatpush1.bf16.xpose.msra.mxu0 0
    %2243 = vmatprep.subr.bf16.mxu0 0
    %2244 = vmatpush1.bf16.xpose.msra.mxu0 0
    %2245 = vmatprep.subr.bf16.mxu0 0
    %2246 = vmatpush1.bf16.xpose.msra.mxu0 0
    %2247 = vmatprep.subr.bf16.mxu0 0
    %2248 = vmatpush1.bf16.xpose.msra.mxu0 0
    %2249 = vmatprep.subr.bf16.mxu0 0
    %2250 = vmatpush1.bf16.xpose.msra.mxu0 0
    %2251 = vmatprep.subr.bf16.mxu0 0
    %2252 = vmatpush1.bf16.xpose.msra.mxu0 0
    %2253 = vmatprep.mubr.bf16.mxu0 0
    %2254 = vmatmul.mubr.bf16.gmra.mrb[0].mxu0 %v2216
    %v2255 = vpop.f32.mrb[0].mxu0
    %v2256 = vadd.f32 0.0, %v2255
    %v2257 = vpop.f32.mrb[0].mxu0
    %v2258 = vpop.f32.mrb[0].mxu0
    %v2259 = vadd.f32 0.0, %v2258
    %v2260 = vpop.f32.mrb[0].mxu0
    %2261 = vdwg.mxu0
    %v2262 = vmul.f32 %v2256, 0.17677669
    %v2263 = vmul.f32 %v2259, 0.17677669
    %v2264 = vadd.f32 %v2262, %v139
    %v2265 = vadd.f32 %v2263, %v140
    %v2266 = vsel %vm514, %v2264, -inf
    %2267 = vmax.xlane.f32.xlu0 %v2266
    %v2268 = vpop.xlane.xlu0 %2267
    %v2269 = vsel %vm514, %v2265, -inf
    %2270 = vmax.xlane.f32.xlu0 %v2269
    %v2271 = vpop.xlane.xlu0 %2270
    %v2272 = vsub.f32 %v2264, %v2268
    %v2273 = vsub.f32 %v2265, %v2271
    %v2274 = vmul.f32 %v2272, 1.442695
    %v2275 = vpow.pop %v2274
    %v2276 = vmul.f32 %v2273, 1.442695
    %v2277 = vpow.pop %v2276
    %v2278 = vsel %vm514, %v2275, 0.0
    %2279 = vadd.xlane.f32.xlu0 %v2278
    %v2280 = vpop.xlane.xlu0 %2279
    %v2281 = vsel %vm514, %v2277, 0.0
    %2282 = vadd.xlane.f32.xlu0 %v2281
    %v2283 = vpop.xlane.xlu0 %2282
    %v2284 = vrcp.pop %v2280
    %v2285 = vmul.f32 1.0, %v2284
    %v2286 = vrcp.pop %v2283
    %v2287 = vmul.f32 1.0, %v2286
    %v2288 = vmul.f32 %v2275, %v2285
    %v2289 = vmul.f32 %v2277, %v2287
    %v2290 = vpack.c.bf16 %v2289, %v2288
    %2291 = vrot.lane.b32.xlu0 %v1895, 32
    %v2292 = vpop.permute.xlu0 %2291
    %v2295 = vsel %vm514, %v2290, 0
    %2297 = vmatprep.subr.bf16.mxu0 0
    %2298 = vmatpush1.bf16.msra.mxu0 %v2292
    %2299 = vmatprep.subr.bf16.mxu0 0
    %2300 = vmatpush1.bf16.msra.mxu0 0
    %2301 = vmatprep.subr.bf16.mxu0 0
    %2302 = vmatpush1.bf16.msra.mxu0 0
    %2303 = vmatprep.subr.bf16.mxu0 0
    %2304 = vmatpush1.bf16.msra.mxu0 0
    %2305 = vmatprep.subr.bf16.mxu0 0
    %2306 = vmatpush1.bf16.msra.mxu0 0
    %2307 = vmatprep.subr.bf16.mxu0 0
    %2308 = vmatpush1.bf16.msra.mxu0 0
    %2309 = vmatprep.subr.bf16.mxu0 0
    %2310 = vmatpush1.bf16.msra.mxu0 0
    %2311 = vmatprep.subr.bf16.mxu0 0
    %2312 = vmatpush1.bf16.msra.mxu0 0
    %2313 = vmatprep.subr.bf16.mxu0 0
    %2314 = vmatpush1.bf16.msra.mxu0 0
    %2315 = vmatprep.subr.bf16.mxu0 0
    %2316 = vmatpush1.bf16.msra.mxu0 0
    %2317 = vmatprep.subr.bf16.mxu0 0
    %2318 = vmatpush1.bf16.msra.mxu0 0
    %2319 = vmatprep.subr.bf16.mxu0 0
    %2320 = vmatpush1.bf16.msra.mxu0 0
    %2321 = vmatprep.subr.bf16.mxu0 0
    %2322 = vmatpush1.bf16.msra.mxu0 0
    %2323 = vmatprep.subr.bf16.mxu0 0
    %2324 = vmatpush1.bf16.msra.mxu0 0
    %2325 = vmatprep.subr.bf16.mxu0 0
    %2326 = vmatpush1.bf16.msra.mxu0 0
    %2327 = vmatprep.subr.bf16.mxu0 0
    %2328 = vmatpush1.bf16.msra.mxu0 0
    %2329 = vmatprep.mubr.bf16.mxu0 0
    %2330 = vmatmul.mubr.bf16.gmra.mrb[0].mxu0 %v2295
    %v2331 = vpop.f32.mrb[0].mxu0
    %v2332 = vadd.f32 0.0, %v2331
    %v2333 = vpop.f32.mrb[0].mxu0
    %v2334 = vpop.f32.mrb[0].mxu0
    %v2335 = vadd.f32 0.0, %v2334
    %v2336 = vpop.f32.mrb[0].mxu0
    %2337 = vdwg.mxu0
    %v2338 = vpack.c.bf16 %v2335, %v2332
    %2340 = vrot.lane.b32.xlu0 %v2338, 96
    %v2341 = vpop.permute.xlu0 %2340
    %2343 = vst.msk [vmem:[#allocation2] sm:$0xff] %vm990, %v2341
    %v2344 = vld [vmem:[#allocation2] sm:$0xff]
    %v2345 = vld [vmem:[#allocation9] sm:$0xf]
    %v2346 = vld [vmem:[#allocation9 + $0x4] sm:$0xf]
    %v2347 = vld [vmem:[#allocation9 + $0x8] sm:$0xf]
    %v2348 = vld [vmem:[#allocation9 + $0xc] sm:$0xf]
    %v2349 = vld [vmem:[#allocation9 + $0x10] sm:$0xf]
    %v2350 = vld [vmem:[#allocation9 + $0x14] sm:$0xf]
    %v2351 = vld [vmem:[#allocation9 + $0x18] sm:$0xf]
    %v2352 = vld [vmem:[#allocation9 + $0x1c] sm:$0xf]
    %v2353 = vld [vmem:[#allocation9 + $0x20] sm:$0xf]
    %v2354 = vld [vmem:[#allocation9 + $0x24] sm:$0xf]
    %v2355 = vld [vmem:[#allocation9 + $0x28] sm:$0xf]
    %v2356 = vld [vmem:[#allocation9 + $0x2c] sm:$0xf]
    %v2357 = vld [vmem:[#allocation9 + $0x30] sm:$0xf]
    %v2358 = vld [vmem:[#allocation9 + $0x34] sm:$0xf]
    %v2359 = vld [vmem:[#allocation9 + $0x38] sm:$0xf]
    %v2360 = vld [vmem:[#allocation9 + $0x3c] sm:$0xf]
    %v2361 = vld [vmem:[%s5] sm:$0x1]
    %v2363 = vlaneseq
    %v2364 = vshrl.u32 %v2363, 7
    %v2365 = vsub.s32 0, %v2364
    %v2366 = vrot.slane %v2361, %v2365
    %v2384 = vunpack.c.l.b16 %v2345
    %v2385 = vunpack.c.l.b16 %v2346
    %v2386 = vunpack.c.l.b16 %v2347
    %v2387 = vunpack.c.l.b16 %v2348
    %v2388 = vunpack.c.l.b16 %v2349
    %v2389 = vunpack.c.l.b16 %v2350
    %v2390 = vunpack.c.l.b16 %v2351
    %v2391 = vunpack.c.l.b16 %v2352
    %v2392 = vunpack.c.l.b16 %v2353
    %v2393 = vunpack.c.l.b16 %v2354
    %v2394 = vunpack.c.l.b16 %v2355
    %v2395 = vunpack.c.l.b16 %v2356
    %v2396 = vunpack.c.l.b16 %v2357
    %v2397 = vunpack.c.l.b16 %v2358
    %v2398 = vunpack.c.l.b16 %v2359
    %v2399 = vunpack.c.l.b16 %v2360
    %v2400 = vpack.c.b16 %v2385, %v2384
    %v2401 = vpack.c.b16 %v2387, %v2386
    %v2402 = vpack.c.b16 %v2389, %v2388
    %v2403 = vpack.c.b16 %v2391, %v2390
    %v2404 = vpack.c.b16 %v2393, %v2392
    %v2405 = vpack.c.b16 %v2395, %v2394
    %v2406 = vpack.c.b16 %v2397, %v2396
    %v2407 = vpack.c.b16 %v2399, %v2398
    %2416 = vmatprep.subr.bf16.mxu0 0
    %2417 = vmatpush1.bf16.msra.mxu0 %v2400
    %2418 = vmatprep.subr.bf16.mxu0 0
    %2419 = vmatpush1.bf16.msra.mxu0 %v2401
    %2420 = vmatprep.subr.bf16.mxu0 0
    %2421 = vmatpush1.bf16.msra.mxu0 %v2402
    %2422 = vmatprep.subr.bf16.mxu0 0
    %2423 = vmatpush1.bf16.msra.mxu0 %v2403
    %2424 = vmatprep.subr.bf16.mxu0 0
    %2425 = vmatpush1.bf16.msra.mxu0 %v2404
    %2426 = vmatprep.subr.bf16.mxu0 0
    %2427 = vmatpush1.bf16.msra.mxu0 %v2405
    %2428 = vmatprep.subr.bf16.mxu0 0
    %2429 = vmatpush1.bf16.msra.mxu0 %v2406
    %2430 = vmatprep.subr.bf16.mxu0 0
    %2431 = vmatpush1.bf16.msra.mxu0 %v2407
    %2432 = vmatprep.subr.bf16.mxu0 0
    %2433 = vmatpush1.bf16.msra.mxu0 0
    %2434 = vmatprep.subr.bf16.mxu0 0
    %2435 = vmatpush1.bf16.msra.mxu0 0
    %2436 = vmatprep.subr.bf16.mxu0 0
    %2437 = vmatpush1.bf16.msra.mxu0 0
    %2438 = vmatprep.subr.bf16.mxu0 0
    %2439 = vmatpush1.bf16.msra.mxu0 0
    %2440 = vmatprep.subr.bf16.mxu0 0
    %2441 = vmatpush1.bf16.msra.mxu0 0
    %2442 = vmatprep.subr.bf16.mxu0 0
    %2443 = vmatpush1.bf16.msra.mxu0 0
    %2444 = vmatprep.subr.bf16.mxu0 0
    %2445 = vmatpush1.bf16.msra.mxu0 0
    %2446 = vmatprep.subr.bf16.mxu0 0
    %2447 = vmatpush1.bf16.msra.mxu0 0
    %2448 = vmatprep.mubr.bf16.mxu0 0
    %2449 = vmatmul.mubr.bf16.gmra.mrb[0].mxu0 %v2344
    %v2450 = vpop.f32.mrb[0].mxu0
    %v2451 = vadd.f32 %v2366, %v2450
    %v2452 = vpop.f32.mrb[0].mxu0
    %v2453 = vpop.f32.mrb[0].mxu0
    %v2454 = vadd.f32 %v2366, %v2453
    %v2455 = vpop.f32.mrb[0].mxu0
    %2456 = vdwg.mxu0
    %v2457 = vadd.f32 %v1497, %v2451
    %v2458 = vadd.f32 %v1498, %v2454
    %v2459 = vld [vmem:[%s8] sm:$0x1]
    %v2460 = vld [vmem:[%s9] sm:$0x1]
    %2461 = vadd.xlane.f32.xlu0 %v2457
    %v2462 = vpop.xlane.xlu0 %2461
    %2463 = vadd.xlane.f32.xlu0 %v2458
    %v2464 = vpop.xlane.xlu0 %2463
    %v2465 = vmul.f32 %v2462, %v147
    %v2466 = vmul.f32 %v2464, %v147
    %v2467 = vsub.f32 %v2457, %v2465
    %v2468 = vsub.f32 %v2458, %v2466
    %v2469 = vmul.f32 %v2467, %v2467
    %v2470 = vmul.f32 %v2468, %v2468
    %2471 = vadd.xlane.f32.xlu0 %v2469
    %v2472 = vpop.xlane.xlu0 %2471
    %2473 = vadd.xlane.f32.xlu0 %v2470
    %v2474 = vpop.xlane.xlu0 %2473
    %v2475 = vmul.f32 %v2472, 0.007874016
    %v2476 = vmul.f32 %v2474, 0.007874016
    %v2477 = vrsqrt.pop %v2475
    %v2478 = vmul.f32 %v2475, %v2477
    %vm2479 = vcmp.eq.f32.partialorder %v2475, inf
    %v2480 = vsel %vm2479, %v2475, %v2478
    %vm2481 = vcmp.eq.f32.partialorder %v2475, 0.0
    %v2482 = vand.u32 %v2475, 2147483648
    %v2483 = vsel %vm2481, %v2482, %v2480
    %v2484 = vrsqrt.pop %v2476
    %v2485 = vmul.f32 %v2476, %v2484
    %vm2486 = vcmp.eq.f32.partialorder %v2476, inf
    %v2487 = vsel %vm2486, %v2476, %v2485
    %vm2488 = vcmp.eq.f32.partialorder %v2476, 0.0
    %v2489 = vand.u32 %v2476, 2147483648
    %v2490 = vsel %vm2488, %v2489, %v2487
    %v2491 = vadd.f32 %v2483, 1e-06
    %v2492 = vadd.f32 %v2490, 1e-06
    %v2493 = vrcp.pop %v2491
    %v2494 = vmul.f32 1.0, %v2493
    %v2495 = vrcp.pop %v2492
    %v2496 = vmul.f32 1.0, %v2495
    %v2497 = vmul.f32 %v2467, %v2494
    %v2498 = vmul.f32 %v2468, %v2496
    %v2500 = vlaneseq
    %v2501 = vshrl.u32 %v2500, 7
    %v2502 = vsub.s32 0, %v2501
    %v2503 = vrot.slane %v2459, %v2502
    %v2505 = vmul.f32 %v2503, %v2497
    %v2506 = vmul.f32 %v2503, %v2498
    %v2508 = vlaneseq
    %v2509 = vshrl.u32 %v2508, 7
    %v2510 = vsub.s32 0, %v2509
    %v2511 = vrot.slane %v2460, %v2510
    %v2513 = vadd.f32 %v2505, %v2511
    %v2514 = vadd.f32 %v2506, %v2511
    %v2515 = vpack.c.bf16 %v2514, %v2513
    %v2516 = vld [vmem:[#allocation11] sm:$0xff]
    %v2517 = vld [vmem:[#allocation11 + $0x8] sm:$0xff]
    %v2518 = vld [vmem:[#allocation11 + $0x10] sm:$0xff]
    %v2519 = vld [vmem:[#allocation11 + $0x18] sm:$0xff]
    %v2520 = vld [vmem:[#allocation11 + $0x20] sm:$0xff]
    %v2521 = vld [vmem:[#allocation11 + $0x28] sm:$0xff]
    %v2522 = vld [vmem:[#allocation11 + $0x30] sm:$0xff]
    %v2523 = vld [vmem:[#allocation11 + $0x38] sm:$0xff]
    %v2524 = vld [vmem:[#allocation11 + $0x40] sm:$0xff]
    %v2525 = vld [vmem:[#allocation11 + $0x48] sm:$0xff]
    %v2526 = vld [vmem:[#allocation11 + $0x50] sm:$0xff]
    %v2527 = vld [vmem:[#allocation11 + $0x58] sm:$0xff]
    %v2528 = vld [vmem:[#allocation11 + $0x60] sm:$0xff]
    %v2529 = vld [vmem:[#allocation11 + $0x68] sm:$0xff]
    %v2530 = vld [vmem:[#allocation11 + $0x70] sm:$0xff]
    %v2531 = vld [vmem:[#allocation11 + $0x78] sm:$0xff]
    %v2532 = vld [vmem:[%s11] sm:$0x3]
    %v2534 = vlaneseq
    %v2535 = vshrl.u32 %v2534, 7
    %v2536 = vsub.s32 0, %v2535
    %v2537 = vrot.slane %v2532, %v2536
    %v2538 = vlaneseq
    %v2539 = vshrl.u32 %v2538, 7
    %v2540 = vsub.s32 1, %v2539
    %v2541 = vrot.slane %v2532, %v2540
    %v2560 = vunpack.c.l.b16 %v2516
    %v2561 = vunpack.c.h.b16 %v2516
    %v2562 = vunpack.c.l.b16 %v2517
    %v2563 = vunpack.c.h.b16 %v2517
    %v2564 = vunpack.c.l.b16 %v2518
    %v2565 = vunpack.c.h.b16 %v2518
    %v2566 = vunpack.c.l.b16 %v2519
    %v2567 = vunpack.c.h.b16 %v2519
    %v2568 = vunpack.c.l.b16 %v2520
    %v2569 = vunpack.c.h.b16 %v2520
    %v2570 = vunpack.c.l.b16 %v2521
    %v2571 = vunpack.c.h.b16 %v2521
    %v2572 = vunpack.c.l.b16 %v2522
    %v2573 = vunpack.c.h.b16 %v2522
    %v2574 = vunpack.c.l.b16 %v2523
    %v2575 = vunpack.c.h.b16 %v2523
    %v2576 = vunpack.c.l.b16 %v2524
    %v2577 = vunpack.c.h.b16 %v2524
    %v2578 = vunpack.c.l.b16 %v2525
    %v2579 = vunpack.c.h.b16 %v2525
    %v2580 = vunpack.c.l.b16 %v2526
    %v2581 = vunpack.c.h.b16 %v2526
    %v2582 = vunpack.c.l.b16 %v2527
    %v2583 = vunpack.c.h.b16 %v2527
    %v2584 = vunpack.c.l.b16 %v2528
    %v2585 = vunpack.c.h.b16 %v2528
    %v2586 = vunpack.c.l.b16 %v2529
    %v2587 = vunpack.c.h.b16 %v2529
    %v2588 = vunpack.c.l.b16 %v2530
    %v2589 = vunpack.c.h.b16 %v2530
    %v2590 = vunpack.c.l.b16 %v2531
    %v2591 = vunpack.c.h.b16 %v2531
    %v2592 = vpack.c.b16 %v2562, %v2560
    %v2593 = vpack.c.b16 %v2563, %v2561
    %v2594 = vpack.c.b16 %v2566, %v2564
    %v2595 = vpack.c.b16 %v2567, %v2565
    %v2596 = vpack.c.b16 %v2570, %v2568
    %v2597 = vpack.c.b16 %v2571, %v2569
    %v2598 = vpack.c.b16 %v2574, %v2572
    %v2599 = vpack.c.b16 %v2575, %v2573
    %v2600 = vpack.c.b16 %v2578, %v2576
    %v2601 = vpack.c.b16 %v2579, %v2577
    %v2602 = vpack.c.b16 %v2582, %v2580
    %v2603 = vpack.c.b16 %v2583, %v2581
    %v2604 = vpack.c.b16 %v2586, %v2584
    %v2605 = vpack.c.b16 %v2587, %v2585
    %v2606 = vpack.c.b16 %v2590, %v2588
    %v2607 = vpack.c.b16 %v2591, %v2589
    %2624 = vmatprep.subr.bf16.mxu0 %v2593
    %2625 = vmatpush1.bf16.msra.mxu0 %v2592
    %2626 = vmatprep.subr.bf16.mxu0 %v2595
    %2627 = vmatpush1.bf16.msra.mxu0 %v2594
    %2628 = vmatprep.subr.bf16.mxu0 %v2597
    %2629 = vmatpush1.bf16.msra.mxu0 %v2596
    %2630 = vmatprep.subr.bf16.mxu0 %v2599
    %2631 = vmatpush1.bf16.msra.mxu0 %v2598
    %2632 = vmatprep.subr.bf16.mxu0 %v2601
    %2633 = vmatpush1.bf16.msra.mxu0 %v2600
    %2634 = vmatprep.subr.bf16.mxu0 %v2603
    %2635 = vmatpush1.bf16.msra.mxu0 %v2602
    %2636 = vmatprep.subr.bf16.mxu0 %v2605
    %2637 = vmatpush1.bf16.msra.mxu0 %v2604
    %2638 = vmatprep.subr.bf16.mxu0 %v2607
    %2639 = vmatpush1.bf16.msra.mxu0 %v2606
    %2640 = vmatprep.subr.bf16.mxu0 0
    %2641 = vmatpush1.bf16.msra.mxu0 0
    %2642 = vmatprep.subr.bf16.mxu0 0
    %2643 = vmatpush1.bf16.msra.mxu0 0
    %2644 = vmatprep.subr.bf16.mxu0 0
    %2645 = vmatpush1.bf16.msra.mxu0 0
    %2646 = vmatprep.subr.bf16.mxu0 0
    %2647 = vmatpush1.bf16.msra.mxu0 0
    %2648 = vmatprep.subr.bf16.mxu0 0
    %2649 = vmatpush1.bf16.msra.mxu0 0
    %2650 = vmatprep.subr.bf16.mxu0 0
    %2651 = vmatpush1.bf16.msra.mxu0 0
    %2652 = vmatprep.subr.bf16.mxu0 0
    %2653 = vmatpush1.bf16.msra.mxu0 0
    %2654 = vmatprep.subr.bf16.mxu0 0
    %2655 = vmatpush1.bf16.msra.mxu0 0
    %2656 = vmatprep.mubr.bf16.mxu0 0
    %2657 = vmatmul.mubr.bf16.gmra.mrb[0].mxu0 %v2515
    %v2658 = vpop.f32.mrb[0].mxu0
    %v2659 = vadd.f32 %v2537, %v2658
    %v2660 = vpop.f32.mrb[0].mxu0
    %v2661 = vadd.f32 %v2541, %v2660
    %v2662 = vpop.f32.mrb[0].mxu0
    %v2663 = vadd.f32 %v2537, %v2662
    %v2664 = vpop.f32.mrb[0].mxu0
    %v2665 = vadd.f32 %v2541, %v2664
    %2666 = vdwg.mxu0
    %v2667 = vmax.f32 %v2659, 0.0
    %v2668 = vmax.f32 %v2661, 0.0
    %v2669 = vmax.f32 %v2663, 0.0
    %v2670 = vmax.f32 %v2665, 0.0
    %v2671 = vpack.c.bf16 %v2669, %v2667
    %v2672 = vpack.c.bf16 %v2670, %v2668
    %v2673 = vld [vmem:[#allocation12] sm:$0xf]
    %v2674 = vld [vmem:[#allocation12 + $0x4] sm:$0xf]
    %v2675 = vld [vmem:[#allocation12 + $0x8] sm:$0xf]
    %v2676 = vld [vmem:[#allocation12 + $0xc] sm:$0xf]
    %v2677 = vld [vmem:[#allocation12 + $0x10] sm:$0xf]
    %v2678 = vld [vmem:[#allocation12 + $0x14] sm:$0xf]
    %v2679 = vld [vmem:[#allocation12 + $0x18] sm:$0xf]
    %v2680 = vld [vmem:[#allocation12 + $0x1c] sm:$0xf]
    %v2681 = vld [vmem:[#allocation12 + $0x20] sm:$0xf]
    %v2682 = vld [vmem:[#allocation12 + $0x24] sm:$0xf]
    %v2683 = vld [vmem:[#allocation12 + $0x28] sm:$0xf]
    %v2684 = vld [vmem:[#allocation12 + $0x2c] sm:$0xf]
    %v2685 = vld [vmem:[#allocation12 + $0x30] sm:$0xf]
    %v2686 = vld [vmem:[#allocation12 + $0x34] sm:$0xf]
    %v2687 = vld [vmem:[#allocation12 + $0x38] sm:$0xf]
    %v2688 = vld [vmem:[#allocation12 + $0x3c] sm:$0xf]
    %v2689 = vld [vmem:[#allocation12 + $0x40] sm:$0xf]
    %v2690 = vld [vmem:[#allocation12 + $0x44] sm:$0xf]
    %v2691 = vld [vmem:[#allocation12 + $0x48] sm:$0xf]
    %v2692 = vld [vmem:[#allocation12 + $0x4c] sm:$0xf]
    %v2693 = vld [vmem:[#allocation12 + $0x50] sm:$0xf]
    %v2694 = vld [vmem:[#allocation12 + $0x54] sm:$0xf]
    %v2695 = vld [vmem:[#allocation12 + $0x58] sm:$0xf]
    %v2696 = vld [vmem:[#allocation12 + $0x5c] sm:$0xf]
    %v2697 = vld [vmem:[#allocation12 + $0x60] sm:$0xf]
    %v2698 = vld [vmem:[#allocation12 + $0x64] sm:$0xf]
    %v2699 = vld [vmem:[#allocation12 + $0x68] sm:$0xf]
    %v2700 = vld [vmem:[#allocation12 + $0x6c] sm:$0xf]
    %v2701 = vld [vmem:[#allocation12 + $0x70] sm:$0xf]
    %v2702 = vld [vmem:[#allocation12 + $0x74] sm:$0xf]
    %v2703 = vld [vmem:[#allocation12 + $0x78] sm:$0xf]
    %v2704 = vld [vmem:[#allocation12 + $0x7c] sm:$0xf]
    %v2705 = vld [vmem:[%s13] sm:$0x1]
    %v2707 = vlaneseq
    %v2708 = vshrl.u32 %v2707, 7
    %v2709 = vsub.s32 0, %v2708
    %v2710 = vrot.slane %v2705, %v2709
    %v2744 = vunpack.c.l.b16 %v2673
    %v2745 = vunpack.c.l.b16 %v2674
    %v2746 = vunpack.c.l.b16 %v2675
    %v2747 = vunpack.c.l.b16 %v2676
    %v2748 = vunpack.c.l.b16 %v2677
    %v2749 = vunpack.c.l.b16 %v2678
    %v2750 = vunpack.c.l.b16 %v2679
    %v2751 = vunpack.c.l.b16 %v2680
    %v2752 = vunpack.c.l.b16 %v2681
    %v2753 = vunpack.c.l.b16 %v2682
    %v2754 = vunpack.c.l.b16 %v2683
    %v2755 = vunpack.c.l.b16 %v2684
    %v2756 = vunpack.c.l.b16 %v2685
    %v2757 = vunpack.c.l.b16 %v2686
    %v2758 = vunpack.c.l.b16 %v2687
    %v2759 = vunpack.c.l.b16 %v2688
    %v2760 = vunpack.c.l.b16 %v2689
    %v2761 = vunpack.c.l.b16 %v2690
    %v2762 = vunpack.c.l.b16 %v2691
    %v2763 = vunpack.c.l.b16 %v2692
    %v2764 = vunpack.c.l.b16 %v2693
    %v2765 = vunpack.c.l.b16 %v2694
    %v2766 = vunpack.c.l.b16 %v2695
    %v2767 = vunpack.c.l.b16 %v2696
    %v2768 = vunpack.c.l.b16 %v2697
    %v2769 = vunpack.c.l.b16 %v2698
    %v2770 = vunpack.c.l.b16 %v2699
    %v2771 = vunpack.c.l.b16 %v2700
    %v2772 = vunpack.c.l.b16 %v2701
    %v2773 = vunpack.c.l.b16 %v2702
    %v2774 = vunpack.c.l.b16 %v2703
    %v2775 = vunpack.c.l.b16 %v2704
    %v2776 = vpack.c.b16 %v2745, %v2744
    %v2777 = vpack.c.b16 %v2747, %v2746
    %v2778 = vpack.c.b16 %v2749, %v2748
    %v2779 = vpack.c.b16 %v2751, %v2750
    %v2780 = vpack.c.b16 %v2753, %v2752
    %v2781 = vpack.c.b16 %v2755, %v2754
    %v2782 = vpack.c.b16 %v2757, %v2756
    %v2783 = vpack.c.b16 %v2759, %v2758
    %v2784 = vpack.c.b16 %v2761, %v2760
    %v2785 = vpack.c.b16 %v2763, %v2762
    %v2786 = vpack.c.b16 %v2765, %v2764
    %v2787 = vpack.c.b16 %v2767, %v2766
    %v2788 = vpack.c.b16 %v2769, %v2768
    %v2789 = vpack.c.b16 %v2771, %v2770
    %v2790 = vpack.c.b16 %v2773, %v2772
    %v2791 = vpack.c.b16 %v2775, %v2774
    %2808 = vmatprep.subr.bf16.mxu0 0
    %2809 = vmatpush1.bf16.msra.mxu0 %v2776
    %2810 = vmatprep.subr.bf16.mxu0 0
    %2811 = vmatpush1.bf16.msra.mxu0 %v2777
    %2812 = vmatprep.subr.bf16.mxu0 0
    %2813 = vmatpush1.bf16.msra.mxu0 %v2778
    %2814 = vmatprep.subr.bf16.mxu0 0
    %2815 = vmatpush1.bf16.msra.mxu0 %v2779
    %2816 = vmatprep.subr.bf16.mxu0 0
    %2817 = vmatpush1.bf16.msra.mxu0 %v2780
    %2818 = vmatprep.subr.bf16.mxu0 0
    %2819 = vmatpush1.bf16.msra.mxu0 %v2781
    %2820 = vmatprep.subr.bf16.mxu0 0
    %2821 = vmatpush1.bf16.msra.mxu0 %v2782
    %2822 = vmatprep.subr.bf16.mxu0 0
    %2823 = vmatpush1.bf16.msra.mxu0 %v2783
    %2824 = vmatprep.subr.bf16.mxu0 0
    %2825 = vmatpush1.bf16.msra.mxu0 %v2784
    %2826 = vmatprep.subr.bf16.mxu0 0
    %2827 = vmatpush1.bf16.msra.mxu0 %v2785
    %2828 = vmatprep.subr.bf16.mxu0 0
    %2829 = vmatpush1.bf16.msra.mxu0 %v2786
    %2830 = vmatprep.subr.bf16.mxu0 0
    %2831 = vmatpush1.bf16.msra.mxu0 %v2787
    %2832 = vmatprep.subr.bf16.mxu0 0
    %2833 = vmatpush1.bf16.msra.mxu0 %v2788
    %2834 = vmatprep.subr.bf16.mxu0 0
    %2835 = vmatpush1.bf16.msra.mxu0 %v2789
    %2836 = vmatprep.subr.bf16.mxu0 0
    %2837 = vmatpush1.bf16.msra.mxu0 %v2790
    %2838 = vmatprep.subr.bf16.mxu0 0
    %2839 = vmatpush1.bf16.msra.mxu0 %v2791
    %2840 = vmatprep.mubr.bf16.mxu0 %v2672
    %2841 = vmatmul.mubr.bf16.gmra.mrb[0].mxu0 %v2671
    %v2842 = vpop.f32.mrb[0].mxu0
    %v2843 = vadd.f32 %v2710, %v2842
    %v2844 = vpop.f32.mrb[0].mxu0
    %v2845 = vpop.f32.mrb[0].mxu0
    %v2846 = vadd.f32 %v2710, %v2845
    %v2847 = vpop.f32.mrb[0].mxu0
    %2848 = vdwg.mxu0
    %v2849 = vadd.f32 %v2457, %v2843
    %v2850 = vadd.f32 %v2458, %v2846
    %v2851 = vld [vmem:[%s14] sm:$0x1]
    %v2852 = vld [vmem:[%s15] sm:$0x1]
    %2853 = vadd.xlane.f32.xlu0 %v2849
    %v2854 = vpop.xlane.xlu0 %2853
    %2855 = vadd.xlane.f32.xlu0 %v2850
    %v2856 = vpop.xlane.xlu0 %2855
    %v2857 = vmul.f32 %v2854, %v147
    %v2858 = vmul.f32 %v2856, %v147
    %v2859 = vsub.f32 %v2849, %v2857
    %v2860 = vsub.f32 %v2850, %v2858
    %v2861 = vmul.f32 %v2859, %v2859
    %v2862 = vmul.f32 %v2860, %v2860
    %2863 = vadd.xlane.f32.xlu0 %v2861
    %v2864 = vpop.xlane.xlu0 %2863
    %2865 = vadd.xlane.f32.xlu0 %v2862
    %v2866 = vpop.xlane.xlu0 %2865
    %v2867 = vmul.f32 %v2864, 0.007874016
    %v2868 = vmul.f32 %v2866, 0.007874016
    %v2869 = vrsqrt.pop %v2867
    %v2870 = vmul.f32 %v2867, %v2869
    %vm2871 = vcmp.eq.f32.partialorder %v2867, inf
    %v2872 = vsel %vm2871, %v2867, %v2870
    %vm2873 = vcmp.eq.f32.partialorder %v2867, 0.0
    %v2874 = vand.u32 %v2867, 2147483648
    %v2875 = vsel %vm2873, %v2874, %v2872
    %v2876 = vrsqrt.pop %v2868
    %v2877 = vmul.f32 %v2868, %v2876
    %vm2878 = vcmp.eq.f32.partialorder %v2868, inf
    %v2879 = vsel %vm2878, %v2868, %v2877
    %vm2880 = vcmp.eq.f32.partialorder %v2868, 0.0
    %v2881 = vand.u32 %v2868, 2147483648
    %v2882 = vsel %vm2880, %v2881, %v2879
    %v2883 = vadd.f32 %v2875, 1e-06
    %v2884 = vadd.f32 %v2882, 1e-06
    %v2885 = vrcp.pop %v2883
    %v2886 = vmul.f32 1.0, %v2885
    %v2887 = vrcp.pop %v2884
    %v2888 = vmul.f32 1.0, %v2887
    %v2889 = vmul.f32 %v2859, %v2886
    %v2890 = vmul.f32 %v2860, %v2888
    %v2892 = vlaneseq
    %v2893 = vshrl.u32 %v2892, 7
    %v2894 = vsub.s32 0, %v2893
    %v2895 = vrot.slane %v2851, %v2894
    %v2897 = vmul.f32 %v2895, %v2889
    %v2898 = vmul.f32 %v2895, %v2890
    %v2900 = vlaneseq
    %v2901 = vshrl.u32 %v2900, 7
    %v2902 = vsub.s32 0, %v2901
    %v2903 = vrot.slane %v2852, %v2902
    %v2905 = vadd.f32 %v2897, %v2903
    %v2906 = vadd.f32 %v2898, %v2903
    %2907 = vst [vmem:[#allocation14] sm:$0xff] %v2905
    %2908 = vst [vmem:[#allocation14 + $0x8] sm:$0xff] %v2906
    // Predicated region
    $region90: #{tpu_custom_call.1} parent=1 // pred_check
      _
    $region91: #{tpu_custom_call.1} parent=1 // pred_check_branch
      %2910 = sbr.rel (0) target = $region93
    $region92: #{tpu_custom_call.1} parent=1 // pred_region
      %s2912 = ssub.s32 256, 256
      %2913 = vsyncadd [#allocation5], %s2912
      %s2914 = sshll.u32 [#allocation14], 4
      %s2915 = int_to_ptr.vmem [resolvable:$true] %s2914
      %2920 = dma.vmem_to_hbm [thread:$0]  %s2915, 256, %s16, [#allocation5], 128, 128, 8
    $region93: #{tpu_custom_call.1} parent=1 // pred_fallthru
      _
    // Predicated region
    $region94: #{tpu_custom_call.1} parent=1 // pred_check
      _
    $region95: #{tpu_custom_call.1} parent=1 // pred_check_branch
      %2922 = sbr.rel (0) target = $region97
    $region96: #{tpu_custom_call.1} parent=1 // pred_region
      %2923 = dma.done [#allocation5], 256
    $region97: #{tpu_custom_call.1} parent=1 // pred_fallthru
      _
    %2924 = vsyncpa [#allocation4], 1
    %2925 = vsyncpa [#allocation7], 1
    %2926 = vsyncpa [#allocation10], 1
    %2927 = vsyncpa [#allocation13], 1
    %2928 = vsyncpa [#allocation5], 1

</llo_original>
